<compile_context>
chip_gen: v7x
topology: tpu7x:2x2x1
jax: 0.10.0
libtpu: 0.0.40
codegen_flags: <defaults>
</compile_context>

<pallas_src>
import jax
import jax.numpy as jnp
from jax.experimental import pallas as pl
from jax.experimental.pallas import tpu as pltpu

EPS = 1e-9
TEMP = 0.66               # digit_temp; unused in forward, kept for parity
Z_PRIVATE = 50
Z_SHARED = 10
STATS_DIM = 2 * (Z_PRIVATE + Z_SHARED)    # 120
STATS_PAD = 128                           # lane-dense output width

C1, C2 = 64, 32           # conv1 / conv2 output channels
H1, H2 = 14, 7            # conv1 / conv2 output spatial size
FC1_OUT = 256


# ----------------------------- fused Pallas kernel --------------------------

def _encoder_b_kernel(a1_ref, w1e_ref, w2d_ref, wcat_ref, wfc2_ref, out_ref):
    tb = out_ref.shape[0]          # batch tile
    R = H2 * tb                    # rows per conv2 tap slice

    # conv1 (+ReLU) emitted directly in the padded parity-split layout:
    #   rows = (row_class, h_slot in [0,8), b)   -> 16*tb
    #   cols = (col_class, w_slot in [0,8), c1)  -> 1024
    # (even class slot 7 / odd class slot 0 hold conv2's zero padding)
    h1 = jnp.dot(a1_ref[...], w1e_ref[...], preferred_element_type=jnp.float32)
    h1 = jnp.maximum(h1, 0.0).astype(jnp.bfloat16)        # cast ONCE (16*tb, 1024)

    # Static slice offsets: rows per ky, column class/offset per kx.
    row0 = []
    for ky in range(4):
        rcls, roff = 1 - (ky & 1), ky // 2
        row0.append(rcls * (8 * tb) + roff * tb)
    col0 = []
    for kx in range(4):
        ccls, coff = 1 - (kx & 1), kx // 2
        col0.append(ccls * (8 * C1) + coff * C1)

    # conv2 (+ReLU): for each output column j, gather the 16 tap blocks along K
    # and do ONE dense (7*tb, 1024) x (1024, 32) matmul (exact FLOPs, 64 KB weight).
    h2_blocks = []
    for j in range(H2):
        op_j = jnp.concatenate(
            [h1[row0[ky]:row0[ky] + R,
                col0[kx] + j * C1:col0[kx] + (j + 1) * C1]
             for ky in range(4) for kx in range(4)], axis=1)       # (7*tb, 1024)
        blk = jnp.dot(op_j, w2d_ref[...], preferred_element_type=jnp.float32)
        h2_blocks.append(jnp.maximum(blk, 0.0).astype(jnp.bfloat16))
    h2 = jnp.concatenate(h2_blocks, axis=1)     # (7*tb, 224): rows (i,b), cols (j,c2)

    # fc1 (+ReLU): exact-FLOP accumulation over the 7 row blocks (spatial i).
    h3 = jnp.zeros((tb, FC1_OUT), jnp.float32)
    for i in range(H2):
        h3 = h3 + jnp.dot(h2[i * tb:(i + 1) * tb, :],
                          wcat_ref[i * (H2 * C2):(i + 1) * (H2 * C2), :],
                          preferred_element_type=jnp.float32)
    h3 = jnp.maximum(h3, 0.0)                                       # (tb, 256) f32

    # fc2 + (mu, std) epilogue; single lane-dense (tb, 128) store.
    stats = jnp.dot(h3, wfc2_ref[...], preferred_element_type=jnp.float32)
    col = jax.lax.broadcasted_iota(jnp.int32, (1, STATS_PAD), 1)
    is_logvar = ((col >= Z_PRIVATE) & (col < 2 * Z_PRIVATE)) | (
        (col >= 2 * Z_PRIVATE + Z_SHARED) & (col < STATS_DIM))
    std = jnp.sqrt(jnp.exp(jnp.where(is_logvar, stats, 0.0)) + EPS)
    out_ref[...] = jnp.where(is_logvar, std, stats)


# ------------------------ one-time offline weight prep ----------------------

def prepare_params(params):
    """One-time weight re-layout (keep OUT of the per-step jitted forward)."""
    w1 = params["conv1_w"].astype(jnp.float32)    # (64, 1, 4, 4)
    w2 = params["conv2_w"].astype(jnp.float32)    # (32, 64, 4, 4)
    fc1 = params["fc1_w"].astype(jnp.float32)     # (256, 1568)  input order (C,H,W)
    fc2 = params["fc2_w"].astype(jnp.float32)     # (120, 256)

    # conv1: block-diagonal over the 16 (col_class, w_slot) groups so a single
    # matmul emits conv1's output already in the padded parity-split layout.
    w1m = w1.reshape(C1, 16).T                                      # (16 taps, 64)
    valid = jnp.array([1.0] * 7 + [0.0, 0.0] + [1.0] * 7, jnp.float32)
    w1e = jnp.einsum('gh,kc->gkhc', jnp.diag(valid), w1m).reshape(16 * 16, 16 * C1)

    # conv2: DENSE per-tap weight, rows (tap=ky*4+kx, c1), cols c2  -> 64 KB.
    w2d = jnp.transpose(w2, (2, 3, 1, 0)).reshape(16 * C1, C2)      # (1024, 32)

    # fc1 permuted so the kernel accumulates h3 += h2[i-block] @ wcat[i-block];
    # rows ordered (i, j, c2) to consume h2's (j, c2) columns directly (the
    # PyTorch NCHW flatten disappears into this permutation).
    wcat = jnp.transpose(fc1.reshape(FC1_OUT, C2, H2, H2), (2, 3, 1, 0))
    wcat = wcat.reshape(H2 * H2 * C2, FC1_OUT)                      # (1568, 256)

    # fc2 pre-transposed + zero-padded to a lane-dense 128 columns (kept f32).
    wfc2 = jnp.zeros((FC1_OUT, STATS_PAD), jnp.float32).at[:, :STATS_DIM].set(fc2.T)

    return {
        "w1e": w1e.astype(jnp.bfloat16),     # 512 KB
        "w2d": w2d.astype(jnp.bfloat16),     #  64 KB (was 3.2 MB)
        "wcat": wcat.astype(jnp.bfloat16),   # 802 KB
        "wfc2": wfc2,                        # 128 KB
    }


# ------------------------------ per-step wrapper -----------------------------

def _build_conv1_operand(x_nchw, tb):
    """conv1 im2col in a padded, parity-split, batch-tiled layout (pure XLA).

    Per batch tile t, rows = (row_class, h_slot in [0,8), b_in);
    cols = (col_class, w_slot in [0,8), ky*4+kx).
    Even class slot 7 / odd class slot 0 are zero padding.
    """
    B = x_nchw.shape[0]
    nt = B // tb
    xp = jnp.pad(x_nchw[:, 0, :, :], ((0, 0), (1, 1), (1, 1)))       # (B, 30, 30)
    taps = [xp[:, ky:ky + 2 * H1:2, kx:kx + 2 * H1:2]
            for ky in range(4) for kx in range(4)]                    # 16 x (B,14,14)
    t = jnp.stack(taps, axis=-1)                                      # (B, 14, 14, 16)

    zr = jnp.zeros((B, 1, H1, 16), t.dtype)
    th = jnp.stack([jnp.concatenate([t[:, 0::2], zr], axis=1),        # even rows + pad
                    jnp.concatenate([zr, t[:, 1::2]], axis=1)],       # pad + odd rows
                   axis=0)                                            # (2, B, 8, 14, 16)

    zc = jnp.zeros((2, B, 8, 1, 16), t.dtype)
    tw = jnp.stack([jnp.concatenate([th[:, :, :, 0::2, :], zc], axis=3),
                    jnp.concatenate([zc, th[:, :, :, 1::2, :]], axis=3)],
                   axis=3)                                            # (2, B, 8, 2, 8, 16)

    a1 = tw.reshape(2, nt, tb, 8, 2, 8, 16)
    a1 = jnp.transpose(a1, (1, 0, 3, 2, 4, 5, 6))  # (tile, rcls, hslot, b_in, ccls, wslot, tap)
    return a1.reshape(nt * 16 * tb, 2 * 8 * 16).astype(jnp.bfloat16)


def encoder_b_forward(x_nchw, prep, batch_tile=16):
    """Returns ((muPrivate, stdPrivate), (muShared, stdShared)), each (1, B, dim)."""
    B = x_nchw.shape[0]
    tb = min(batch_tile, B)
    if tb < B:
        tb = max(8, (tb // 8) * 8)        # multi-tile: keep sublane-aligned blocks
    b_pad = ((B + tb - 1) // tb) * tb
    if b_pad != B:
        x_nchw = jnp.pad(x_nchw, ((0, b_pad - B), (0, 0), (0, 0), (0, 0)))
    nt = b_pad // tb

    a1 = _build_conv1_operand(x_nchw, tb)

    stats = pl.pallas_call(
        _encoder_b_kernel,
        out_shape=jax.ShapeDtypeStruct((b_pad, STATS_PAD), jnp.float32),
        grid=(nt,),
        in_specs=[
            pl.BlockSpec((16 * tb, 2 * 8 * 16), lambda t: (t, 0)),       # a1 (tiled)
            pl.BlockSpec((16 * 16, 16 * C1), lambda t: (0, 0)),          # w1e (resident)
            pl.BlockSpec((16 * C1, C2), lambda t: (0, 0)),               # w2d (resident)
            pl.BlockSpec((H2 * H2 * C2, FC1_OUT), lambda t: (0, 0)),     # wcat (resident)
            pl.BlockSpec((FC1_OUT, STATS_PAD), lambda t: (0, 0)),        # wfc2 (resident)
        ],
        out_specs=pl.BlockSpec((tb, STATS_PAD), lambda t: (t, 0)),
        compiler_params=pltpu.CompilerParams(
            dimension_semantics=("parallel",)),
    )(a1, prep["w1e"], prep["w2d"], prep["wcat"], prep["wfc2"])

    stats = stats[:B]
    mu_p = stats[:, :Z_PRIVATE][None]
    std_p = stats[:, Z_PRIVATE:2 * Z_PRIVATE][None]
    mu_s = stats[:, 2 * Z_PRIVATE:2 * Z_PRIVATE + Z_SHARED][None]
    std_s = stats[:, 2 * Z_PRIVATE + Z_SHARED:STATS_DIM][None]
    # TODO(synk): probtorch.Trace / q.normal bookkeeping has no Pallas
    # equivalent; return the (mu, std) pairs for 'privateB' and 'sharedB'.
    return (mu_p, std_p), (mu_s, std_s)


# ------------------------------ reference & main -----------------------------

def _reference_forward(x, params):
    h = jax.lax.conv_general_dilated(x, params["conv1_w"], (2, 2), [(1, 1), (1, 1)],
                                     dimension_numbers=("NCHW", "OIHW", "NCHW"))
    h = jnp.maximum(h, 0.0)
    h = jax.lax.conv_general_dilated(h, params["conv2_w"], (2, 2), [(1, 1), (1, 1)],
                                     dimension_numbers=("NCHW", "OIHW", "NCHW"))
    h = jnp.maximum(h, 0.0)
    h = h.reshape(h.shape[0], -1)                       # NCHW flatten, like PyTorch
    h = jnp.maximum(h @ params["fc1_w"].T, 0.0)
    stats = h @ params["fc2_w"].T
    mu_p = stats[:, :Z_PRIVATE][None]
    std_p = jnp.sqrt(jnp.exp(stats[:, Z_PRIVATE:2 * Z_PRIVATE]) + EPS)[None]
    mu_s = stats[:, 2 * Z_PRIVATE:2 * Z_PRIVATE + Z_SHARED][None]
    std_s = jnp.sqrt(jnp.exp(stats[:, 2 * Z_PRIVATE + Z_SHARED:STATS_DIM]) + EPS)[None]
    return (mu_p, std_p), (mu_s, std_s)


def kaiming_normal(key, shape, fan_in):
    return jax.random.normal(key, shape, jnp.float32) * jnp.sqrt(2.0 / fan_in)


if __name__ == "__main__":
    key = jax.random.PRNGKey(0)
    kx_, k1, k2, k3, k4 = jax.random.split(key, 5)

    B = 2
    # forward implies a 28x28 single-channel input (two stride-2 convs -> 7x7)
    x = jax.random.normal(kx_, (B, 1, 28, 28), jnp.float32)

    params = {
        "conv1_w": kaiming_normal(k1, (64, 1, 4, 4), 1 * 4 * 4),        # Conv2d(1, 64, 4, 2, 1)
        "conv2_w": kaiming_normal(k2, (32, 64, 4, 4), 64 * 4 * 4),      # Conv2d(64, 32, 4, 2, 1)
        "fc1_w":   kaiming_normal(k3, (256, 7 * 7 * 32), 7 * 7 * 32),   # Linear(1568, 256)
        "fc2_w":   kaiming_normal(k4, (STATS_DIM, 256), 256),           # Linear(256, 120)
    }

    prep = prepare_params(params)            # one-time offline weight re-layout
    fwd = jax.jit(encoder_b_forward)

    (mu_p, std_p), (mu_s, std_s) = fwd(x, prep)
    jax.block_until_ready((mu_p, std_p, mu_s, std_s))

    assert mu_p.shape == (1, B, Z_PRIVATE) and std_p.shape == (1, B, Z_PRIVATE)
    assert mu_s.shape == (1, B, Z_SHARED) and std_s.shape == (1, B, Z_SHARED)
    assert bool(jnp.all(std_p > 0)) and bool(jnp.all(std_s > 0))

    # Sanity check vs a plain-XLA reference (loose tolerance: bf16 MXU inputs).
    (rmu_p, rstd_p), (rmu_s, rstd_s) = _reference_forward(x, params)
    for got, ref in ((mu_p, rmu_p), (std_p, rstd_p), (mu_s, rmu_s), (std_s, rstd_s)):
        assert jnp.allclose(got, ref, rtol=0.1, atol=0.1), \
            float(jnp.max(jnp.abs(got - ref)))

    print("KERNEL_OK")
</pallas_src>

<mosaic_0001>
module attributes {stable_mosaic.version = 11 : i64} {
  func.func @_encoder_b_kernel(%arg0: i32, %arg1: memref<32x256xbf16, #tpu.memory_space<vmem>>, %arg2: memref<256x1024xbf16, #tpu.memory_space<vmem>>, %arg3: memref<1024x32xbf16, #tpu.memory_space<vmem>>, %arg4: memref<1568x256xbf16, #tpu.memory_space<vmem>>, %arg5: memref<256x128xf32, #tpu.memory_space<vmem>>, %arg6: memref<2x128xf32, #tpu.memory_space<vmem>>) attributes {dimension_semantics = [#tpu.dimension_semantics<parallel>], iteration_bounds = array<i64: 1>, scalar_prefetch = 0 : i64, scratch_operands = 0 : i64, tpu.core_type = #tpu.core_type<tc>, window_params = [{transform_indices = @transform_0, window_bounds = array<i64: 32, 256>}, {pipeline_mode = #tpu.pipeline_mode<synchronous>, transform_indices = @transform_1, window_bounds = array<i64: 256, 1024>}, {pipeline_mode = #tpu.pipeline_mode<synchronous>, transform_indices = @transform_2, window_bounds = array<i64: 1024, 32>}, {pipeline_mode = #tpu.pipeline_mode<synchronous>, transform_indices = @transform_3, window_bounds = array<i64: 1568, 256>}, {pipeline_mode = #tpu.pipeline_mode<synchronous>, transform_indices = @transform_4, window_bounds = array<i64: 256, 128>}, {transform_indices = @transform_5, window_bounds = array<i64: 2, 128>}]} {
    %c0 = arith.constant 0 : index
    %c0_0 = arith.constant 0 : index
    %0 = vector.load %arg1[%c0, %c0_0] : memref<32x256xbf16, #tpu.memory_space<vmem>>, vector<32x256xbf16>
    %c0_1 = arith.constant 0 : index
    %c0_2 = arith.constant 0 : index
    %1 = vector.load %arg2[%c0_1, %c0_2] : memref<256x1024xbf16, #tpu.memory_space<vmem>>, vector<256x1024xbf16>
    %cst = arith.constant dense<0.000000e+00> : vector<32x1024xf32>
    %2 = tpu.matmul %0, %1, %cst {dimension_numbers = #tpu.dot_dimension_numbers<[1], [0], [0], [1], [0, 0, 1, 1], [], []>} : vector<32x256xbf16>, vector<256x1024xbf16>, vector<32x1024xf32> -> vector<32x1024xf32>
    %cst_3 = arith.constant 0.000000e+00 : f32
    %3 = vector.broadcast %cst_3 : f32 to vector<32x1024xf32>
    %4 = arith.maximumf %2, %3 : vector<32x1024xf32>
    %5 = arith.truncf %4 : vector<32x1024xf32> to vector<32x1024xbf16>
    %6 = vector.extract_strided_slice %5 {offsets = [16, 512], sizes = [14, 64], strides = [1, 1]} : vector<32x1024xbf16> to vector<14x64xbf16>
    %7 = vector.extract_strided_slice %5 {offsets = [16, 0], sizes = [14, 64], strides = [1, 1]} : vector<32x1024xbf16> to vector<14x64xbf16>
    %8 = vector.extract_strided_slice %5 {offsets = [16, 576], sizes = [14, 64], strides = [1, 1]} : vector<32x1024xbf16> to vector<14x64xbf16>
    %9 = vector.extract_strided_slice %5 {offsets = [16, 64], sizes = [14, 64], strides = [1, 1]} : vector<32x1024xbf16> to vector<14x64xbf16>
    %10 = vector.extract_strided_slice %5 {offsets = [0, 512], sizes = [14, 64], strides = [1, 1]} : vector<32x1024xbf16> to vector<14x64xbf16>
    %11 = vector.extract_strided_slice %5 {offsets = [0, 0], sizes = [14, 64], strides = [1, 1]} : vector<32x1024xbf16> to vector<14x64xbf16>
    %12 = vector.extract_strided_slice %5 {offsets = [0, 576], sizes = [14, 64], strides = [1, 1]} : vector<32x1024xbf16> to vector<14x64xbf16>
    %13 = vector.extract_strided_slice %5 {offsets = [0, 64], sizes = [14, 64], strides = [1, 1]} : vector<32x1024xbf16> to vector<14x64xbf16>
    %14 = vector.extract_strided_slice %5 {offsets = [18, 512], sizes = [14, 64], strides = [1, 1]} : vector<32x1024xbf16> to vector<14x64xbf16>
    %15 = vector.extract_strided_slice %5 {offsets = [18, 0], sizes = [14, 64], strides = [1, 1]} : vector<32x1024xbf16> to vector<14x64xbf16>
    %16 = vector.extract_strided_slice %5 {offsets = [18, 576], sizes = [14, 64], strides = [1, 1]} : vector<32x1024xbf16> to vector<14x64xbf16>
    %17 = vector.extract_strided_slice %5 {offsets = [18, 64], sizes = [14, 64], strides = [1, 1]} : vector<32x1024xbf16> to vector<14x64xbf16>
    %18 = vector.extract_strided_slice %5 {offsets = [2, 512], sizes = [14, 64], strides = [1, 1]} : vector<32x1024xbf16> to vector<14x64xbf16>
    %19 = vector.extract_strided_slice %5 {offsets = [2, 0], sizes = [14, 64], strides = [1, 1]} : vector<32x1024xbf16> to vector<14x64xbf16>
    %20 = vector.extract_strided_slice %5 {offsets = [2, 576], sizes = [14, 64], strides = [1, 1]} : vector<32x1024xbf16> to vector<14x64xbf16>
    %21 = vector.extract_strided_slice %5 {offsets = [2, 64], sizes = [14, 64], strides = [1, 1]} : vector<32x1024xbf16> to vector<14x64xbf16>
    %22 = tpu.concatenate %6, %7, %8, %9, %10, %11, %12, %13, %14, %15, %16, %17, %18, %19, %20, %21 in 1 : vector<14x64xbf16>, vector<14x64xbf16>, vector<14x64xbf16>, vector<14x64xbf16>, vector<14x64xbf16>, vector<14x64xbf16>, vector<14x64xbf16>, vector<14x64xbf16>, vector<14x64xbf16>, vector<14x64xbf16>, vector<14x64xbf16>, vector<14x64xbf16>, vector<14x64xbf16>, vector<14x64xbf16>, vector<14x64xbf16>, vector<14x64xbf16> -> vector<14x1024xbf16>
    %c0_4 = arith.constant 0 : index
    %c0_5 = arith.constant 0 : index
    %23 = vector.load %arg3[%c0_4, %c0_5] : memref<1024x32xbf16, #tpu.memory_space<vmem>>, vector<1024x32xbf16>
    %cst_6 = arith.constant dense<0.000000e+00> : vector<14x32xf32>
    %24 = tpu.matmul %22, %23, %cst_6 {dimension_numbers = #tpu.dot_dimension_numbers<[1], [0], [0], [1], [0, 0, 1, 1], [], []>} : vector<14x1024xbf16>, vector<1024x32xbf16>, vector<14x32xf32> -> vector<14x32xf32>
    %cst_7 = arith.constant 0.000000e+00 : f32
    %25 = vector.broadcast %cst_7 : f32 to vector<14x32xf32>
    %26 = arith.maximumf %24, %25 : vector<14x32xf32>
    %27 = arith.truncf %26 : vector<14x32xf32> to vector<14x32xbf16>
    %28 = vector.extract_strided_slice %5 {offsets = [16, 576], sizes = [14, 64], strides = [1, 1]} : vector<32x1024xbf16> to vector<14x64xbf16>
    %29 = vector.extract_strided_slice %5 {offsets = [16, 64], sizes = [14, 64], strides = [1, 1]} : vector<32x1024xbf16> to vector<14x64xbf16>
    %30 = vector.extract_strided_slice %5 {offsets = [16, 640], sizes = [14, 64], strides = [1, 1]} : vector<32x1024xbf16> to vector<14x64xbf16>
    %31 = vector.extract_strided_slice %5 {offsets = [16, 128], sizes = [14, 64], strides = [1, 1]} : vector<32x1024xbf16> to vector<14x64xbf16>
    %32 = vector.extract_strided_slice %5 {offsets = [0, 576], sizes = [14, 64], strides = [1, 1]} : vector<32x1024xbf16> to vector<14x64xbf16>
    %33 = vector.extract_strided_slice %5 {offsets = [0, 64], sizes = [14, 64], strides = [1, 1]} : vector<32x1024xbf16> to vector<14x64xbf16>
    %34 = vector.extract_strided_slice %5 {offsets = [0, 640], sizes = [14, 64], strides = [1, 1]} : vector<32x1024xbf16> to vector<14x64xbf16>
    %35 = vector.extract_strided_slice %5 {offsets = [0, 128], sizes = [14, 64], strides = [1, 1]} : vector<32x1024xbf16> to vector<14x64xbf16>
    %36 = vector.extract_strided_slice %5 {offsets = [18, 576], sizes = [14, 64], strides = [1, 1]} : vector<32x1024xbf16> to vector<14x64xbf16>
    %37 = vector.extract_strided_slice %5 {offsets = [18, 64], sizes = [14, 64], strides = [1, 1]} : vector<32x1024xbf16> to vector<14x64xbf16>
    %38 = vector.extract_strided_slice %5 {offsets = [18, 640], sizes = [14, 64], strides = [1, 1]} : vector<32x1024xbf16> to vector<14x64xbf16>
    %39 = vector.extract_strided_slice %5 {offsets = [18, 128], sizes = [14, 64], strides = [1, 1]} : vector<32x1024xbf16> to vector<14x64xbf16>
    %40 = vector.extract_strided_slice %5 {offsets = [2, 576], sizes = [14, 64], strides = [1, 1]} : vector<32x1024xbf16> to vector<14x64xbf16>
    %41 = vector.extract_strided_slice %5 {offsets = [2, 64], sizes = [14, 64], strides = [1, 1]} : vector<32x1024xbf16> to vector<14x64xbf16>
    %42 = vector.extract_strided_slice %5 {offsets = [2, 640], sizes = [14, 64], strides = [1, 1]} : vector<32x1024xbf16> to vector<14x64xbf16>
    %43 = vector.extract_strided_slice %5 {offsets = [2, 128], sizes = [14, 64], strides = [1, 1]} : vector<32x1024xbf16> to vector<14x64xbf16>
    %44 = tpu.concatenate %28, %29, %30, %31, %32, %33, %34, %35, %36, %37, %38, %39, %40, %41, %42, %43 in 1 : vector<14x64xbf16>, vector<14x64xbf16>, vector<14x64xbf16>, vector<14x64xbf16>, vector<14x64xbf16>, vector<14x64xbf16>, vector<14x64xbf16>, vector<14x64xbf16>, vector<14x64xbf16>, vector<14x64xbf16>, vector<14x64xbf16>, vector<14x64xbf16>, vector<14x64xbf16>, vector<14x64xbf16>, vector<14x64xbf16>, vector<14x64xbf16> -> vector<14x1024xbf16>
    %c0_8 = arith.constant 0 : index
    %c0_9 = arith.constant 0 : index
    %45 = vector.load %arg3[%c0_8, %c0_9] : memref<1024x32xbf16, #tpu.memory_space<vmem>>, vector<1024x32xbf16>
    %cst_10 = arith.constant dense<0.000000e+00> : vector<14x32xf32>
    %46 = tpu.matmul %44, %45, %cst_10 {dimension_numbers = #tpu.dot_dimension_numbers<[1], [0], [0], [1], [0, 0, 1, 1], [], []>} : vector<14x1024xbf16>, vector<1024x32xbf16>, vector<14x32xf32> -> vector<14x32xf32>
    %cst_11 = arith.constant 0.000000e+00 : f32
    %47 = vector.broadcast %cst_11 : f32 to vector<14x32xf32>
    %48 = arith.maximumf %46, %47 : vector<14x32xf32>
    %49 = arith.truncf %48 : vector<14x32xf32> to vector<14x32xbf16>
    %50 = vector.extract_strided_slice %5 {offsets = [16, 640], sizes = [14, 64], strides = [1, 1]} : vector<32x1024xbf16> to vector<14x64xbf16>
    %51 = vector.extract_strided_slice %5 {offsets = [16, 128], sizes = [14, 64], strides = [1, 1]} : vector<32x1024xbf16> to vector<14x64xbf16>
    %52 = vector.extract_strided_slice %5 {offsets = [16, 704], sizes = [14, 64], strides = [1, 1]} : vector<32x1024xbf16> to vector<14x64xbf16>
    %53 = vector.extract_strided_slice %5 {offsets = [16, 192], sizes = [14, 64], strides = [1, 1]} : vector<32x1024xbf16> to vector<14x64xbf16>
    %54 = vector.extract_strided_slice %5 {offsets = [0, 640], sizes = [14, 64], strides = [1, 1]} : vector<32x1024xbf16> to vector<14x64xbf16>
    %55 = vector.extract_strided_slice %5 {offsets = [0, 128], sizes = [14, 64], strides = [1, 1]} : vector<32x1024xbf16> to vector<14x64xbf16>
    %56 = vector.extract_strided_slice %5 {offsets = [0, 704], sizes = [14, 64], strides = [1, 1]} : vector<32x1024xbf16> to vector<14x64xbf16>
    %57 = vector.extract_strided_slice %5 {offsets = [0, 192], sizes = [14, 64], strides = [1, 1]} : vector<32x1024xbf16> to vector<14x64xbf16>
    %58 = vector.extract_strided_slice %5 {offsets = [18, 640], sizes = [14, 64], strides = [1, 1]} : vector<32x1024xbf16> to vector<14x64xbf16>
    %59 = vector.extract_strided_slice %5 {offsets = [18, 128], sizes = [14, 64], strides = [1, 1]} : vector<32x1024xbf16> to vector<14x64xbf16>
    %60 = vector.extract_strided_slice %5 {offsets = [18, 704], sizes = [14, 64], strides = [1, 1]} : vector<32x1024xbf16> to vector<14x64xbf16>
    %61 = vector.extract_strided_slice %5 {offsets = [18, 192], sizes = [14, 64], strides = [1, 1]} : vector<32x1024xbf16> to vector<14x64xbf16>
    %62 = vector.extract_strided_slice %5 {offsets = [2, 640], sizes = [14, 64], strides = [1, 1]} : vector<32x1024xbf16> to vector<14x64xbf16>
    %63 = vector.extract_strided_slice %5 {offsets = [2, 128], sizes = [14, 64], strides = [1, 1]} : vector<32x1024xbf16> to vector<14x64xbf16>
    %64 = vector.extract_strided_slice %5 {offsets = [2, 704], sizes = [14, 64], strides = [1, 1]} : vector<32x1024xbf16> to vector<14x64xbf16>
    %65 = vector.extract_strided_slice %5 {offsets = [2, 192], sizes = [14, 64], strides = [1, 1]} : vector<32x1024xbf16> to vector<14x64xbf16>
    %66 = tpu.concatenate %50, %51, %52, %53, %54, %55, %56, %57, %58, %59, %60, %61, %62, %63, %64, %65 in 1 : vector<14x64xbf16>, vector<14x64xbf16>, vector<14x64xbf16>, vector<14x64xbf16>, vector<14x64xbf16>, vector<14x64xbf16>, vector<14x64xbf16>, vector<14x64xbf16>, vector<14x64xbf16>, vector<14x64xbf16>, vector<14x64xbf16>, vector<14x64xbf16>, vector<14x64xbf16>, vector<14x64xbf16>, vector<14x64xbf16>, vector<14x64xbf16> -> vector<14x1024xbf16>
    %c0_12 = arith.constant 0 : index
    %c0_13 = arith.constant 0 : index
    %67 = vector.load %arg3[%c0_12, %c0_13] : memref<1024x32xbf16, #tpu.memory_space<vmem>>, vector<1024x32xbf16>
    %cst_14 = arith.constant dense<0.000000e+00> : vector<14x32xf32>
    %68 = tpu.matmul %66, %67, %cst_14 {dimension_numbers = #tpu.dot_dimension_numbers<[1], [0], [0], [1], [0, 0, 1, 1], [], []>} : vector<14x1024xbf16>, vector<1024x32xbf16>, vector<14x32xf32> -> vector<14x32xf32>
    %cst_15 = arith.constant 0.000000e+00 : f32
    %69 = vector.broadcast %cst_15 : f32 to vector<14x32xf32>
    %70 = arith.maximumf %68, %69 : vector<14x32xf32>
    %71 = arith.truncf %70 : vector<14x32xf32> to vector<14x32xbf16>
    %72 = vector.extract_strided_slice %5 {offsets = [16, 704], sizes = [14, 64], strides = [1, 1]} : vector<32x1024xbf16> to vector<14x64xbf16>
    %73 = vector.extract_strided_slice %5 {offsets = [16, 192], sizes = [14, 64], strides = [1, 1]} : vector<32x1024xbf16> to vector<14x64xbf16>
    %74 = vector.extract_strided_slice %5 {offsets = [16, 768], sizes = [14, 64], strides = [1, 1]} : vector<32x1024xbf16> to vector<14x64xbf16>
    %75 = vector.extract_strided_slice %5 {offsets = [16, 256], sizes = [14, 64], strides = [1, 1]} : vector<32x1024xbf16> to vector<14x64xbf16>
    %76 = vector.extract_strided_slice %5 {offsets = [0, 704], sizes = [14, 64], strides = [1, 1]} : vector<32x1024xbf16> to vector<14x64xbf16>
    %77 = vector.extract_strided_slice %5 {offsets = [0, 192], sizes = [14, 64], strides = [1, 1]} : vector<32x1024xbf16> to vector<14x64xbf16>
    %78 = vector.extract_strided_slice %5 {offsets = [0, 768], sizes = [14, 64], strides = [1, 1]} : vector<32x1024xbf16> to vector<14x64xbf16>
    %79 = vector.extract_strided_slice %5 {offsets = [0, 256], sizes = [14, 64], strides = [1, 1]} : vector<32x1024xbf16> to vector<14x64xbf16>
    %80 = vector.extract_strided_slice %5 {offsets = [18, 704], sizes = [14, 64], strides = [1, 1]} : vector<32x1024xbf16> to vector<14x64xbf16>
    %81 = vector.extract_strided_slice %5 {offsets = [18, 192], sizes = [14, 64], strides = [1, 1]} : vector<32x1024xbf16> to vector<14x64xbf16>
    %82 = vector.extract_strided_slice %5 {offsets = [18, 768], sizes = [14, 64], strides = [1, 1]} : vector<32x1024xbf16> to vector<14x64xbf16>
    %83 = vector.extract_strided_slice %5 {offsets = [18, 256], sizes = [14, 64], strides = [1, 1]} : vector<32x1024xbf16> to vector<14x64xbf16>
    %84 = vector.extract_strided_slice %5 {offsets = [2, 704], sizes = [14, 64], strides = [1, 1]} : vector<32x1024xbf16> to vector<14x64xbf16>
    %85 = vector.extract_strided_slice %5 {offsets = [2, 192], sizes = [14, 64], strides = [1, 1]} : vector<32x1024xbf16> to vector<14x64xbf16>
    %86 = vector.extract_strided_slice %5 {offsets = [2, 768], sizes = [14, 64], strides = [1, 1]} : vector<32x1024xbf16> to vector<14x64xbf16>
    %87 = vector.extract_strided_slice %5 {offsets = [2, 256], sizes = [14, 64], strides = [1, 1]} : vector<32x1024xbf16> to vector<14x64xbf16>
    %88 = tpu.concatenate %72, %73, %74, %75, %76, %77, %78, %79, %80, %81, %82, %83, %84, %85, %86, %87 in 1 : vector<14x64xbf16>, vector<14x64xbf16>, vector<14x64xbf16>, vector<14x64xbf16>, vector<14x64xbf16>, vector<14x64xbf16>, vector<14x64xbf16>, vector<14x64xbf16>, vector<14x64xbf16>, vector<14x64xbf16>, vector<14x64xbf16>, vector<14x64xbf16>, vector<14x64xbf16>, vector<14x64xbf16>, vector<14x64xbf16>, vector<14x64xbf16> -> vector<14x1024xbf16>
    %c0_16 = arith.constant 0 : index
    %c0_17 = arith.constant 0 : index
    %89 = vector.load %arg3[%c0_16, %c0_17] : memref<1024x32xbf16, #tpu.memory_space<vmem>>, vector<1024x32xbf16>
    %cst_18 = arith.constant dense<0.000000e+00> : vector<14x32xf32>
    %90 = tpu.matmul %88, %89, %cst_18 {dimension_numbers = #tpu.dot_dimension_numbers<[1], [0], [0], [1], [0, 0, 1, 1], [], []>} : vector<14x1024xbf16>, vector<1024x32xbf16>, vector<14x32xf32> -> vector<14x32xf32>
    %cst_19 = arith.constant 0.000000e+00 : f32
    %91 = vector.broadcast %cst_19 : f32 to vector<14x32xf32>
    %92 = arith.maximumf %90, %91 : vector<14x32xf32>
    %93 = arith.truncf %92 : vector<14x32xf32> to vector<14x32xbf16>
    %94 = vector.extract_strided_slice %5 {offsets = [16, 768], sizes = [14, 64], strides = [1, 1]} : vector<32x1024xbf16> to vector<14x64xbf16>
    %95 = vector.extract_strided_slice %5 {offsets = [16, 256], sizes = [14, 64], strides = [1, 1]} : vector<32x1024xbf16> to vector<14x64xbf16>
    %96 = vector.extract_strided_slice %5 {offsets = [16, 832], sizes = [14, 64], strides = [1, 1]} : vector<32x1024xbf16> to vector<14x64xbf16>
    %97 = vector.extract_strided_slice %5 {offsets = [16, 320], sizes = [14, 64], strides = [1, 1]} : vector<32x1024xbf16> to vector<14x64xbf16>
    %98 = vector.extract_strided_slice %5 {offsets = [0, 768], sizes = [14, 64], strides = [1, 1]} : vector<32x1024xbf16> to vector<14x64xbf16>
    %99 = vector.extract_strided_slice %5 {offsets = [0, 256], sizes = [14, 64], strides = [1, 1]} : vector<32x1024xbf16> to vector<14x64xbf16>
    %100 = vector.extract_strided_slice %5 {offsets = [0, 832], sizes = [14, 64], strides = [1, 1]} : vector<32x1024xbf16> to vector<14x64xbf16>
    %101 = vector.extract_strided_slice %5 {offsets = [0, 320], sizes = [14, 64], strides = [1, 1]} : vector<32x1024xbf16> to vector<14x64xbf16>
    %102 = vector.extract_strided_slice %5 {offsets = [18, 768], sizes = [14, 64], strides = [1, 1]} : vector<32x1024xbf16> to vector<14x64xbf16>
    %103 = vector.extract_strided_slice %5 {offsets = [18, 256], sizes = [14, 64], strides = [1, 1]} : vector<32x1024xbf16> to vector<14x64xbf16>
    %104 = vector.extract_strided_slice %5 {offsets = [18, 832], sizes = [14, 64], strides = [1, 1]} : vector<32x1024xbf16> to vector<14x64xbf16>
    %105 = vector.extract_strided_slice %5 {offsets = [18, 320], sizes = [14, 64], strides = [1, 1]} : vector<32x1024xbf16> to vector<14x64xbf16>
    %106 = vector.extract_strided_slice %5 {offsets = [2, 768], sizes = [14, 64], strides = [1, 1]} : vector<32x1024xbf16> to vector<14x64xbf16>
    %107 = vector.extract_strided_slice %5 {offsets = [2, 256], sizes = [14, 64], strides = [1, 1]} : vector<32x1024xbf16> to vector<14x64xbf16>
    %108 = vector.extract_strided_slice %5 {offsets = [2, 832], sizes = [14, 64], strides = [1, 1]} : vector<32x1024xbf16> to vector<14x64xbf16>
    %109 = vector.extract_strided_slice %5 {offsets = [2, 320], sizes = [14, 64], strides = [1, 1]} : vector<32x1024xbf16> to vector<14x64xbf16>
    %110 = tpu.concatenate %94, %95, %96, %97, %98, %99, %100, %101, %102, %103, %104, %105, %106, %107, %108, %109 in 1 : vector<14x64xbf16>, vector<14x64xbf16>, vector<14x64xbf16>, vector<14x64xbf16>, vector<14x64xbf16>, vector<14x64xbf16>, vector<14x64xbf16>, vector<14x64xbf16>, vector<14x64xbf16>, vector<14x64xbf16>, vector<14x64xbf16>, vector<14x64xbf16>, vector<14x64xbf16>, vector<14x64xbf16>, vector<14x64xbf16>, vector<14x64xbf16> -> vector<14x1024xbf16>
    %c0_20 = arith.constant 0 : index
    %c0_21 = arith.constant 0 : index
    %111 = vector.load %arg3[%c0_20, %c0_21] : memref<1024x32xbf16, #tpu.memory_space<vmem>>, vector<1024x32xbf16>
    %cst_22 = arith.constant dense<0.000000e+00> : vector<14x32xf32>
    %112 = tpu.matmul %110, %111, %cst_22 {dimension_numbers = #tpu.dot_dimension_numbers<[1], [0], [0], [1], [0, 0, 1, 1], [], []>} : vector<14x1024xbf16>, vector<1024x32xbf16>, vector<14x32xf32> -> vector<14x32xf32>
    %cst_23 = arith.constant 0.000000e+00 : f32
    %113 = vector.broadcast %cst_23 : f32 to vector<14x32xf32>
    %114 = arith.maximumf %112, %113 : vector<14x32xf32>
    %115 = arith.truncf %114 : vector<14x32xf32> to vector<14x32xbf16>
    %116 = vector.extract_strided_slice %5 {offsets = [16, 832], sizes = [14, 64], strides = [1, 1]} : vector<32x1024xbf16> to vector<14x64xbf16>
    %117 = vector.extract_strided_slice %5 {offsets = [16, 320], sizes = [14, 64], strides = [1, 1]} : vector<32x1024xbf16> to vector<14x64xbf16>
    %118 = vector.extract_strided_slice %5 {offsets = [16, 896], sizes = [14, 64], strides = [1, 1]} : vector<32x1024xbf16> to vector<14x64xbf16>
    %119 = vector.extract_strided_slice %5 {offsets = [16, 384], sizes = [14, 64], strides = [1, 1]} : vector<32x1024xbf16> to vector<14x64xbf16>
    %120 = vector.extract_strided_slice %5 {offsets = [0, 832], sizes = [14, 64], strides = [1, 1]} : vector<32x1024xbf16> to vector<14x64xbf16>
    %121 = vector.extract_strided_slice %5 {offsets = [0, 320], sizes = [14, 64], strides = [1, 1]} : vector<32x1024xbf16> to vector<14x64xbf16>
    %122 = vector.extract_strided_slice %5 {offsets = [0, 896], sizes = [14, 64], strides = [1, 1]} : vector<32x1024xbf16> to vector<14x64xbf16>
    %123 = vector.extract_strided_slice %5 {offsets = [0, 384], sizes = [14, 64], strides = [1, 1]} : vector<32x1024xbf16> to vector<14x64xbf16>
    %124 = vector.extract_strided_slice %5 {offsets = [18, 832], sizes = [14, 64], strides = [1, 1]} : vector<32x1024xbf16> to vector<14x64xbf16>
    %125 = vector.extract_strided_slice %5 {offsets = [18, 320], sizes = [14, 64], strides = [1, 1]} : vector<32x1024xbf16> to vector<14x64xbf16>
    %126 = vector.extract_strided_slice %5 {offsets = [18, 896], sizes = [14, 64], strides = [1, 1]} : vector<32x1024xbf16> to vector<14x64xbf16>
    %127 = vector.extract_strided_slice %5 {offsets = [18, 384], sizes = [14, 64], strides = [1, 1]} : vector<32x1024xbf16> to vector<14x64xbf16>
    %128 = vector.extract_strided_slice %5 {offsets = [2, 832], sizes = [14, 64], strides = [1, 1]} : vector<32x1024xbf16> to vector<14x64xbf16>
    %129 = vector.extract_strided_slice %5 {offsets = [2, 320], sizes = [14, 64], strides = [1, 1]} : vector<32x1024xbf16> to vector<14x64xbf16>
    %130 = vector.extract_strided_slice %5 {offsets = [2, 896], sizes = [14, 64], strides = [1, 1]} : vector<32x1024xbf16> to vector<14x64xbf16>
    %131 = vector.extract_strided_slice %5 {offsets = [2, 384], sizes = [14, 64], strides = [1, 1]} : vector<32x1024xbf16> to vector<14x64xbf16>
    %132 = tpu.concatenate %116, %117, %118, %119, %120, %121, %122, %123, %124, %125, %126, %127, %128, %129, %130, %131 in 1 : vector<14x64xbf16>, vector<14x64xbf16>, vector<14x64xbf16>, vector<14x64xbf16>, vector<14x64xbf16>, vector<14x64xbf16>, vector<14x64xbf16>, vector<14x64xbf16>, vector<14x64xbf16>, vector<14x64xbf16>, vector<14x64xbf16>, vector<14x64xbf16>, vector<14x64xbf16>, vector<14x64xbf16>, vector<14x64xbf16>, vector<14x64xbf16> -> vector<14x1024xbf16>
    %c0_24 = arith.constant 0 : index
    %c0_25 = arith.constant 0 : index
    %133 = vector.load %arg3[%c0_24, %c0_25] : memref<1024x32xbf16, #tpu.memory_space<vmem>>, vector<1024x32xbf16>
    %cst_26 = arith.constant dense<0.000000e+00> : vector<14x32xf32>
    %134 = tpu.matmul %132, %133, %cst_26 {dimension_numbers = #tpu.dot_dimension_numbers<[1], [0], [0], [1], [0, 0, 1, 1], [], []>} : vector<14x1024xbf16>, vector<1024x32xbf16>, vector<14x32xf32> -> vector<14x32xf32>
    %cst_27 = arith.constant 0.000000e+00 : f32
    %135 = vector.broadcast %cst_27 : f32 to vector<14x32xf32>
    %136 = arith.maximumf %134, %135 : vector<14x32xf32>
    %137 = arith.truncf %136 : vector<14x32xf32> to vector<14x32xbf16>
    %138 = vector.extract_strided_slice %5 {offsets = [16, 896], sizes = [14, 64], strides = [1, 1]} : vector<32x1024xbf16> to vector<14x64xbf16>
    %139 = vector.extract_strided_slice %5 {offsets = [16, 384], sizes = [14, 64], strides = [1, 1]} : vector<32x1024xbf16> to vector<14x64xbf16>
    %140 = vector.extract_strided_slice %5 {offsets = [16, 960], sizes = [14, 64], strides = [1, 1]} : vector<32x1024xbf16> to vector<14x64xbf16>
    %141 = vector.extract_strided_slice %5 {offsets = [16, 448], sizes = [14, 64], strides = [1, 1]} : vector<32x1024xbf16> to vector<14x64xbf16>
    %142 = vector.extract_strided_slice %5 {offsets = [0, 896], sizes = [14, 64], strides = [1, 1]} : vector<32x1024xbf16> to vector<14x64xbf16>
    %143 = vector.extract_strided_slice %5 {offsets = [0, 384], sizes = [14, 64], strides = [1, 1]} : vector<32x1024xbf16> to vector<14x64xbf16>
    %144 = vector.extract_strided_slice %5 {offsets = [0, 960], sizes = [14, 64], strides = [1, 1]} : vector<32x1024xbf16> to vector<14x64xbf16>
    %145 = vector.extract_strided_slice %5 {offsets = [0, 448], sizes = [14, 64], strides = [1, 1]} : vector<32x1024xbf16> to vector<14x64xbf16>
    %146 = vector.extract_strided_slice %5 {offsets = [18, 896], sizes = [14, 64], strides = [1, 1]} : vector<32x1024xbf16> to vector<14x64xbf16>
    %147 = vector.extract_strided_slice %5 {offsets = [18, 384], sizes = [14, 64], strides = [1, 1]} : vector<32x1024xbf16> to vector<14x64xbf16>
    %148 = vector.extract_strided_slice %5 {offsets = [18, 960], sizes = [14, 64], strides = [1, 1]} : vector<32x1024xbf16> to vector<14x64xbf16>
    %149 = vector.extract_strided_slice %5 {offsets = [18, 448], sizes = [14, 64], strides = [1, 1]} : vector<32x1024xbf16> to vector<14x64xbf16>
    %150 = vector.extract_strided_slice %5 {offsets = [2, 896], sizes = [14, 64], strides = [1, 1]} : vector<32x1024xbf16> to vector<14x64xbf16>
    %151 = vector.extract_strided_slice %5 {offsets = [2, 384], sizes = [14, 64], strides = [1, 1]} : vector<32x1024xbf16> to vector<14x64xbf16>
    %152 = vector.extract_strided_slice %5 {offsets = [2, 960], sizes = [14, 64], strides = [1, 1]} : vector<32x1024xbf16> to vector<14x64xbf16>
    %153 = vector.extract_strided_slice %5 {offsets = [2, 448], sizes = [14, 64], strides = [1, 1]} : vector<32x1024xbf16> to vector<14x64xbf16>
    %154 = tpu.concatenate %138, %139, %140, %141, %142, %143, %144, %145, %146, %147, %148, %149, %150, %151, %152, %153 in 1 : vector<14x64xbf16>, vector<14x64xbf16>, vector<14x64xbf16>, vector<14x64xbf16>, vector<14x64xbf16>, vector<14x64xbf16>, vector<14x64xbf16>, vector<14x64xbf16>, vector<14x64xbf16>, vector<14x64xbf16>, vector<14x64xbf16>, vector<14x64xbf16>, vector<14x64xbf16>, vector<14x64xbf16>, vector<14x64xbf16>, vector<14x64xbf16> -> vector<14x1024xbf16>
    %c0_28 = arith.constant 0 : index
    %c0_29 = arith.constant 0 : index
    %155 = vector.load %arg3[%c0_28, %c0_29] : memref<1024x32xbf16, #tpu.memory_space<vmem>>, vector<1024x32xbf16>
    %cst_30 = arith.constant dense<0.000000e+00> : vector<14x32xf32>
    %156 = tpu.matmul %154, %155, %cst_30 {dimension_numbers = #tpu.dot_dimension_numbers<[1], [0], [0], [1], [0, 0, 1, 1], [], []>} : vector<14x1024xbf16>, vector<1024x32xbf16>, vector<14x32xf32> -> vector<14x32xf32>
    %cst_31 = arith.constant 0.000000e+00 : f32
    %157 = vector.broadcast %cst_31 : f32 to vector<14x32xf32>
    %158 = arith.maximumf %156, %157 : vector<14x32xf32>
    %159 = arith.truncf %158 : vector<14x32xf32> to vector<14x32xbf16>
    %160 = tpu.concatenate %27, %49, %71, %93, %115, %137, %159 in 1 : vector<14x32xbf16>, vector<14x32xbf16>, vector<14x32xbf16>, vector<14x32xbf16>, vector<14x32xbf16>, vector<14x32xbf16>, vector<14x32xbf16> -> vector<14x224xbf16>
    %cst_32 = arith.constant 0.000000e+00 : f32
    %161 = vector.broadcast %cst_32 : f32 to vector<2x256xf32>
    %162 = vector.extract_strided_slice %160 {offsets = [0, 0], sizes = [2, 224], strides = [1, 1]} : vector<14x224xbf16> to vector<2x224xbf16>
    %c0_33 = arith.constant 0 : index
    %c0_34 = arith.constant 0 : index
    %163 = vector.load %arg4[%c0_33, %c0_34] : memref<1568x256xbf16, #tpu.memory_space<vmem>>, vector<224x256xbf16>
    %cst_35 = arith.constant dense<0.000000e+00> : vector<2x256xf32>
    %164 = tpu.matmul %162, %163, %cst_35 {dimension_numbers = #tpu.dot_dimension_numbers<[1], [0], [0], [1], [0, 0, 1, 1], [], []>} : vector<2x224xbf16>, vector<224x256xbf16>, vector<2x256xf32> -> vector<2x256xf32>
    %165 = arith.addf %161, %164 : vector<2x256xf32>
    %166 = vector.extract_strided_slice %160 {offsets = [2, 0], sizes = [2, 224], strides = [1, 1]} : vector<14x224xbf16> to vector<2x224xbf16>
    %c224 = arith.constant 224 : index
    %c0_36 = arith.constant 0 : index
    %167 = vector.load %arg4[%c224, %c0_36] : memref<1568x256xbf16, #tpu.memory_space<vmem>>, vector<224x256xbf16>
    %cst_37 = arith.constant dense<0.000000e+00> : vector<2x256xf32>
    %168 = tpu.matmul %166, %167, %cst_37 {dimension_numbers = #tpu.dot_dimension_numbers<[1], [0], [0], [1], [0, 0, 1, 1], [], []>} : vector<2x224xbf16>, vector<224x256xbf16>, vector<2x256xf32> -> vector<2x256xf32>
    %169 = arith.addf %165, %168 : vector<2x256xf32>
    %170 = vector.extract_strided_slice %160 {offsets = [4, 0], sizes = [2, 224], strides = [1, 1]} : vector<14x224xbf16> to vector<2x224xbf16>
    %c448 = arith.constant 448 : index
    %c0_38 = arith.constant 0 : index
    %171 = vector.load %arg4[%c448, %c0_38] : memref<1568x256xbf16, #tpu.memory_space<vmem>>, vector<224x256xbf16>
    %cst_39 = arith.constant dense<0.000000e+00> : vector<2x256xf32>
    %172 = tpu.matmul %170, %171, %cst_39 {dimension_numbers = #tpu.dot_dimension_numbers<[1], [0], [0], [1], [0, 0, 1, 1], [], []>} : vector<2x224xbf16>, vector<224x256xbf16>, vector<2x256xf32> -> vector<2x256xf32>
    %173 = arith.addf %169, %172 : vector<2x256xf32>
    %174 = vector.extract_strided_slice %160 {offsets = [6, 0], sizes = [2, 224], strides = [1, 1]} : vector<14x224xbf16> to vector<2x224xbf16>
    %c672 = arith.constant 672 : index
    %c0_40 = arith.constant 0 : index
    %175 = vector.load %arg4[%c672, %c0_40] : memref<1568x256xbf16, #tpu.memory_space<vmem>>, vector<224x256xbf16>
    %cst_41 = arith.constant dense<0.000000e+00> : vector<2x256xf32>
    %176 = tpu.matmul %174, %175, %cst_41 {dimension_numbers = #tpu.dot_dimension_numbers<[1], [0], [0], [1], [0, 0, 1, 1], [], []>} : vector<2x224xbf16>, vector<224x256xbf16>, vector<2x256xf32> -> vector<2x256xf32>
    %177 = arith.addf %173, %176 : vector<2x256xf32>
    %178 = vector.extract_strided_slice %160 {offsets = [8, 0], sizes = [2, 224], strides = [1, 1]} : vector<14x224xbf16> to vector<2x224xbf16>
    %c896 = arith.constant 896 : index
    %c0_42 = arith.constant 0 : index
    %179 = vector.load %arg4[%c896, %c0_42] : memref<1568x256xbf16, #tpu.memory_space<vmem>>, vector<224x256xbf16>
    %cst_43 = arith.constant dense<0.000000e+00> : vector<2x256xf32>
    %180 = tpu.matmul %178, %179, %cst_43 {dimension_numbers = #tpu.dot_dimension_numbers<[1], [0], [0], [1], [0, 0, 1, 1], [], []>} : vector<2x224xbf16>, vector<224x256xbf16>, vector<2x256xf32> -> vector<2x256xf32>
    %181 = arith.addf %177, %180 : vector<2x256xf32>
    %182 = vector.extract_strided_slice %160 {offsets = [10, 0], sizes = [2, 224], strides = [1, 1]} : vector<14x224xbf16> to vector<2x224xbf16>
    %c1120 = arith.constant 1120 : index
    %c0_44 = arith.constant 0 : index
    %183 = vector.load %arg4[%c1120, %c0_44] : memref<1568x256xbf16, #tpu.memory_space<vmem>>, vector<224x256xbf16>
    %cst_45 = arith.constant dense<0.000000e+00> : vector<2x256xf32>
    %184 = tpu.matmul %182, %183, %cst_45 {dimension_numbers = #tpu.dot_dimension_numbers<[1], [0], [0], [1], [0, 0, 1, 1], [], []>} : vector<2x224xbf16>, vector<224x256xbf16>, vector<2x256xf32> -> vector<2x256xf32>
    %185 = arith.addf %181, %184 : vector<2x256xf32>
    %186 = vector.extract_strided_slice %160 {offsets = [12, 0], sizes = [2, 224], strides = [1, 1]} : vector<14x224xbf16> to vector<2x224xbf16>
    %c1344 = arith.constant 1344 : index
    %c0_46 = arith.constant 0 : index
    %187 = vector.load %arg4[%c1344, %c0_46] : memref<1568x256xbf16, #tpu.memory_space<vmem>>, vector<224x256xbf16>
    %cst_47 = arith.constant dense<0.000000e+00> : vector<2x256xf32>
    %188 = tpu.matmul %186, %187, %cst_47 {dimension_numbers = #tpu.dot_dimension_numbers<[1], [0], [0], [1], [0, 0, 1, 1], [], []>} : vector<2x224xbf16>, vector<224x256xbf16>, vector<2x256xf32> -> vector<2x256xf32>
    %189 = arith.addf %185, %188 : vector<2x256xf32>
    %cst_48 = arith.constant 0.000000e+00 : f32
    %190 = vector.broadcast %cst_48 : f32 to vector<2x256xf32>
    %191 = arith.maximumf %189, %190 : vector<2x256xf32>
    %c0_49 = arith.constant 0 : index
    %c0_50 = arith.constant 0 : index
    %192 = vector.load %arg5[%c0_49, %c0_50] : memref<256x128xf32, #tpu.memory_space<vmem>>, vector<256x128xf32>
    %cst_51 = arith.constant dense<0.000000e+00> : vector<2x128xf32>
    %193 = tpu.matmul %191, %192, %cst_51 {dimension_numbers = #tpu.dot_dimension_numbers<[1], [0], [0], [1], [0, 0, 1, 1], [], []>} : vector<2x256xf32>, vector<256x128xf32>, vector<2x128xf32> -> vector<2x128xf32>
    %194 = tpu.iota {dimensions = array<i32: 1>} : vector<1x128xi32>
    %c50_i32 = arith.constant 50 : i32
    %195 = vector.broadcast %c50_i32 : i32 to vector<1x128xi32>
    %196 = arith.cmpi sge, %194, %195 : vector<1x128xi32>
    %c100_i32 = arith.constant 100 : i32
    %197 = vector.broadcast %c100_i32 : i32 to vector<1x128xi32>
    %198 = arith.cmpi slt, %194, %197 : vector<1x128xi32>
    %199 = arith.andi %196, %198 : vector<1x128xi1>
    %c110_i32 = arith.constant 110 : i32
    %200 = vector.broadcast %c110_i32 : i32 to vector<1x128xi32>
    %201 = arith.cmpi sge, %194, %200 : vector<1x128xi32>
    %c120_i32 = arith.constant 120 : i32
    %202 = vector.broadcast %c120_i32 : i32 to vector<1x128xi32>
    %203 = arith.cmpi slt, %194, %202 : vector<1x128xi32>
    %204 = arith.andi %201, %203 : vector<1x128xi1>
    %205 = arith.ori %199, %204 : vector<1x128xi1>
    %cst_52 = arith.constant 0.000000e+00 : f32
    %206 = vector.shape_cast %205 : vector<1x128xi1> to vector<1x128xi1>
    %207 = vector.broadcast %206 : vector<1x128xi1> to vector<2x128xi1>
    %208 = vector.broadcast %cst_52 : f32 to vector<2x128xf32>
    %209 = arith.select %207, %193, %208 : vector<2x128xi1>, vector<2x128xf32>
    %210 = math.exp %209 : vector<2x128xf32>
    %cst_53 = arith.constant 9.99999971E-10 : f32
    %211 = vector.broadcast %cst_53 : f32 to vector<2x128xf32>
    %212 = arith.addf %210, %211 : vector<2x128xf32>
    %213 = math.sqrt %212 : vector<2x128xf32>
    %214 = vector.shape_cast %205 : vector<1x128xi1> to vector<1x128xi1>
    %215 = vector.broadcast %214 : vector<1x128xi1> to vector<2x128xi1>
    %216 = arith.select %215, %213, %193 : vector<2x128xi1>, vector<2x128xf32>
    %c0_54 = arith.constant 0 : index
    %c0_55 = arith.constant 0 : index
    %217 = vector.load %arg6[%c0_54, %c0_55] : memref<2x128xf32, #tpu.memory_space<vmem>>, vector<2x128xf32>
    tpu.vector_store %arg6[%c0_54, %c0_55], %216 {strides = array<i32>} : memref<2x128xf32, #tpu.memory_space<vmem>>, vector<2x128xf32>,
    return
  }
  func.func @transform_0(%arg0: i32) -> (i32, i32) {
    %c0_i32 = arith.constant 0 : i32
    %c0_i32_0 = arith.constant 0 : i32
    return %arg0, %c0_i32 : i32, i32
  }
  func.func @transform_1(%arg0: i32) -> (i32, i32) {
    %c0_i32 = arith.constant 0 : i32
    %c0_i32_0 = arith.constant 0 : i32
    %c0_i32_1 = arith.constant 0 : i32
    return %c0_i32, %c0_i32_0 : i32, i32
  }
  func.func @transform_2(%arg0: i32) -> (i32, i32) {
    %c0_i32 = arith.constant 0 : i32
    %c0_i32_0 = arith.constant 0 : i32
    %c0_i32_1 = arith.constant 0 : i32
    return %c0_i32, %c0_i32_0 : i32, i32
  }
  func.func @transform_3(%arg0: i32) -> (i32, i32) {
    %c0_i32 = arith.constant 0 : i32
    %c0_i32_0 = arith.constant 0 : i32
    %c0_i32_1 = arith.constant 0 : i32
    return %c0_i32, %c0_i32_0 : i32, i32
  }
  func.func @transform_4(%arg0: i32) -> (i32, i32) {
    %c0_i32 = arith.constant 0 : i32
    %c0_i32_0 = arith.constant 0 : i32
    %c0_i32_1 = arith.constant 0 : i32
    return %c0_i32, %c0_i32_0 : i32, i32
  }
  func.func @transform_5(%arg0: i32) -> (i32, i32) {
    %c0_i32 = arith.constant 0 : i32
    %c0_i32_0 = arith.constant 0 : i32
    return %arg0, %c0_i32 : i32, i32
  }
}

</mosaic_0001>

<llo_original>
// kernel: encoder_b_forward.1
$region0: #{encoder_b_forward.1}
  #allocation0 [shape = 'u32[]', space=smem, size = 0x4, offset = 0x4, fixed_abs, tag = 'smem constant byte address 0x4 - core index']
  #allocation1 [shape = 'u32[144,128]{1,0:T(1,128)}', space=vmem, size = 0x12000, scoped, tag = 'internal scratch']
  %s0 = inlined_call_operand.vmem [shape: bf16[32,256], index: 0, kind: input, shape index: {}]
  %s1 = inlined_call_operand.vmem [shape: bf16[256,1024], index: 1, kind: input, shape index: {}]
  %s2 = inlined_call_operand.vmem [shape: bf16[1024,32], index: 2, kind: input, shape index: {}]
  %s3 = inlined_call_operand.vmem [shape: bf16[1568,256], index: 3, kind: input, shape index: {}]
  %s4 = inlined_call_operand.vmem [shape: f32[256,128], index: 4, kind: input, shape index: {}]
  %s5 = inlined_call_operand.vmem [shape: f32[2,128], index: 5, kind: output, shape index: {}]
  %s6 = sld [smem:[#allocation0]]
  $region30: #{encoder_b_forward.1} parent=0
    _
  %s8 = ssub.s32 1, %s6
  %s9 = scalar_select 0, %s8, %s6
  // Predicated region
  $region2: #{encoder_b_forward.1} parent=0 // pred_check
    _
  $region3: #{encoder_b_forward.1} parent=0 // pred_check_branch
    %11 = sbr.rel (0) target = $region5
  $region4: #{encoder_b_forward.1} parent=0 // pred_region
    _
  $region5: #{encoder_b_forward.1} parent=0 // pred_fallthru
    _
  // Predicated region
  $region6: #{encoder_b_forward.1} parent=0 // pred_check
    _
  $region7: #{encoder_b_forward.1} parent=0 // pred_check_branch
    %13 = sbr.rel (0) target = $region9
  $region8: #{encoder_b_forward.1} parent=0 // pred_region
    _
  $region9: #{encoder_b_forward.1} parent=0 // pred_fallthru
    _
  // Predicated region
  $region10: #{encoder_b_forward.1} parent=0 // pred_check
    _
  $region11: #{encoder_b_forward.1} parent=0 // pred_check_branch
    %15 = sbr.rel (0) target = $region13
  $region12: #{encoder_b_forward.1} parent=0 // pred_region
    _
  $region13: #{encoder_b_forward.1} parent=0 // pred_fallthru
    _
  // Predicated region
  $region14: #{encoder_b_forward.1} parent=0 // pred_check
    _
  $region15: #{encoder_b_forward.1} parent=0 // pred_check_branch
    %17 = sbr.rel (0) target = $region17
  $region16: #{encoder_b_forward.1} parent=0 // pred_region
    _
  $region17: #{encoder_b_forward.1} parent=0 // pred_fallthru
    _
  // Predicated region
  $region18: #{encoder_b_forward.1} parent=0 // pred_check
    _
  $region19: #{encoder_b_forward.1} parent=0 // pred_check_branch
    %19 = sbr.rel (0) target = $region21
  $region20: #{encoder_b_forward.1} parent=0 // pred_region
    _
  $region21: #{encoder_b_forward.1} parent=0 // pred_fallthru
    _
  %v21 = vld [vmem:[%s0] sm:$0xff]
  %v22 = vld [vmem:[%s0 + $0x8] sm:$0xff]
  %v23 = vld [vmem:[%s0 + $0x10] sm:$0xff]
  %v24 = vld [vmem:[%s0 + $0x18] sm:$0xff]
  %v25 = vld [vmem:[%s1] sm:$0xff]
  %v26 = vld [vmem:[%s1 + $0x8] sm:$0xff]
  %v27 = vld [vmem:[%s1 + $0x10] sm:$0xff]
  %v28 = vld [vmem:[%s1 + $0x18] sm:$0xff]
  %v29 = vld [vmem:[%s1 + $0x20] sm:$0xff]
  %v30 = vld [vmem:[%s1 + $0x28] sm:$0xff]
  %v31 = vld [vmem:[%s1 + $0x30] sm:$0xff]
  %v32 = vld [vmem:[%s1 + $0x38] sm:$0xff]
  %v33 = vld [vmem:[%s1 + $0x40] sm:$0xff]
  %v34 = vld [vmem:[%s1 + $0x48] sm:$0xff]
  %v35 = vld [vmem:[%s1 + $0x50] sm:$0xff]
  %v36 = vld [vmem:[%s1 + $0x58] sm:$0xff]
  %v37 = vld [vmem:[%s1 + $0x60] sm:$0xff]
  %v38 = vld [vmem:[%s1 + $0x68] sm:$0xff]
  %v39 = vld [vmem:[%s1 + $0x70] sm:$0xff]
  %v40 = vld [vmem:[%s1 + $0x78] sm:$0xff]
  %v41 = vld [vmem:[%s1 + $0x80] sm:$0xff]
  %v42 = vld [vmem:[%s1 + $0x88] sm:$0xff]
  %v43 = vld [vmem:[%s1 + $0x90] sm:$0xff]
  %v44 = vld [vmem:[%s1 + $0x98] sm:$0xff]
  %v45 = vld [vmem:[%s1 + $0xa0] sm:$0xff]
  %v46 = vld [vmem:[%s1 + $0xa8] sm:$0xff]
  %v47 = vld [vmem:[%s1 + $0xb0] sm:$0xff]
  %v48 = vld [vmem:[%s1 + $0xb8] sm:$0xff]
  %v49 = vld [vmem:[%s1 + $0xc0] sm:$0xff]
  %v50 = vld [vmem:[%s1 + $0xc8] sm:$0xff]
  %v51 = vld [vmem:[%s1 + $0xd0] sm:$0xff]
  %v52 = vld [vmem:[%s1 + $0xd8] sm:$0xff]
  %v53 = vld [vmem:[%s1 + $0xe0] sm:$0xff]
  %v54 = vld [vmem:[%s1 + $0xe8] sm:$0xff]
  %v55 = vld [vmem:[%s1 + $0xf0] sm:$0xff]
  %v56 = vld [vmem:[%s1 + $0xf8] sm:$0xff]
  %v57 = vld [vmem:[%s1 + $0x100] sm:$0xff]
  %v58 = vld [vmem:[%s1 + $0x108] sm:$0xff]
  %v59 = vld [vmem:[%s1 + $0x110] sm:$0xff]
  %v60 = vld [vmem:[%s1 + $0x118] sm:$0xff]
  %v61 = vld [vmem:[%s1 + $0x120] sm:$0xff]
  %v62 = vld [vmem:[%s1 + $0x128] sm:$0xff]
  %v63 = vld [vmem:[%s1 + $0x130] sm:$0xff]
  %v64 = vld [vmem:[%s1 + $0x138] sm:$0xff]
  %v65 = vld [vmem:[%s1 + $0x140] sm:$0xff]
  %v66 = vld [vmem:[%s1 + $0x148] sm:$0xff]
  %v67 = vld [vmem:[%s1 + $0x150] sm:$0xff]
  %v68 = vld [vmem:[%s1 + $0x158] sm:$0xff]
  %v69 = vld [vmem:[%s1 + $0x160] sm:$0xff]
  %v70 = vld [vmem:[%s1 + $0x168] sm:$0xff]
  %v71 = vld [vmem:[%s1 + $0x170] sm:$0xff]
  %v72 = vld [vmem:[%s1 + $0x178] sm:$0xff]
  %v73 = vld [vmem:[%s1 + $0x180] sm:$0xff]
  %v74 = vld [vmem:[%s1 + $0x188] sm:$0xff]
  %v75 = vld [vmem:[%s1 + $0x190] sm:$0xff]
  %v76 = vld [vmem:[%s1 + $0x198] sm:$0xff]
  %v77 = vld [vmem:[%s1 + $0x1a0] sm:$0xff]
  %v78 = vld [vmem:[%s1 + $0x1a8] sm:$0xff]
  %v79 = vld [vmem:[%s1 + $0x1b0] sm:$0xff]
  %v80 = vld [vmem:[%s1 + $0x1b8] sm:$0xff]
  %v81 = vld [vmem:[%s1 + $0x1c0] sm:$0xff]
  %v82 = vld [vmem:[%s1 + $0x1c8] sm:$0xff]
  %v83 = vld [vmem:[%s1 + $0x1d0] sm:$0xff]
  %v84 = vld [vmem:[%s1 + $0x1d8] sm:$0xff]
  %v85 = vld [vmem:[%s1 + $0x1e0] sm:$0xff]
  %v86 = vld [vmem:[%s1 + $0x1e8] sm:$0xff]
  %v87 = vld [vmem:[%s1 + $0x1f0] sm:$0xff]
  %v88 = vld [vmem:[%s1 + $0x1f8] sm:$0xff]
  %v89 = vld [vmem:[%s1 + $0x200] sm:$0xff]
  %v90 = vld [vmem:[%s1 + $0x208] sm:$0xff]
  %v91 = vld [vmem:[%s1 + $0x210] sm:$0xff]
  %v92 = vld [vmem:[%s1 + $0x218] sm:$0xff]
  %v93 = vld [vmem:[%s1 + $0x220] sm:$0xff]
  %v94 = vld [vmem:[%s1 + $0x228] sm:$0xff]
  %v95 = vld [vmem:[%s1 + $0x230] sm:$0xff]
  %v96 = vld [vmem:[%s1 + $0x238] sm:$0xff]
  %v97 = vld [vmem:[%s1 + $0x240] sm:$0xff]
  %v98 = vld [vmem:[%s1 + $0x248] sm:$0xff]
  %v99 = vld [vmem:[%s1 + $0x250] sm:$0xff]
  %v100 = vld [vmem:[%s1 + $0x258] sm:$0xff]
  %v101 = vld [vmem:[%s1 + $0x260] sm:$0xff]
  %v102 = vld [vmem:[%s1 + $0x268] sm:$0xff]
  %v103 = vld [vmem:[%s1 + $0x270] sm:$0xff]
  %v104 = vld [vmem:[%s1 + $0x278] sm:$0xff]
  %v105 = vld [vmem:[%s1 + $0x280] sm:$0xff]
  %v106 = vld [vmem:[%s1 + $0x288] sm:$0xff]
  %v107 = vld [vmem:[%s1 + $0x290] sm:$0xff]
  %v108 = vld [vmem:[%s1 + $0x298] sm:$0xff]
  %v109 = vld [vmem:[%s1 + $0x2a0] sm:$0xff]
  %v110 = vld [vmem:[%s1 + $0x2a8] sm:$0xff]
  %v111 = vld [vmem:[%s1 + $0x2b0] sm:$0xff]
  %v112 = vld [vmem:[%s1 + $0x2b8] sm:$0xff]
  %v113 = vld [vmem:[%s1 + $0x2c0] sm:$0xff]
  %v114 = vld [vmem:[%s1 + $0x2c8] sm:$0xff]
  %v115 = vld [vmem:[%s1 + $0x2d0] sm:$0xff]
  %v116 = vld [vmem:[%s1 + $0x2d8] sm:$0xff]
  %v117 = vld [vmem:[%s1 + $0x2e0] sm:$0xff]
  %v118 = vld [vmem:[%s1 + $0x2e8] sm:$0xff]
  %v119 = vld [vmem:[%s1 + $0x2f0] sm:$0xff]
  %v120 = vld [vmem:[%s1 + $0x2f8] sm:$0xff]
  %v121 = vld [vmem:[%s1 + $0x300] sm:$0xff]
  %v122 = vld [vmem:[%s1 + $0x308] sm:$0xff]
  %v123 = vld [vmem:[%s1 + $0x310] sm:$0xff]
  %v124 = vld [vmem:[%s1 + $0x318] sm:$0xff]
  %v125 = vld [vmem:[%s1 + $0x320] sm:$0xff]
  %v126 = vld [vmem:[%s1 + $0x328] sm:$0xff]
  %v127 = vld [vmem:[%s1 + $0x330] sm:$0xff]
  %v128 = vld [vmem:[%s1 + $0x338] sm:$0xff]
  %v129 = vld [vmem:[%s1 + $0x340] sm:$0xff]
  %v130 = vld [vmem:[%s1 + $0x348] sm:$0xff]
  %v131 = vld [vmem:[%s1 + $0x350] sm:$0xff]
  %v132 = vld [vmem:[%s1 + $0x358] sm:$0xff]
  %v133 = vld [vmem:[%s1 + $0x360] sm:$0xff]
  %v134 = vld [vmem:[%s1 + $0x368] sm:$0xff]
  %v135 = vld [vmem:[%s1 + $0x370] sm:$0xff]
  %v136 = vld [vmem:[%s1 + $0x378] sm:$0xff]
  %v137 = vld [vmem:[%s1 + $0x380] sm:$0xff]
  %v138 = vld [vmem:[%s1 + $0x388] sm:$0xff]
  %v139 = vld [vmem:[%s1 + $0x390] sm:$0xff]
  %v140 = vld [vmem:[%s1 + $0x398] sm:$0xff]
  %v141 = vld [vmem:[%s1 + $0x3a0] sm:$0xff]
  %v142 = vld [vmem:[%s1 + $0x3a8] sm:$0xff]
  %v143 = vld [vmem:[%s1 + $0x3b0] sm:$0xff]
  %v144 = vld [vmem:[%s1 + $0x3b8] sm:$0xff]
  %v145 = vld [vmem:[%s1 + $0x3c0] sm:$0xff]
  %v146 = vld [vmem:[%s1 + $0x3c8] sm:$0xff]
  %v147 = vld [vmem:[%s1 + $0x3d0] sm:$0xff]
  %v148 = vld [vmem:[%s1 + $0x3d8] sm:$0xff]
  %v149 = vld [vmem:[%s1 + $0x3e0] sm:$0xff]
  %v150 = vld [vmem:[%s1 + $0x3e8] sm:$0xff]
  %v151 = vld [vmem:[%s1 + $0x3f0] sm:$0xff]
  %v152 = vld [vmem:[%s1 + $0x3f8] sm:$0xff]
  %v157 = vunpack.c.l.b16 %v21
  %v158 = vunpack.c.h.b16 %v21
  %v159 = vunpack.c.l.b16 %v22
  %v160 = vunpack.c.h.b16 %v22
  %v161 = vunpack.c.l.b16 %v23
  %v162 = vunpack.c.h.b16 %v23
  %v163 = vunpack.c.l.b16 %v24
  %v164 = vunpack.c.h.b16 %v24
  %v165 = vpack.c.b16 %v159, %v157
  %v166 = vpack.c.b16 %v160, %v158
  %v167 = vpack.c.b16 %v163, %v161
  %v168 = vpack.c.b16 %v164, %v162
  %v301 = vunpack.c.l.b16 %v25
  %v302 = vunpack.c.h.b16 %v25
  %v303 = vunpack.c.l.b16 %v26
  %v304 = vunpack.c.h.b16 %v26
  %v305 = vunpack.c.l.b16 %v27
  %v306 = vunpack.c.h.b16 %v27
  %v307 = vunpack.c.l.b16 %v28
  %v308 = vunpack.c.h.b16 %v28
  %v309 = vunpack.c.l.b16 %v29
  %v310 = vunpack.c.h.b16 %v29
  %v311 = vunpack.c.l.b16 %v30
  %v312 = vunpack.c.h.b16 %v30
  %v313 = vunpack.c.l.b16 %v31
  %v314 = vunpack.c.h.b16 %v31
  %v315 = vunpack.c.l.b16 %v32
  %v316 = vunpack.c.h.b16 %v32
  %v317 = vunpack.c.l.b16 %v33
  %v318 = vunpack.c.h.b16 %v33
  %v319 = vunpack.c.l.b16 %v34
  %v320 = vunpack.c.h.b16 %v34
  %v321 = vunpack.c.l.b16 %v35
  %v322 = vunpack.c.h.b16 %v35
  %v323 = vunpack.c.l.b16 %v36
  %v324 = vunpack.c.h.b16 %v36
  %v325 = vunpack.c.l.b16 %v37
  %v326 = vunpack.c.h.b16 %v37
  %v327 = vunpack.c.l.b16 %v38
  %v328 = vunpack.c.h.b16 %v38
  %v329 = vunpack.c.l.b16 %v39
  %v330 = vunpack.c.h.b16 %v39
  %v331 = vunpack.c.l.b16 %v40
  %v332 = vunpack.c.h.b16 %v40
  %v333 = vunpack.c.l.b16 %v41
  %v334 = vunpack.c.h.b16 %v41
  %v335 = vunpack.c.l.b16 %v42
  %v336 = vunpack.c.h.b16 %v42
  %v337 = vunpack.c.l.b16 %v43
  %v338 = vunpack.c.h.b16 %v43
  %v339 = vunpack.c.l.b16 %v44
  %v340 = vunpack.c.h.b16 %v44
  %v341 = vunpack.c.l.b16 %v45
  %v342 = vunpack.c.h.b16 %v45
  %v343 = vunpack.c.l.b16 %v46
  %v344 = vunpack.c.h.b16 %v46
  %v345 = vunpack.c.l.b16 %v47
  %v346 = vunpack.c.h.b16 %v47
  %v347 = vunpack.c.l.b16 %v48
  %v348 = vunpack.c.h.b16 %v48
  %v349 = vunpack.c.l.b16 %v49
  %v350 = vunpack.c.h.b16 %v49
  %v351 = vunpack.c.l.b16 %v50
  %v352 = vunpack.c.h.b16 %v50
  %v353 = vunpack.c.l.b16 %v51
  %v354 = vunpack.c.h.b16 %v51
  %v355 = vunpack.c.l.b16 %v52
  %v356 = vunpack.c.h.b16 %v52
  %v357 = vunpack.c.l.b16 %v53
  %v358 = vunpack.c.h.b16 %v53
  %v359 = vunpack.c.l.b16 %v54
  %v360 = vunpack.c.h.b16 %v54
  %v361 = vunpack.c.l.b16 %v55
  %v362 = vunpack.c.h.b16 %v55
  %v363 = vunpack.c.l.b16 %v56
  %v364 = vunpack.c.h.b16 %v56
  %v365 = vunpack.c.l.b16 %v57
  %v366 = vunpack.c.h.b16 %v57
  %v367 = vunpack.c.l.b16 %v58
  %v368 = vunpack.c.h.b16 %v58
  %v369 = vunpack.c.l.b16 %v59
  %v370 = vunpack.c.h.b16 %v59
  %v371 = vunpack.c.l.b16 %v60
  %v372 = vunpack.c.h.b16 %v60
  %v373 = vunpack.c.l.b16 %v61
  %v374 = vunpack.c.h.b16 %v61
  %v375 = vunpack.c.l.b16 %v62
  %v376 = vunpack.c.h.b16 %v62
  %v377 = vunpack.c.l.b16 %v63
  %v378 = vunpack.c.h.b16 %v63
  %v379 = vunpack.c.l.b16 %v64
  %v380 = vunpack.c.h.b16 %v64
  %v381 = vunpack.c.l.b16 %v65
  %v382 = vunpack.c.h.b16 %v65
  %v383 = vunpack.c.l.b16 %v66
  %v384 = vunpack.c.h.b16 %v66
  %v385 = vunpack.c.l.b16 %v67
  %v386 = vunpack.c.h.b16 %v67
  %v387 = vunpack.c.l.b16 %v68
  %v388 = vunpack.c.h.b16 %v68
  %v389 = vunpack.c.l.b16 %v69
  %v390 = vunpack.c.h.b16 %v69
  %v391 = vunpack.c.l.b16 %v70
  %v392 = vunpack.c.h.b16 %v70
  %v393 = vunpack.c.l.b16 %v71
  %v394 = vunpack.c.h.b16 %v71
  %v395 = vunpack.c.l.b16 %v72
  %v396 = vunpack.c.h.b16 %v72
  %v397 = vunpack.c.l.b16 %v73
  %v398 = vunpack.c.h.b16 %v73
  %v399 = vunpack.c.l.b16 %v74
  %v400 = vunpack.c.h.b16 %v74
  %v401 = vunpack.c.l.b16 %v75
  %v402 = vunpack.c.h.b16 %v75
  %v403 = vunpack.c.l.b16 %v76
  %v404 = vunpack.c.h.b16 %v76
  %v405 = vunpack.c.l.b16 %v77
  %v406 = vunpack.c.h.b16 %v77
  %v407 = vunpack.c.l.b16 %v78
  %v408 = vunpack.c.h.b16 %v78
  %v409 = vunpack.c.l.b16 %v79
  %v410 = vunpack.c.h.b16 %v79
  %v411 = vunpack.c.l.b16 %v80
  %v412 = vunpack.c.h.b16 %v80
  %v413 = vunpack.c.l.b16 %v81
  %v414 = vunpack.c.h.b16 %v81
  %v415 = vunpack.c.l.b16 %v82
  %v416 = vunpack.c.h.b16 %v82
  %v417 = vunpack.c.l.b16 %v83
  %v418 = vunpack.c.h.b16 %v83
  %v419 = vunpack.c.l.b16 %v84
  %v420 = vunpack.c.h.b16 %v84
  %v421 = vunpack.c.l.b16 %v85
  %v422 = vunpack.c.h.b16 %v85
  %v423 = vunpack.c.l.b16 %v86
  %v424 = vunpack.c.h.b16 %v86
  %v425 = vunpack.c.l.b16 %v87
  %v426 = vunpack.c.h.b16 %v87
  %v427 = vunpack.c.l.b16 %v88
  %v428 = vunpack.c.h.b16 %v88
  %v429 = vunpack.c.l.b16 %v89
  %v430 = vunpack.c.h.b16 %v89
  %v431 = vunpack.c.l.b16 %v90
  %v432 = vunpack.c.h.b16 %v90
  %v433 = vunpack.c.l.b16 %v91
  %v434 = vunpack.c.h.b16 %v91
  %v435 = vunpack.c.l.b16 %v92
  %v436 = vunpack.c.h.b16 %v92
  %v437 = vunpack.c.l.b16 %v93
  %v438 = vunpack.c.h.b16 %v93
  %v439 = vunpack.c.l.b16 %v94
  %v440 = vunpack.c.h.b16 %v94
  %v441 = vunpack.c.l.b16 %v95
  %v442 = vunpack.c.h.b16 %v95
  %v443 = vunpack.c.l.b16 %v96
  %v444 = vunpack.c.h.b16 %v96
  %v445 = vunpack.c.l.b16 %v97
  %v446 = vunpack.c.h.b16 %v97
  %v447 = vunpack.c.l.b16 %v98
  %v448 = vunpack.c.h.b16 %v98
  %v449 = vunpack.c.l.b16 %v99
  %v450 = vunpack.c.h.b16 %v99
  %v451 = vunpack.c.l.b16 %v100
  %v452 = vunpack.c.h.b16 %v100
  %v453 = vunpack.c.l.b16 %v101
  %v454 = vunpack.c.h.b16 %v101
  %v455 = vunpack.c.l.b16 %v102
  %v456 = vunpack.c.h.b16 %v102
  %v457 = vunpack.c.l.b16 %v103
  %v458 = vunpack.c.h.b16 %v103
  %v459 = vunpack.c.l.b16 %v104
  %v460 = vunpack.c.h.b16 %v104
  %v461 = vunpack.c.l.b16 %v105
  %v462 = vunpack.c.h.b16 %v105
  %v463 = vunpack.c.l.b16 %v106
  %v464 = vunpack.c.h.b16 %v106
  %v465 = vunpack.c.l.b16 %v107
  %v466 = vunpack.c.h.b16 %v107
  %v467 = vunpack.c.l.b16 %v108
  %v468 = vunpack.c.h.b16 %v108
  %v469 = vunpack.c.l.b16 %v109
  %v470 = vunpack.c.h.b16 %v109
  %v471 = vunpack.c.l.b16 %v110
  %v472 = vunpack.c.h.b16 %v110
  %v473 = vunpack.c.l.b16 %v111
  %v474 = vunpack.c.h.b16 %v111
  %v475 = vunpack.c.l.b16 %v112
  %v476 = vunpack.c.h.b16 %v112
  %v477 = vunpack.c.l.b16 %v113
  %v478 = vunpack.c.h.b16 %v113
  %v479 = vunpack.c.l.b16 %v114
  %v480 = vunpack.c.h.b16 %v114
  %v481 = vunpack.c.l.b16 %v115
  %v482 = vunpack.c.h.b16 %v115
  %v483 = vunpack.c.l.b16 %v116
  %v484 = vunpack.c.h.b16 %v116
  %v485 = vunpack.c.l.b16 %v117
  %v486 = vunpack.c.h.b16 %v117
  %v487 = vunpack.c.l.b16 %v118
  %v488 = vunpack.c.h.b16 %v118
  %v489 = vunpack.c.l.b16 %v119
  %v490 = vunpack.c.h.b16 %v119
  %v491 = vunpack.c.l.b16 %v120
  %v492 = vunpack.c.h.b16 %v120
  %v493 = vunpack.c.l.b16 %v121
  %v494 = vunpack.c.h.b16 %v121
  %v495 = vunpack.c.l.b16 %v122
  %v496 = vunpack.c.h.b16 %v122
  %v497 = vunpack.c.l.b16 %v123
  %v498 = vunpack.c.h.b16 %v123
  %v499 = vunpack.c.l.b16 %v124
  %v500 = vunpack.c.h.b16 %v124
  %v501 = vunpack.c.l.b16 %v125
  %v502 = vunpack.c.h.b16 %v125
  %v503 = vunpack.c.l.b16 %v126
  %v504 = vunpack.c.h.b16 %v126
  %v505 = vunpack.c.l.b16 %v127
  %v506 = vunpack.c.h.b16 %v127
  %v507 = vunpack.c.l.b16 %v128
  %v508 = vunpack.c.h.b16 %v128
  %v509 = vunpack.c.l.b16 %v129
  %v510 = vunpack.c.h.b16 %v129
  %v511 = vunpack.c.l.b16 %v130
  %v512 = vunpack.c.h.b16 %v130
  %v513 = vunpack.c.l.b16 %v131
  %v514 = vunpack.c.h.b16 %v131
  %v515 = vunpack.c.l.b16 %v132
  %v516 = vunpack.c.h.b16 %v132
  %v517 = vunpack.c.l.b16 %v133
  %v518 = vunpack.c.h.b16 %v133
  %v519 = vunpack.c.l.b16 %v134
  %v520 = vunpack.c.h.b16 %v134
  %v521 = vunpack.c.l.b16 %v135
  %v522 = vunpack.c.h.b16 %v135
  %v523 = vunpack.c.l.b16 %v136
  %v524 = vunpack.c.h.b16 %v136
  %v525 = vunpack.c.l.b16 %v137
  %v526 = vunpack.c.h.b16 %v137
  %v527 = vunpack.c.l.b16 %v138
  %v528 = vunpack.c.h.b16 %v138
  %v529 = vunpack.c.l.b16 %v139
  %v530 = vunpack.c.h.b16 %v139
  %v531 = vunpack.c.l.b16 %v140
  %v532 = vunpack.c.h.b16 %v140
  %v533 = vunpack.c.l.b16 %v141
  %v534 = vunpack.c.h.b16 %v141
  %v535 = vunpack.c.l.b16 %v142
  %v536 = vunpack.c.h.b16 %v142
  %v537 = vunpack.c.l.b16 %v143
  %v538 = vunpack.c.h.b16 %v143
  %v539 = vunpack.c.l.b16 %v144
  %v540 = vunpack.c.h.b16 %v144
  %v541 = vunpack.c.l.b16 %v145
  %v542 = vunpack.c.h.b16 %v145
  %v543 = vunpack.c.l.b16 %v146
  %v544 = vunpack.c.h.b16 %v146
  %v545 = vunpack.c.l.b16 %v147
  %v546 = vunpack.c.h.b16 %v147
  %v547 = vunpack.c.l.b16 %v148
  %v548 = vunpack.c.h.b16 %v148
  %v549 = vunpack.c.l.b16 %v149
  %v550 = vunpack.c.h.b16 %v149
  %v551 = vunpack.c.l.b16 %v150
  %v552 = vunpack.c.h.b16 %v150
  %v553 = vunpack.c.l.b16 %v151
  %v554 = vunpack.c.h.b16 %v151
  %v555 = vunpack.c.l.b16 %v152
  %v556 = vunpack.c.h.b16 %v152
  %v557 = vpack.c.b16 %v309, %v301
  %v558 = vpack.c.b16 %v310, %v302
  %v559 = vpack.c.b16 %v311, %v303
  %v560 = vpack.c.b16 %v312, %v304
  %v561 = vpack.c.b16 %v313, %v305
  %v562 = vpack.c.b16 %v314, %v306
  %v563 = vpack.c.b16 %v315, %v307
  %v564 = vpack.c.b16 %v316, %v308
  %v565 = vpack.c.b16 %v325, %v317
  %v566 = vpack.c.b16 %v326, %v318
  %v567 = vpack.c.b16 %v327, %v319
  %v568 = vpack.c.b16 %v328, %v320
  %v569 = vpack.c.b16 %v329, %v321
  %v570 = vpack.c.b16 %v330, %v322
  %v571 = vpack.c.b16 %v331, %v323
  %v572 = vpack.c.b16 %v332, %v324
  %v573 = vpack.c.b16 %v341, %v333
  %v574 = vpack.c.b16 %v342, %v334
  %v575 = vpack.c.b16 %v343, %v335
  %v576 = vpack.c.b16 %v344, %v336
  %v577 = vpack.c.b16 %v345, %v337
  %v578 = vpack.c.b16 %v346, %v338
  %v579 = vpack.c.b16 %v347, %v339
  %v580 = vpack.c.b16 %v348, %v340
  %v581 = vpack.c.b16 %v357, %v349
  %v582 = vpack.c.b16 %v358, %v350
  %v583 = vpack.c.b16 %v359, %v351
  %v584 = vpack.c.b16 %v360, %v352
  %v585 = vpack.c.b16 %v361, %v353
  %v586 = vpack.c.b16 %v362, %v354
  %v587 = vpack.c.b16 %v363, %v355
  %v588 = vpack.c.b16 %v364, %v356
  %v589 = vpack.c.b16 %v373, %v365
  %v590 = vpack.c.b16 %v374, %v366
  %v591 = vpack.c.b16 %v375, %v367
  %v592 = vpack.c.b16 %v376, %v368
  %v593 = vpack.c.b16 %v377, %v369
  %v594 = vpack.c.b16 %v378, %v370
  %v595 = vpack.c.b16 %v379, %v371
  %v596 = vpack.c.b16 %v380, %v372
  %v597 = vpack.c.b16 %v389, %v381
  %v598 = vpack.c.b16 %v390, %v382
  %v599 = vpack.c.b16 %v391, %v383
  %v600 = vpack.c.b16 %v392, %v384
  %v601 = vpack.c.b16 %v393, %v385
  %v602 = vpack.c.b16 %v394, %v386
  %v603 = vpack.c.b16 %v395, %v387
  %v604 = vpack.c.b16 %v396, %v388
  %v605 = vpack.c.b16 %v405, %v397
  %v606 = vpack.c.b16 %v406, %v398
  %v607 = vpack.c.b16 %v407, %v399
  %v608 = vpack.c.b16 %v408, %v400
  %v609 = vpack.c.b16 %v409, %v401
  %v610 = vpack.c.b16 %v410, %v402
  %v611 = vpack.c.b16 %v411, %v403
  %v612 = vpack.c.b16 %v412, %v404
  %v613 = vpack.c.b16 %v421, %v413
  %v614 = vpack.c.b16 %v422, %v414
  %v615 = vpack.c.b16 %v423, %v415
  %v616 = vpack.c.b16 %v424, %v416
  %v617 = vpack.c.b16 %v425, %v417
  %v618 = vpack.c.b16 %v426, %v418
  %v619 = vpack.c.b16 %v427, %v419
  %v620 = vpack.c.b16 %v428, %v420
  %v621 = vpack.c.b16 %v437, %v429
  %v622 = vpack.c.b16 %v438, %v430
  %v623 = vpack.c.b16 %v439, %v431
  %v624 = vpack.c.b16 %v440, %v432
  %v625 = vpack.c.b16 %v441, %v433
  %v626 = vpack.c.b16 %v442, %v434
  %v627 = vpack.c.b16 %v443, %v435
  %v628 = vpack.c.b16 %v444, %v436
  %v629 = vpack.c.b16 %v453, %v445
  %v630 = vpack.c.b16 %v454, %v446
  %v631 = vpack.c.b16 %v455, %v447
  %v632 = vpack.c.b16 %v456, %v448
  %v633 = vpack.c.b16 %v457, %v449
  %v634 = vpack.c.b16 %v458, %v450
  %v635 = vpack.c.b16 %v459, %v451
  %v636 = vpack.c.b16 %v460, %v452
  %v637 = vpack.c.b16 %v469, %v461
  %v638 = vpack.c.b16 %v470, %v462
  %v639 = vpack.c.b16 %v471, %v463
  %v640 = vpack.c.b16 %v472, %v464
  %v641 = vpack.c.b16 %v473, %v465
  %v642 = vpack.c.b16 %v474, %v466
  %v643 = vpack.c.b16 %v475, %v467
  %v644 = vpack.c.b16 %v476, %v468
  %v645 = vpack.c.b16 %v485, %v477
  %v646 = vpack.c.b16 %v486, %v478
  %v647 = vpack.c.b16 %v487, %v479
  %v648 = vpack.c.b16 %v488, %v480
  %v649 = vpack.c.b16 %v489, %v481
  %v650 = vpack.c.b16 %v490, %v482
  %v651 = vpack.c.b16 %v491, %v483
  %v652 = vpack.c.b16 %v492, %v484
  %v653 = vpack.c.b16 %v501, %v493
  %v654 = vpack.c.b16 %v502, %v494
  %v655 = vpack.c.b16 %v503, %v495
  %v656 = vpack.c.b16 %v504, %v496
  %v657 = vpack.c.b16 %v505, %v497
  %v658 = vpack.c.b16 %v506, %v498
  %v659 = vpack.c.b16 %v507, %v499
  %v660 = vpack.c.b16 %v508, %v500
  %v661 = vpack.c.b16 %v517, %v509
  %v662 = vpack.c.b16 %v518, %v510
  %v663 = vpack.c.b16 %v519, %v511
  %v664 = vpack.c.b16 %v520, %v512
  %v665 = vpack.c.b16 %v521, %v513
  %v666 = vpack.c.b16 %v522, %v514
  %v667 = vpack.c.b16 %v523, %v515
  %v668 = vpack.c.b16 %v524, %v516
  %v669 = vpack.c.b16 %v533, %v525
  %v670 = vpack.c.b16 %v534, %v526
  %v671 = vpack.c.b16 %v535, %v527
  %v672 = vpack.c.b16 %v536, %v528
  %v673 = vpack.c.b16 %v537, %v529
  %v674 = vpack.c.b16 %v538, %v530
  %v675 = vpack.c.b16 %v539, %v531
  %v676 = vpack.c.b16 %v540, %v532
  %v677 = vpack.c.b16 %v549, %v541
  %v678 = vpack.c.b16 %v550, %v542
  %v679 = vpack.c.b16 %v551, %v543
  %v680 = vpack.c.b16 %v552, %v544
  %v681 = vpack.c.b16 %v553, %v545
  %v682 = vpack.c.b16 %v554, %v546
  %v683 = vpack.c.b16 %v555, %v547
  %v684 = vpack.c.b16 %v556, %v548
  %813 = vmatprep.subr.bf16.mxu0 %v558
  %814 = vmatpush1.bf16.msra.mxu0 %v557
  %815 = vmatprep.subr.bf16.mxu0 %v566
  %816 = vmatpush1.bf16.msra.mxu0 %v565
  %817 = vmatprep.subr.bf16.mxu0 %v574
  %818 = vmatpush1.bf16.msra.mxu0 %v573
  %819 = vmatprep.subr.bf16.mxu0 %v582
  %820 = vmatpush1.bf16.msra.mxu0 %v581
  %821 = vmatprep.subr.bf16.mxu0 %v590
  %822 = vmatpush1.bf16.msra.mxu0 %v589
  %823 = vmatprep.subr.bf16.mxu0 %v598
  %824 = vmatpush1.bf16.msra.mxu0 %v597
  %825 = vmatprep.subr.bf16.mxu0 %v606
  %826 = vmatpush1.bf16.msra.mxu0 %v605
  %827 = vmatprep.subr.bf16.mxu0 %v614
  %828 = vmatpush1.bf16.msra.mxu0 %v613
  %829 = vmatprep.subr.bf16.mxu0 %v622
  %830 = vmatpush1.bf16.msra.mxu0 %v621
  %831 = vmatprep.subr.bf16.mxu0 %v630
  %832 = vmatpush1.bf16.msra.mxu0 %v629
  %833 = vmatprep.subr.bf16.mxu0 %v638
  %834 = vmatpush1.bf16.msra.mxu0 %v637
  %835 = vmatprep.subr.bf16.mxu0 %v646
  %836 = vmatpush1.bf16.msra.mxu0 %v645
  %837 = vmatprep.subr.bf16.mxu0 %v654
  %838 = vmatpush1.bf16.msra.mxu0 %v653
  %839 = vmatprep.subr.bf16.mxu0 %v662
  %840 = vmatpush1.bf16.msra.mxu0 %v661
  %841 = vmatprep.subr.bf16.mxu0 %v670
  %842 = vmatpush1.bf16.msra.mxu0 %v669
  %843 = vmatprep.subr.bf16.mxu0 %v678
  %844 = vmatpush1.bf16.msra.mxu0 %v677
  %845 = vmatprep.mubr.bf16.mxu0 %v166
  %846 = vmatmul.mubr.bf16.gmra.mrb[0].mxu0 %v165
  %v847 = vpop.f32.mrb[0].mxu0
  %v848 = vadd.f32 0.0, %v847
  %v849 = vpop.f32.mrb[0].mxu0
  %v850 = vadd.f32 0.0, %v849
  %v851 = vpop.f32.mrb[0].mxu0
  %v852 = vadd.f32 0.0, %v851
  %v853 = vpop.f32.mrb[0].mxu0
  %v854 = vadd.f32 0.0, %v853
  %855 = vmatprep.mubr.bf16.mxu0 %v168
  %856 = vmatmul.mubr.bf16.gmra.mrb[0].mxu0 %v167
  %v857 = vpop.f32.mrb[0].mxu0
  %v858 = vadd.f32 0.0, %v857
  %v859 = vpop.f32.mrb[0].mxu0
  %v860 = vadd.f32 0.0, %v859
  %v861 = vpop.f32.mrb[0].mxu0
  %v862 = vadd.f32 0.0, %v861
  %v863 = vpop.f32.mrb[0].mxu0
  %v864 = vadd.f32 0.0, %v863
  %865 = vdwg.mxu0
  %866 = vmatprep.subr.bf16.mxu0 %v560
  %867 = vmatpush1.bf16.msra.mxu0 %v559
  %868 = vmatprep.subr.bf16.mxu0 %v568
  %869 = vmatpush1.bf16.msra.mxu0 %v567
  %870 = vmatprep.subr.bf16.mxu0 %v576
  %871 = vmatpush1.bf16.msra.mxu0 %v575
  %872 = vmatprep.subr.bf16.mxu0 %v584
  %873 = vmatpush1.bf16.msra.mxu0 %v583
  %874 = vmatprep.subr.bf16.mxu0 %v592
  %875 = vmatpush1.bf16.msra.mxu0 %v591
  %876 = vmatprep.subr.bf16.mxu0 %v600
  %877 = vmatpush1.bf16.msra.mxu0 %v599
  %878 = vmatprep.subr.bf16.mxu0 %v608
  %879 = vmatpush1.bf16.msra.mxu0 %v607
  %880 = vmatprep.subr.bf16.mxu0 %v616
  %881 = vmatpush1.bf16.msra.mxu0 %v615
  %882 = vmatprep.subr.bf16.mxu0 %v624
  %883 = vmatpush1.bf16.msra.mxu0 %v623
  %884 = vmatprep.subr.bf16.mxu0 %v632
  %885 = vmatpush1.bf16.msra.mxu0 %v631
  %886 = vmatprep.subr.bf16.mxu0 %v640
  %887 = vmatpush1.bf16.msra.mxu0 %v639
  %888 = vmatprep.subr.bf16.mxu0 %v648
  %889 = vmatpush1.bf16.msra.mxu0 %v647
  %890 = vmatprep.subr.bf16.mxu0 %v656
  %891 = vmatpush1.bf16.msra.mxu0 %v655
  %892 = vmatprep.subr.bf16.mxu0 %v664
  %893 = vmatpush1.bf16.msra.mxu0 %v663
  %894 = vmatprep.subr.bf16.mxu0 %v672
  %895 = vmatpush1.bf16.msra.mxu0 %v671
  %896 = vmatprep.subr.bf16.mxu0 %v680
  %897 = vmatpush1.bf16.msra.mxu0 %v679
  %898 = vmatprep.mubr.bf16.mxu0 %v166
  %899 = vmatmul.mubr.bf16.gmra.mrb[0].mxu0 %v165
  %v900 = vpop.f32.mrb[0].mxu0
  %v901 = vadd.f32 0.0, %v900
  %v902 = vpop.f32.mrb[0].mxu0
  %v903 = vadd.f32 0.0, %v902
  %v904 = vpop.f32.mrb[0].mxu0
  %v905 = vadd.f32 0.0, %v904
  %v906 = vpop.f32.mrb[0].mxu0
  %v907 = vadd.f32 0.0, %v906
  %908 = vmatprep.mubr.bf16.mxu0 %v168
  %909 = vmatmul.mubr.bf16.gmra.mrb[0].mxu0 %v167
  %v910 = vpop.f32.mrb[0].mxu0
  %v911 = vadd.f32 0.0, %v910
  %v912 = vpop.f32.mrb[0].mxu0
  %v913 = vadd.f32 0.0, %v912
  %v914 = vpop.f32.mrb[0].mxu0
  %v915 = vadd.f32 0.0, %v914
  %v916 = vpop.f32.mrb[0].mxu0
  %v917 = vadd.f32 0.0, %v916
  %918 = vdwg.mxu0
  %919 = vmatprep.subr.bf16.mxu0 %v562
  %920 = vmatpush1.bf16.msra.mxu0 %v561
  %921 = vmatprep.subr.bf16.mxu0 %v570
  %922 = vmatpush1.bf16.msra.mxu0 %v569
  %923 = vmatprep.subr.bf16.mxu0 %v578
  %924 = vmatpush1.bf16.msra.mxu0 %v577
  %925 = vmatprep.subr.bf16.mxu0 %v586
  %926 = vmatpush1.bf16.msra.mxu0 %v585
  %927 = vmatprep.subr.bf16.mxu0 %v594
  %928 = vmatpush1.bf16.msra.mxu0 %v593
  %929 = vmatprep.subr.bf16.mxu0 %v602
  %930 = vmatpush1.bf16.msra.mxu0 %v601
  %931 = vmatprep.subr.bf16.mxu0 %v610
  %932 = vmatpush1.bf16.msra.mxu0 %v609
  %933 = vmatprep.subr.bf16.mxu0 %v618
  %934 = vmatpush1.bf16.msra.mxu0 %v617
  %935 = vmatprep.subr.bf16.mxu0 %v626
  %936 = vmatpush1.bf16.msra.mxu0 %v625
  %937 = vmatprep.subr.bf16.mxu0 %v634
  %938 = vmatpush1.bf16.msra.mxu0 %v633
  %939 = vmatprep.subr.bf16.mxu0 %v642
  %940 = vmatpush1.bf16.msra.mxu0 %v641
  %941 = vmatprep.subr.bf16.mxu0 %v650
  %942 = vmatpush1.bf16.msra.mxu0 %v649
  %943 = vmatprep.subr.bf16.mxu0 %v658
  %944 = vmatpush1.bf16.msra.mxu0 %v657
  %945 = vmatprep.subr.bf16.mxu0 %v666
  %946 = vmatpush1.bf16.msra.mxu0 %v665
  %947 = vmatprep.subr.bf16.mxu0 %v674
  %948 = vmatpush1.bf16.msra.mxu0 %v673
  %949 = vmatprep.subr.bf16.mxu0 %v682
  %950 = vmatpush1.bf16.msra.mxu0 %v681
  %951 = vmatprep.mubr.bf16.mxu0 %v166
  %952 = vmatmul.mubr.bf16.gmra.mrb[0].mxu0 %v165
  %v953 = vpop.f32.mrb[0].mxu0
  %v954 = vadd.f32 0.0, %v953
  %v955 = vpop.f32.mrb[0].mxu0
  %v956 = vadd.f32 0.0, %v955
  %v957 = vpop.f32.mrb[0].mxu0
  %v958 = vadd.f32 0.0, %v957
  %v959 = vpop.f32.mrb[0].mxu0
  %v960 = vadd.f32 0.0, %v959
  %961 = vmatprep.mubr.bf16.mxu0 %v168
  %962 = vmatmul.mubr.bf16.gmra.mrb[0].mxu0 %v167
  %v963 = vpop.f32.mrb[0].mxu0
  %v964 = vadd.f32 0.0, %v963
  %v965 = vpop.f32.mrb[0].mxu0
  %v966 = vadd.f32 0.0, %v965
  %v967 = vpop.f32.mrb[0].mxu0
  %v968 = vadd.f32 0.0, %v967
  %v969 = vpop.f32.mrb[0].mxu0
  %v970 = vadd.f32 0.0, %v969
  %971 = vdwg.mxu0
  %972 = vmatprep.subr.bf16.mxu0 %v564
  %973 = vmatpush1.bf16.msra.mxu0 %v563
  %974 = vmatprep.subr.bf16.mxu0 %v572
  %975 = vmatpush1.bf16.msra.mxu0 %v571
  %976 = vmatprep.subr.bf16.mxu0 %v580
  %977 = vmatpush1.bf16.msra.mxu0 %v579
  %978 = vmatprep.subr.bf16.mxu0 %v588
  %979 = vmatpush1.bf16.msra.mxu0 %v587
  %980 = vmatprep.subr.bf16.mxu0 %v596
  %981 = vmatpush1.bf16.msra.mxu0 %v595
  %982 = vmatprep.subr.bf16.mxu0 %v604
  %983 = vmatpush1.bf16.msra.mxu0 %v603
  %984 = vmatprep.subr.bf16.mxu0 %v612
  %985 = vmatpush1.bf16.msra.mxu0 %v611
  %986 = vmatprep.subr.bf16.mxu0 %v620
  %987 = vmatpush1.bf16.msra.mxu0 %v619
  %988 = vmatprep.subr.bf16.mxu0 %v628
  %989 = vmatpush1.bf16.msra.mxu0 %v627
  %990 = vmatprep.subr.bf16.mxu0 %v636
  %991 = vmatpush1.bf16.msra.mxu0 %v635
  %992 = vmatprep.subr.bf16.mxu0 %v644
  %993 = vmatpush1.bf16.msra.mxu0 %v643
  %994 = vmatprep.subr.bf16.mxu0 %v652
  %995 = vmatpush1.bf16.msra.mxu0 %v651
  %996 = vmatprep.subr.bf16.mxu0 %v660
  %997 = vmatpush1.bf16.msra.mxu0 %v659
  %998 = vmatprep.subr.bf16.mxu0 %v668
  %999 = vmatpush1.bf16.msra.mxu0 %v667
  %1000 = vmatprep.subr.bf16.mxu0 %v676
  %1001 = vmatpush1.bf16.msra.mxu0 %v675
  %1002 = vmatprep.subr.bf16.mxu0 %v684
  %1003 = vmatpush1.bf16.msra.mxu0 %v683
  %1004 = vmatprep.mubr.bf16.mxu0 %v166
  %1005 = vmatmul.mubr.bf16.gmra.mrb[0].mxu0 %v165
  %v1006 = vpop.f32.mrb[0].mxu0
  %v1007 = vadd.f32 0.0, %v1006
  %v1008 = vpop.f32.mrb[0].mxu0
  %v1009 = vadd.f32 0.0, %v1008
  %v1010 = vpop.f32.mrb[0].mxu0
  %v1011 = vadd.f32 0.0, %v1010
  %v1012 = vpop.f32.mrb[0].mxu0
  %v1013 = vadd.f32 0.0, %v1012
  %1014 = vmatprep.mubr.bf16.mxu0 %v168
  %1015 = vmatmul.mubr.bf16.gmra.mrb[0].mxu0 %v167
  %v1016 = vpop.f32.mrb[0].mxu0
  %v1017 = vadd.f32 0.0, %v1016
  %v1018 = vpop.f32.mrb[0].mxu0
  %v1019 = vadd.f32 0.0, %v1018
  %v1020 = vpop.f32.mrb[0].mxu0
  %v1021 = vadd.f32 0.0, %v1020
  %v1022 = vpop.f32.mrb[0].mxu0
  %v1023 = vadd.f32 0.0, %v1022
  %1024 = vdwg.mxu0
  %v1025 = vmax.f32 %v848, 0.0
  %v1026 = vmax.f32 %v850, 0.0
  %v1027 = vmax.f32 %v901, 0.0
  %v1028 = vmax.f32 %v903, 0.0
  %v1029 = vmax.f32 %v954, 0.0
  %v1030 = vmax.f32 %v956, 0.0
  %v1031 = vmax.f32 %v1007, 0.0
  %v1032 = vmax.f32 %v1009, 0.0
  %v1033 = vmax.f32 %v852, 0.0
  %v1034 = vmax.f32 %v854, 0.0
  %v1035 = vmax.f32 %v905, 0.0
  %v1036 = vmax.f32 %v907, 0.0
  %v1037 = vmax.f32 %v958, 0.0
  %v1038 = vmax.f32 %v960, 0.0
  %v1039 = vmax.f32 %v1011, 0.0
  %v1040 = vmax.f32 %v1013, 0.0
  %v1041 = vmax.f32 %v858, 0.0
  %v1042 = vmax.f32 %v860, 0.0
  %v1043 = vmax.f32 %v911, 0.0
  %v1044 = vmax.f32 %v913, 0.0
  %v1045 = vmax.f32 %v964, 0.0
  %v1046 = vmax.f32 %v966, 0.0
  %v1047 = vmax.f32 %v1017, 0.0
  %v1048 = vmax.f32 %v1019, 0.0
  %v1049 = vmax.f32 %v862, 0.0
  %v1050 = vmax.f32 %v864, 0.0
  %v1051 = vmax.f32 %v915, 0.0
  %v1052 = vmax.f32 %v917, 0.0
  %v1053 = vmax.f32 %v968, 0.0
  %v1054 = vmax.f32 %v970, 0.0
  %v1055 = vmax.f32 %v1021, 0.0
  %v1056 = vmax.f32 %v1023, 0.0
  %v1057 = vpack.c.bf16 %v1033, %v1025
  %v1058 = vpack.c.bf16 %v1034, %v1026
  %v1059 = vpack.c.bf16 %v1035, %v1027
  %v1060 = vpack.c.bf16 %v1036, %v1028
  %v1061 = vpack.c.bf16 %v1037, %v1029
  %v1062 = vpack.c.bf16 %v1038, %v1030
  %v1063 = vpack.c.bf16 %v1039, %v1031
  %v1064 = vpack.c.bf16 %v1040, %v1032
  %v1065 = vpack.c.bf16 %v1049, %v1041
  %v1066 = vpack.c.bf16 %v1050, %v1042
  %v1067 = vpack.c.bf16 %v1051, %v1043
  %v1068 = vpack.c.bf16 %v1052, %v1044
  %v1069 = vpack.c.bf16 %v1053, %v1045
  %v1070 = vpack.c.bf16 %v1054, %v1046
  %v1071 = vpack.c.bf16 %v1055, %v1047
  %v1072 = vpack.c.bf16 %v1056, %v1048
  %1074 = vrot.lane.b32.xlu0 %v1065, 64
  %v1075 = vpop.permute.xlu0 %1074
  %1077 = vrot.lane.b32.xlu0 %v1069, 64
  %v1078 = vpop.permute.xlu0 %1077
  %1080 = vrot.lane.b32.xlu0 %v1057, 64
  %v1081 = vpop.permute.xlu0 %1080
  %1083 = vrot.lane.b32.xlu0 %v1061, 64
  %v1084 = vpop.permute.xlu0 %1083
  %v1085 = vrot.slane %v1069, 1
  %v1086 = vrot.slane %v1065, 1
  %1087 = vrot.lane.b32.xlu0 %v1086, 64
  %v1088 = vpop.permute.xlu0 %1087
  %1089 = vrot.lane.b32.xlu0 %v1085, 64
  %v1090 = vpop.permute.xlu0 %1089
  %v1091 = vrot.slane %v1061, 1
  %v1092 = vrot.slane %v1057, 1
  %1093 = vrot.lane.b32.xlu0 %v1092, 64
  %v1094 = vpop.permute.xlu0 %1093
  %1095 = vrot.lane.b32.xlu0 %v1091, 64
  %v1096 = vpop.permute.xlu0 %1095
  %vm1097 = vcmask 523264
  %v1100 = vsel %vm1097, %v1069, %v1075
  %v1104 = vsel %vm1097, %v1078, %v1065
  %v1108 = vsel %vm1097, %v1061, %v1081
  %v1112 = vsel %vm1097, %v1084, %v1057
  %v1116 = vsel %vm1097, %v1085, %v1088
  %v1120 = vsel %vm1097, %v1090, %v1086
  %v1124 = vsel %vm1097, %v1091, %v1094
  %v1128 = vsel %vm1097, %v1096, %v1092
  %v1130 = vld [vmem:[%s2] sm:$0xf]
  %v1131 = vld [vmem:[%s2 + $0x4] sm:$0xf]
  %v1132 = vld [vmem:[%s2 + $0x8] sm:$0xf]
  %v1133 = vld [vmem:[%s2 + $0xc] sm:$0xf]
  %v1134 = vld [vmem:[%s2 + $0x10] sm:$0xf]
  %v1135 = vld [vmem:[%s2 + $0x14] sm:$0xf]
  %v1136 = vld [vmem:[%s2 + $0x18] sm:$0xf]
  %v1137 = vld [vmem:[%s2 + $0x1c] sm:$0xf]
  %v1138 = vld [vmem:[%s2 + $0x20] sm:$0xf]
  %v1139 = vld [vmem:[%s2 + $0x24] sm:$0xf]
  %v1140 = vld [vmem:[%s2 + $0x28] sm:$0xf]
  %v1141 = vld [vmem:[%s2 + $0x2c] sm:$0xf]
  %v1142 = vld [vmem:[%s2 + $0x30] sm:$0xf]
  %v1143 = vld [vmem:[%s2 + $0x34] sm:$0xf]
  %v1144 = vld [vmem:[%s2 + $0x38] sm:$0xf]
  %v1145 = vld [vmem:[%s2 + $0x3c] sm:$0xf]
  %v1146 = vld [vmem:[%s2 + $0x40] sm:$0xf]
  %v1147 = vld [vmem:[%s2 + $0x44] sm:$0xf]
  %v1148 = vld [vmem:[%s2 + $0x48] sm:$0xf]
  %v1149 = vld [vmem:[%s2 + $0x4c] sm:$0xf]
  %v1150 = vld [vmem:[%s2 + $0x50] sm:$0xf]
  %v1151 = vld [vmem:[%s2 + $0x54] sm:$0xf]
  %v1152 = vld [vmem:[%s2 + $0x58] sm:$0xf]
  %v1153 = vld [vmem:[%s2 + $0x5c] sm:$0xf]
  %v1154 = vld [vmem:[%s2 + $0x60] sm:$0xf]
  %v1155 = vld [vmem:[%s2 + $0x64] sm:$0xf]
  %v1156 = vld [vmem:[%s2 + $0x68] sm:$0xf]
  %v1157 = vld [vmem:[%s2 + $0x6c] sm:$0xf]
  %v1158 = vld [vmem:[%s2 + $0x70] sm:$0xf]
  %v1159 = vld [vmem:[%s2 + $0x74] sm:$0xf]
  %v1160 = vld [vmem:[%s2 + $0x78] sm:$0xf]
  %v1161 = vld [vmem:[%s2 + $0x7c] sm:$0xf]
  %v1162 = vld [vmem:[%s2 + $0x80] sm:$0xf]
  %v1163 = vld [vmem:[%s2 + $0x84] sm:$0xf]
  %v1164 = vld [vmem:[%s2 + $0x88] sm:$0xf]
  %v1165 = vld [vmem:[%s2 + $0x8c] sm:$0xf]
  %v1166 = vld [vmem:[%s2 + $0x90] sm:$0xf]
  %v1167 = vld [vmem:[%s2 + $0x94] sm:$0xf]
  %v1168 = vld [vmem:[%s2 + $0x98] sm:$0xf]
  %v1169 = vld [vmem:[%s2 + $0x9c] sm:$0xf]
  %v1170 = vld [vmem:[%s2 + $0xa0] sm:$0xf]
  %v1171 = vld [vmem:[%s2 + $0xa4] sm:$0xf]
  %v1172 = vld [vmem:[%s2 + $0xa8] sm:$0xf]
  %v1173 = vld [vmem:[%s2 + $0xac] sm:$0xf]
  %v1174 = vld [vmem:[%s2 + $0xb0] sm:$0xf]
  %v1175 = vld [vmem:[%s2 + $0xb4] sm:$0xf]
  %v1176 = vld [vmem:[%s2 + $0xb8] sm:$0xf]
  %v1177 = vld [vmem:[%s2 + $0xbc] sm:$0xf]
  %v1178 = vld [vmem:[%s2 + $0xc0] sm:$0xf]
  %v1179 = vld [vmem:[%s2 + $0xc4] sm:$0xf]
  %v1180 = vld [vmem:[%s2 + $0xc8] sm:$0xf]
  %v1181 = vld [vmem:[%s2 + $0xcc] sm:$0xf]
  %v1182 = vld [vmem:[%s2 + $0xd0] sm:$0xf]
  %v1183 = vld [vmem:[%s2 + $0xd4] sm:$0xf]
  %v1184 = vld [vmem:[%s2 + $0xd8] sm:$0xf]
  %v1185 = vld [vmem:[%s2 + $0xdc] sm:$0xf]
  %v1186 = vld [vmem:[%s2 + $0xe0] sm:$0xf]
  %v1187 = vld [vmem:[%s2 + $0xe4] sm:$0xf]
  %v1188 = vld [vmem:[%s2 + $0xe8] sm:$0xf]
  %v1189 = vld [vmem:[%s2 + $0xec] sm:$0xf]
  %v1190 = vld [vmem:[%s2 + $0xf0] sm:$0xf]
  %v1191 = vld [vmem:[%s2 + $0xf4] sm:$0xf]
  %v1192 = vld [vmem:[%s2 + $0xf8] sm:$0xf]
  %v1193 = vld [vmem:[%s2 + $0xfc] sm:$0xf]
  %v1194 = vld [vmem:[%s2 + $0x100] sm:$0xf]
  %v1195 = vld [vmem:[%s2 + $0x104] sm:$0xf]
  %v1196 = vld [vmem:[%s2 + $0x108] sm:$0xf]
  %v1197 = vld [vmem:[%s2 + $0x10c] sm:$0xf]
  %v1198 = vld [vmem:[%s2 + $0x110] sm:$0xf]
  %v1199 = vld [vmem:[%s2 + $0x114] sm:$0xf]
  %v1200 = vld [vmem:[%s2 + $0x118] sm:$0xf]
  %v1201 = vld [vmem:[%s2 + $0x11c] sm:$0xf]
  %v1202 = vld [vmem:[%s2 + $0x120] sm:$0xf]
  %v1203 = vld [vmem:[%s2 + $0x124] sm:$0xf]
  %v1204 = vld [vmem:[%s2 + $0x128] sm:$0xf]
  %v1205 = vld [vmem:[%s2 + $0x12c] sm:$0xf]
  %v1206 = vld [vmem:[%s2 + $0x130] sm:$0xf]
  %v1207 = vld [vmem:[%s2 + $0x134] sm:$0xf]
  %v1208 = vld [vmem:[%s2 + $0x138] sm:$0xf]
  %v1209 = vld [vmem:[%s2 + $0x13c] sm:$0xf]
  %v1210 = vld [vmem:[%s2 + $0x140] sm:$0xf]
  %v1211 = vld [vmem:[%s2 + $0x144] sm:$0xf]
  %v1212 = vld [vmem:[%s2 + $0x148] sm:$0xf]
  %v1213 = vld [vmem:[%s2 + $0x14c] sm:$0xf]
  %v1214 = vld [vmem:[%s2 + $0x150] sm:$0xf]
  %v1215 = vld [vmem:[%s2 + $0x154] sm:$0xf]
  %v1216 = vld [vmem:[%s2 + $0x158] sm:$0xf]
  %v1217 = vld [vmem:[%s2 + $0x15c] sm:$0xf]
  %v1218 = vld [vmem:[%s2 + $0x160] sm:$0xf]
  %v1219 = vld [vmem:[%s2 + $0x164] sm:$0xf]
  %v1220 = vld [vmem:[%s2 + $0x168] sm:$0xf]
  %v1221 = vld [vmem:[%s2 + $0x16c] sm:$0xf]
  %v1222 = vld [vmem:[%s2 + $0x170] sm:$0xf]
  %v1223 = vld [vmem:[%s2 + $0x174] sm:$0xf]
  %v1224 = vld [vmem:[%s2 + $0x178] sm:$0xf]
  %v1225 = vld [vmem:[%s2 + $0x17c] sm:$0xf]
  %v1226 = vld [vmem:[%s2 + $0x180] sm:$0xf]
  %v1227 = vld [vmem:[%s2 + $0x184] sm:$0xf]
  %v1228 = vld [vmem:[%s2 + $0x188] sm:$0xf]
  %v1229 = vld [vmem:[%s2 + $0x18c] sm:$0xf]
  %v1230 = vld [vmem:[%s2 + $0x190] sm:$0xf]
  %v1231 = vld [vmem:[%s2 + $0x194] sm:$0xf]
  %v1232 = vld [vmem:[%s2 + $0x198] sm:$0xf]
  %v1233 = vld [vmem:[%s2 + $0x19c] sm:$0xf]
  %v1234 = vld [vmem:[%s2 + $0x1a0] sm:$0xf]
  %v1235 = vld [vmem:[%s2 + $0x1a4] sm:$0xf]
  %v1236 = vld [vmem:[%s2 + $0x1a8] sm:$0xf]
  %v1237 = vld [vmem:[%s2 + $0x1ac] sm:$0xf]
  %v1238 = vld [vmem:[%s2 + $0x1b0] sm:$0xf]
  %v1239 = vld [vmem:[%s2 + $0x1b4] sm:$0xf]
  %v1240 = vld [vmem:[%s2 + $0x1b8] sm:$0xf]
  %v1241 = vld [vmem:[%s2 + $0x1bc] sm:$0xf]
  %v1242 = vld [vmem:[%s2 + $0x1c0] sm:$0xf]
  %v1243 = vld [vmem:[%s2 + $0x1c4] sm:$0xf]
  %v1244 = vld [vmem:[%s2 + $0x1c8] sm:$0xf]
  %v1245 = vld [vmem:[%s2 + $0x1cc] sm:$0xf]
  %v1246 = vld [vmem:[%s2 + $0x1d0] sm:$0xf]
  %v1247 = vld [vmem:[%s2 + $0x1d4] sm:$0xf]
  %v1248 = vld [vmem:[%s2 + $0x1d8] sm:$0xf]
  %v1249 = vld [vmem:[%s2 + $0x1dc] sm:$0xf]
  %v1250 = vld [vmem:[%s2 + $0x1e0] sm:$0xf]
  %v1251 = vld [vmem:[%s2 + $0x1e4] sm:$0xf]
  %v1252 = vld [vmem:[%s2 + $0x1e8] sm:$0xf]
  %v1253 = vld [vmem:[%s2 + $0x1ec] sm:$0xf]
  %v1254 = vld [vmem:[%s2 + $0x1f0] sm:$0xf]
  %v1255 = vld [vmem:[%s2 + $0x1f4] sm:$0xf]
  %v1256 = vld [vmem:[%s2 + $0x1f8] sm:$0xf]
  %v1257 = vld [vmem:[%s2 + $0x1fc] sm:$0xf]
  %v1386 = vunpack.c.l.b16 %v1130
  %v1387 = vunpack.c.l.b16 %v1131
  %v1388 = vunpack.c.l.b16 %v1132
  %v1389 = vunpack.c.l.b16 %v1133
  %v1390 = vunpack.c.l.b16 %v1134
  %v1391 = vunpack.c.l.b16 %v1135
  %v1392 = vunpack.c.l.b16 %v1136
  %v1393 = vunpack.c.l.b16 %v1137
  %v1394 = vunpack.c.l.b16 %v1138
  %v1395 = vunpack.c.l.b16 %v1139
  %v1396 = vunpack.c.l.b16 %v1140
  %v1397 = vunpack.c.l.b16 %v1141
  %v1398 = vunpack.c.l.b16 %v1142
  %v1399 = vunpack.c.l.b16 %v1143
  %v1400 = vunpack.c.l.b16 %v1144
  %v1401 = vunpack.c.l.b16 %v1145
  %v1402 = vunpack.c.l.b16 %v1146
  %v1403 = vunpack.c.l.b16 %v1147
  %v1404 = vunpack.c.l.b16 %v1148
  %v1405 = vunpack.c.l.b16 %v1149
  %v1406 = vunpack.c.l.b16 %v1150
  %v1407 = vunpack.c.l.b16 %v1151
  %v1408 = vunpack.c.l.b16 %v1152
  %v1409 = vunpack.c.l.b16 %v1153
  %v1410 = vunpack.c.l.b16 %v1154
  %v1411 = vunpack.c.l.b16 %v1155
  %v1412 = vunpack.c.l.b16 %v1156
  %v1413 = vunpack.c.l.b16 %v1157
  %v1414 = vunpack.c.l.b16 %v1158
  %v1415 = vunpack.c.l.b16 %v1159
  %v1416 = vunpack.c.l.b16 %v1160
  %v1417 = vunpack.c.l.b16 %v1161
  %v1418 = vunpack.c.l.b16 %v1162
  %v1419 = vunpack.c.l.b16 %v1163
  %v1420 = vunpack.c.l.b16 %v1164
  %v1421 = vunpack.c.l.b16 %v1165
  %v1422 = vunpack.c.l.b16 %v1166
  %v1423 = vunpack.c.l.b16 %v1167
  %v1424 = vunpack.c.l.b16 %v1168
  %v1425 = vunpack.c.l.b16 %v1169
  %v1426 = vunpack.c.l.b16 %v1170
  %v1427 = vunpack.c.l.b16 %v1171
  %v1428 = vunpack.c.l.b16 %v1172
  %v1429 = vunpack.c.l.b16 %v1173
  %v1430 = vunpack.c.l.b16 %v1174
  %v1431 = vunpack.c.l.b16 %v1175
  %v1432 = vunpack.c.l.b16 %v1176
  %v1433 = vunpack.c.l.b16 %v1177
  %v1434 = vunpack.c.l.b16 %v1178
  %v1435 = vunpack.c.l.b16 %v1179
  %v1436 = vunpack.c.l.b16 %v1180
  %v1437 = vunpack.c.l.b16 %v1181
  %v1438 = vunpack.c.l.b16 %v1182
  %v1439 = vunpack.c.l.b16 %v1183
  %v1440 = vunpack.c.l.b16 %v1184
  %v1441 = vunpack.c.l.b16 %v1185
  %v1442 = vunpack.c.l.b16 %v1186
  %v1443 = vunpack.c.l.b16 %v1187
  %v1444 = vunpack.c.l.b16 %v1188
  %v1445 = vunpack.c.l.b16 %v1189
  %v1446 = vunpack.c.l.b16 %v1190
  %v1447 = vunpack.c.l.b16 %v1191
  %v1448 = vunpack.c.l.b16 %v1192
  %v1449 = vunpack.c.l.b16 %v1193
  %v1450 = vunpack.c.l.b16 %v1194
  %v1451 = vunpack.c.l.b16 %v1195
  %v1452 = vunpack.c.l.b16 %v1196
  %v1453 = vunpack.c.l.b16 %v1197
  %v1454 = vunpack.c.l.b16 %v1198
  %v1455 = vunpack.c.l.b16 %v1199
  %v1456 = vunpack.c.l.b16 %v1200
  %v1457 = vunpack.c.l.b16 %v1201
  %v1458 = vunpack.c.l.b16 %v1202
  %v1459 = vunpack.c.l.b16 %v1203
  %v1460 = vunpack.c.l.b16 %v1204
  %v1461 = vunpack.c.l.b16 %v1205
  %v1462 = vunpack.c.l.b16 %v1206
  %v1463 = vunpack.c.l.b16 %v1207
  %v1464 = vunpack.c.l.b16 %v1208
  %v1465 = vunpack.c.l.b16 %v1209
  %v1466 = vunpack.c.l.b16 %v1210
  %v1467 = vunpack.c.l.b16 %v1211
  %v1468 = vunpack.c.l.b16 %v1212
  %v1469 = vunpack.c.l.b16 %v1213
  %v1470 = vunpack.c.l.b16 %v1214
  %v1471 = vunpack.c.l.b16 %v1215
  %v1472 = vunpack.c.l.b16 %v1216
  %v1473 = vunpack.c.l.b16 %v1217
  %v1474 = vunpack.c.l.b16 %v1218
  %v1475 = vunpack.c.l.b16 %v1219
  %v1476 = vunpack.c.l.b16 %v1220
  %v1477 = vunpack.c.l.b16 %v1221
  %v1478 = vunpack.c.l.b16 %v1222
  %v1479 = vunpack.c.l.b16 %v1223
  %v1480 = vunpack.c.l.b16 %v1224
  %v1481 = vunpack.c.l.b16 %v1225
  %v1482 = vunpack.c.l.b16 %v1226
  %v1483 = vunpack.c.l.b16 %v1227
  %v1484 = vunpack.c.l.b16 %v1228
  %v1485 = vunpack.c.l.b16 %v1229
  %v1486 = vunpack.c.l.b16 %v1230
  %v1487 = vunpack.c.l.b16 %v1231
  %v1488 = vunpack.c.l.b16 %v1232
  %v1489 = vunpack.c.l.b16 %v1233
  %v1490 = vunpack.c.l.b16 %v1234
  %v1491 = vunpack.c.l.b16 %v1235
  %v1492 = vunpack.c.l.b16 %v1236
  %v1493 = vunpack.c.l.b16 %v1237
  %v1494 = vunpack.c.l.b16 %v1238
  %v1495 = vunpack.c.l.b16 %v1239
  %v1496 = vunpack.c.l.b16 %v1240
  %v1497 = vunpack.c.l.b16 %v1241
  %v1498 = vunpack.c.l.b16 %v1242
  %v1499 = vunpack.c.l.b16 %v1243
  %v1500 = vunpack.c.l.b16 %v1244
  %v1501 = vunpack.c.l.b16 %v1245
  %v1502 = vunpack.c.l.b16 %v1246
  %v1503 = vunpack.c.l.b16 %v1247
  %v1504 = vunpack.c.l.b16 %v1248
  %v1505 = vunpack.c.l.b16 %v1249
  %v1506 = vunpack.c.l.b16 %v1250
  %v1507 = vunpack.c.l.b16 %v1251
  %v1508 = vunpack.c.l.b16 %v1252
  %v1509 = vunpack.c.l.b16 %v1253
  %v1510 = vunpack.c.l.b16 %v1254
  %v1511 = vunpack.c.l.b16 %v1255
  %v1512 = vunpack.c.l.b16 %v1256
  %v1513 = vunpack.c.l.b16 %v1257
  %v1514 = vpack.c.b16 %v1387, %v1386
  %v1515 = vpack.c.b16 %v1389, %v1388
  %v1516 = vpack.c.b16 %v1391, %v1390
  %v1517 = vpack.c.b16 %v1393, %v1392
  %v1518 = vpack.c.b16 %v1395, %v1394
  %v1519 = vpack.c.b16 %v1397, %v1396
  %v1520 = vpack.c.b16 %v1399, %v1398
  %v1521 = vpack.c.b16 %v1401, %v1400
  %v1522 = vpack.c.b16 %v1403, %v1402
  %v1523 = vpack.c.b16 %v1405, %v1404
  %v1524 = vpack.c.b16 %v1407, %v1406
  %v1525 = vpack.c.b16 %v1409, %v1408
  %v1526 = vpack.c.b16 %v1411, %v1410
  %v1527 = vpack.c.b16 %v1413, %v1412
  %v1528 = vpack.c.b16 %v1415, %v1414
  %v1529 = vpack.c.b16 %v1417, %v1416
  %v1530 = vpack.c.b16 %v1419, %v1418
  %v1531 = vpack.c.b16 %v1421, %v1420
  %v1532 = vpack.c.b16 %v1423, %v1422
  %v1533 = vpack.c.b16 %v1425, %v1424
  %v1534 = vpack.c.b16 %v1427, %v1426
  %v1535 = vpack.c.b16 %v1429, %v1428
  %v1536 = vpack.c.b16 %v1431, %v1430
  %v1537 = vpack.c.b16 %v1433, %v1432
  %v1538 = vpack.c.b16 %v1435, %v1434
  %v1539 = vpack.c.b16 %v1437, %v1436
  %v1540 = vpack.c.b16 %v1439, %v1438
  %v1541 = vpack.c.b16 %v1441, %v1440
  %v1542 = vpack.c.b16 %v1443, %v1442
  %v1543 = vpack.c.b16 %v1445, %v1444
  %v1544 = vpack.c.b16 %v1447, %v1446
  %v1545 = vpack.c.b16 %v1449, %v1448
  %v1546 = vpack.c.b16 %v1451, %v1450
  %v1547 = vpack.c.b16 %v1453, %v1452
  %v1548 = vpack.c.b16 %v1455, %v1454
  %v1549 = vpack.c.b16 %v1457, %v1456
  %v1550 = vpack.c.b16 %v1459, %v1458
  %v1551 = vpack.c.b16 %v1461, %v1460
  %v1552 = vpack.c.b16 %v1463, %v1462
  %v1553 = vpack.c.b16 %v1465, %v1464
  %v1554 = vpack.c.b16 %v1467, %v1466
  %v1555 = vpack.c.b16 %v1469, %v1468
  %v1556 = vpack.c.b16 %v1471, %v1470
  %v1557 = vpack.c.b16 %v1473, %v1472
  %v1558 = vpack.c.b16 %v1475, %v1474
  %v1559 = vpack.c.b16 %v1477, %v1476
  %v1560 = vpack.c.b16 %v1479, %v1478
  %v1561 = vpack.c.b16 %v1481, %v1480
  %v1562 = vpack.c.b16 %v1483, %v1482
  %v1563 = vpack.c.b16 %v1485, %v1484
  %v1564 = vpack.c.b16 %v1487, %v1486
  %v1565 = vpack.c.b16 %v1489, %v1488
  %v1566 = vpack.c.b16 %v1491, %v1490
  %v1567 = vpack.c.b16 %v1493, %v1492
  %v1568 = vpack.c.b16 %v1495, %v1494
  %v1569 = vpack.c.b16 %v1497, %v1496
  %v1570 = vpack.c.b16 %v1499, %v1498
  %v1571 = vpack.c.b16 %v1501, %v1500
  %v1572 = vpack.c.b16 %v1503, %v1502
  %v1573 = vpack.c.b16 %v1505, %v1504
  %v1574 = vpack.c.b16 %v1507, %v1506
  %v1575 = vpack.c.b16 %v1509, %v1508
  %v1576 = vpack.c.b16 %v1511, %v1510
  %v1577 = vpack.c.b16 %v1513, %v1512
  %1642 = vmatprep.subr.bf16.mxu0 0
  %1643 = vmatpush1.bf16.msra.mxu0 %v1514
  %1644 = vmatprep.subr.bf16.mxu0 0
  %1645 = vmatpush1.bf16.msra.mxu0 %v1515
  %1646 = vmatprep.subr.bf16.mxu0 0
  %1647 = vmatpush1.bf16.msra.mxu0 %v1516
  %1648 = vmatprep.subr.bf16.mxu0 0
  %1649 = vmatpush1.bf16.msra.mxu0 %v1517
  %1650 = vmatprep.subr.bf16.mxu0 0
  %1651 = vmatpush1.bf16.msra.mxu0 %v1518
  %1652 = vmatprep.subr.bf16.mxu0 0
  %1653 = vmatpush1.bf16.msra.mxu0 %v1519
  %1654 = vmatprep.subr.bf16.mxu0 0
  %1655 = vmatpush1.bf16.msra.mxu0 %v1520
  %1656 = vmatprep.subr.bf16.mxu0 0
  %1657 = vmatpush1.bf16.msra.mxu0 %v1521
  %1658 = vmatprep.subr.bf16.mxu0 0
  %1659 = vmatpush1.bf16.msra.mxu0 %v1522
  %1660 = vmatprep.subr.bf16.mxu0 0
  %1661 = vmatpush1.bf16.msra.mxu0 %v1523
  %1662 = vmatprep.subr.bf16.mxu0 0
  %1663 = vmatpush1.bf16.msra.mxu0 %v1524
  %1664 = vmatprep.subr.bf16.mxu0 0
  %1665 = vmatpush1.bf16.msra.mxu0 %v1525
  %1666 = vmatprep.subr.bf16.mxu0 0
  %1667 = vmatpush1.bf16.msra.mxu0 %v1526
  %1668 = vmatprep.subr.bf16.mxu0 0
  %1669 = vmatpush1.bf16.msra.mxu0 %v1527
  %1670 = vmatprep.subr.bf16.mxu0 0
  %1671 = vmatpush1.bf16.msra.mxu0 %v1528
  %1672 = vmatprep.subr.bf16.mxu0 0
  %1673 = vmatpush1.bf16.msra.mxu0 %v1529
  %1674 = vmatprep.mubr.bf16.mxu0 %v1104
  %1675 = vmatmul.mubr.bf16.gmra.mrb[0].mxu0 %v1100
  %v1676 = vpop.f32.mrb[0].mxu0
  %v1677 = vadd.f32 0.0, %v1676
  %v1678 = vpop.f32.mrb[0].mxu0
  %v1679 = vpop.f32.mrb[0].mxu0
  %v1680 = vadd.f32 0.0, %v1679
  %v1681 = vpop.f32.mrb[0].mxu0
  %1682 = vdwg.mxu0
  %1683 = vmatprep.subr.bf16.mxu0 0
  %1684 = vmatpush1.bf16.msra.mxu0 %v1530
  %1685 = vmatprep.subr.bf16.mxu0 0
  %1686 = vmatpush1.bf16.msra.mxu0 %v1531
  %1687 = vmatprep.subr.bf16.mxu0 0
  %1688 = vmatpush1.bf16.msra.mxu0 %v1532
  %1689 = vmatprep.subr.bf16.mxu0 0
  %1690 = vmatpush1.bf16.msra.mxu0 %v1533
  %1691 = vmatprep.subr.bf16.mxu0 0
  %1692 = vmatpush1.bf16.msra.mxu0 %v1534
  %1693 = vmatprep.subr.bf16.mxu0 0
  %1694 = vmatpush1.bf16.msra.mxu0 %v1535
  %1695 = vmatprep.subr.bf16.mxu0 0
  %1696 = vmatpush1.bf16.msra.mxu0 %v1536
  %1697 = vmatprep.subr.bf16.mxu0 0
  %1698 = vmatpush1.bf16.msra.mxu0 %v1537
  %1699 = vmatprep.subr.bf16.mxu0 0
  %1700 = vmatpush1.bf16.msra.mxu0 %v1538
  %1701 = vmatprep.subr.bf16.mxu0 0
  %1702 = vmatpush1.bf16.msra.mxu0 %v1539
  %1703 = vmatprep.subr.bf16.mxu0 0
  %1704 = vmatpush1.bf16.msra.mxu0 %v1540
  %1705 = vmatprep.subr.bf16.mxu0 0
  %1706 = vmatpush1.bf16.msra.mxu0 %v1541
  %1707 = vmatprep.subr.bf16.mxu0 0
  %1708 = vmatpush1.bf16.msra.mxu0 %v1542
  %1709 = vmatprep.subr.bf16.mxu0 0
  %1710 = vmatpush1.bf16.msra.mxu0 %v1543
  %1711 = vmatprep.subr.bf16.mxu0 0
  %1712 = vmatpush1.bf16.msra.mxu0 %v1544
  %1713 = vmatprep.subr.bf16.mxu0 0
  %1714 = vmatpush1.bf16.msra.mxu0 %v1545
  %1715 = vmatprep.mubr.bf16.mxu0 %v1112
  %1716 = vmatmul.mubr.bf16.gmra.mrb[0].mxu0 %v1108
  %v1717 = vpop.f32.mrb[0].mxu0
  %v1718 = vadd.f32 %v1677, %v1717
  %v1719 = vpop.f32.mrb[0].mxu0
  %v1720 = vpop.f32.mrb[0].mxu0
  %v1721 = vadd.f32 %v1680, %v1720
  %v1722 = vpop.f32.mrb[0].mxu0
  %1723 = vdwg.mxu0
  %1724 = vmatprep.subr.bf16.mxu0 0
  %1725 = vmatpush1.bf16.msra.mxu0 %v1546
  %1726 = vmatprep.subr.bf16.mxu0 0
  %1727 = vmatpush1.bf16.msra.mxu0 %v1547
  %1728 = vmatprep.subr.bf16.mxu0 0
  %1729 = vmatpush1.bf16.msra.mxu0 %v1548
  %1730 = vmatprep.subr.bf16.mxu0 0
  %1731 = vmatpush1.bf16.msra.mxu0 %v1549
  %1732 = vmatprep.subr.bf16.mxu0 0
  %1733 = vmatpush1.bf16.msra.mxu0 %v1550
  %1734 = vmatprep.subr.bf16.mxu0 0
  %1735 = vmatpush1.bf16.msra.mxu0 %v1551
  %1736 = vmatprep.subr.bf16.mxu0 0
  %1737 = vmatpush1.bf16.msra.mxu0 %v1552
  %1738 = vmatprep.subr.bf16.mxu0 0
  %1739 = vmatpush1.bf16.msra.mxu0 %v1553
  %1740 = vmatprep.subr.bf16.mxu0 0
  %1741 = vmatpush1.bf16.msra.mxu0 %v1554
  %1742 = vmatprep.subr.bf16.mxu0 0
  %1743 = vmatpush1.bf16.msra.mxu0 %v1555
  %1744 = vmatprep.subr.bf16.mxu0 0
  %1745 = vmatpush1.bf16.msra.mxu0 %v1556
  %1746 = vmatprep.subr.bf16.mxu0 0
  %1747 = vmatpush1.bf16.msra.mxu0 %v1557
  %1748 = vmatprep.subr.bf16.mxu0 0
  %1749 = vmatpush1.bf16.msra.mxu0 %v1558
  %1750 = vmatprep.subr.bf16.mxu0 0
  %1751 = vmatpush1.bf16.msra.mxu0 %v1559
  %1752 = vmatprep.subr.bf16.mxu0 0
  %1753 = vmatpush1.bf16.msra.mxu0 %v1560
  %1754 = vmatprep.subr.bf16.mxu0 0
  %1755 = vmatpush1.bf16.msra.mxu0 %v1561
  %1756 = vmatprep.mubr.bf16.mxu0 %v1120
  %1757 = vmatmul.mubr.bf16.gmra.mrb[0].mxu0 %v1116
  %v1758 = vpop.f32.mrb[0].mxu0
  %v1759 = vadd.f32 %v1718, %v1758
  %v1760 = vpop.f32.mrb[0].mxu0
  %v1761 = vpop.f32.mrb[0].mxu0
  %v1762 = vadd.f32 %v1721, %v1761
  %v1763 = vpop.f32.mrb[0].mxu0
  %1764 = vdwg.mxu0
  %1765 = vmatprep.subr.bf16.mxu0 0
  %1766 = vmatpush1.bf16.msra.mxu0 %v1562
  %1767 = vmatprep.subr.bf16.mxu0 0
  %1768 = vmatpush1.bf16.msra.mxu0 %v1563
  %1769 = vmatprep.subr.bf16.mxu0 0
  %1770 = vmatpush1.bf16.msra.mxu0 %v1564
  %1771 = vmatprep.subr.bf16.mxu0 0
  %1772 = vmatpush1.bf16.msra.mxu0 %v1565
  %1773 = vmatprep.subr.bf16.mxu0 0
  %1774 = vmatpush1.bf16.msra.mxu0 %v1566
  %1775 = vmatprep.subr.bf16.mxu0 0
  %1776 = vmatpush1.bf16.msra.mxu0 %v1567
  %1777 = vmatprep.subr.bf16.mxu0 0
  %1778 = vmatpush1.bf16.msra.mxu0 %v1568
  %1779 = vmatprep.subr.bf16.mxu0 0
  %1780 = vmatpush1.bf16.msra.mxu0 %v1569
  %1781 = vmatprep.subr.bf16.mxu0 0
  %1782 = vmatpush1.bf16.msra.mxu0 %v1570
  %1783 = vmatprep.subr.bf16.mxu0 0
  %1784 = vmatpush1.bf16.msra.mxu0 %v1571
  %1785 = vmatprep.subr.bf16.mxu0 0
  %1786 = vmatpush1.bf16.msra.mxu0 %v1572
  %1787 = vmatprep.subr.bf16.mxu0 0
  %1788 = vmatpush1.bf16.msra.mxu0 %v1573
  %1789 = vmatprep.subr.bf16.mxu0 0
  %1790 = vmatpush1.bf16.msra.mxu0 %v1574
  %1791 = vmatprep.subr.bf16.mxu0 0
  %1792 = vmatpush1.bf16.msra.mxu0 %v1575
  %1793 = vmatprep.subr.bf16.mxu0 0
  %1794 = vmatpush1.bf16.msra.mxu0 %v1576
  %1795 = vmatprep.subr.bf16.mxu0 0
  %1796 = vmatpush1.bf16.msra.mxu0 %v1577
  %1797 = vmatprep.mubr.bf16.mxu0 %v1128
  %1798 = vmatmul.mubr.bf16.gmra.mrb[0].mxu0 %v1124
  %v1799 = vpop.f32.mrb[0].mxu0
  %v1800 = vadd.f32 %v1759, %v1799
  %v1801 = vpop.f32.mrb[0].mxu0
  %v1802 = vpop.f32.mrb[0].mxu0
  %v1803 = vadd.f32 %v1762, %v1802
  %v1804 = vpop.f32.mrb[0].mxu0
  %1805 = vdwg.mxu0
  %v1806 = vmax.f32 %v1800, 0.0
  %v1807 = vmax.f32 %v1803, 0.0
  %v1808 = vpack.c.bf16 %v1807, %v1806
  %1810 = vrot.lane.b32.xlu0 %v1066, 64
  %v1811 = vpop.permute.xlu0 %1810
  %1813 = vrot.lane.b32.xlu0 %v1058, 64
  %v1814 = vpop.permute.xlu0 %1813
  %v1816 = vrot.slane %v1070, 1
  %v1817 = vrot.slane %v1066, 1
  %1818 = vrot.lane.b32.xlu0 %v1817, 64
  %v1819 = vpop.permute.xlu0 %1818
  %v1821 = vrot.slane %v1062, 1
  %v1822 = vrot.slane %v1058, 1
  %1823 = vrot.lane.b32.xlu0 %v1822, 64
  %v1824 = vpop.permute.xlu0 %1823
  %v1827 = vsel %vm1097, %v1070, %v1811
  %v1831 = vsel %vm1097, %v1062, %v1814
  %v1835 = vsel %vm1097, %v1816, %v1819
  %v1839 = vsel %vm1097, %v1821, %v1824
  %1841 = vmatprep.subr.bf16.mxu0 0
  %1842 = vmatpush1.bf16.msra.mxu0 %v1514
  %1843 = vmatprep.subr.bf16.mxu0 0
  %1844 = vmatpush1.bf16.msra.mxu0 %v1515
  %1845 = vmatprep.subr.bf16.mxu0 0
  %1846 = vmatpush1.bf16.msra.mxu0 %v1516
  %1847 = vmatprep.subr.bf16.mxu0 0
  %1848 = vmatpush1.bf16.msra.mxu0 %v1517
  %1849 = vmatprep.subr.bf16.mxu0 0
  %1850 = vmatpush1.bf16.msra.mxu0 %v1518
  %1851 = vmatprep.subr.bf16.mxu0 0
  %1852 = vmatpush1.bf16.msra.mxu0 %v1519
  %1853 = vmatprep.subr.bf16.mxu0 0
  %1854 = vmatpush1.bf16.msra.mxu0 %v1520
  %1855 = vmatprep.subr.bf16.mxu0 0
  %1856 = vmatpush1.bf16.msra.mxu0 %v1521
  %1857 = vmatprep.subr.bf16.mxu0 0
  %1858 = vmatpush1.bf16.msra.mxu0 %v1522
  %1859 = vmatprep.subr.bf16.mxu0 0
  %1860 = vmatpush1.bf16.msra.mxu0 %v1523
  %1861 = vmatprep.subr.bf16.mxu0 0
  %1862 = vmatpush1.bf16.msra.mxu0 %v1524
  %1863 = vmatprep.subr.bf16.mxu0 0
  %1864 = vmatpush1.bf16.msra.mxu0 %v1525
  %1865 = vmatprep.subr.bf16.mxu0 0
  %1866 = vmatpush1.bf16.msra.mxu0 %v1526
  %1867 = vmatprep.subr.bf16.mxu0 0
  %1868 = vmatpush1.bf16.msra.mxu0 %v1527
  %1869 = vmatprep.subr.bf16.mxu0 0
  %1870 = vmatpush1.bf16.msra.mxu0 %v1528
  %1871 = vmatprep.subr.bf16.mxu0 0
  %1872 = vmatpush1.bf16.msra.mxu0 %v1529
  %1873 = vmatprep.mubr.bf16.mxu0 %v1827
  %1874 = vmatmul.mubr.bf16.gmra.mrb[0].mxu0 %v1104
  %v1875 = vpop.f32.mrb[0].mxu0
  %v1876 = vadd.f32 0.0, %v1875
  %v1877 = vpop.f32.mrb[0].mxu0
  %v1878 = vpop.f32.mrb[0].mxu0
  %v1879 = vadd.f32 0.0, %v1878
  %v1880 = vpop.f32.mrb[0].mxu0
  %1881 = vdwg.mxu0
  %1882 = vmatprep.subr.bf16.mxu0 0
  %1883 = vmatpush1.bf16.msra.mxu0 %v1530
  %1884 = vmatprep.subr.bf16.mxu0 0
  %1885 = vmatpush1.bf16.msra.mxu0 %v1531
  %1886 = vmatprep.subr.bf16.mxu0 0
  %1887 = vmatpush1.bf16.msra.mxu0 %v1532
  %1888 = vmatprep.subr.bf16.mxu0 0
  %1889 = vmatpush1.bf16.msra.mxu0 %v1533
  %1890 = vmatprep.subr.bf16.mxu0 0
  %1891 = vmatpush1.bf16.msra.mxu0 %v1534
  %1892 = vmatprep.subr.bf16.mxu0 0
  %1893 = vmatpush1.bf16.msra.mxu0 %v1535
  %1894 = vmatprep.subr.bf16.mxu0 0
  %1895 = vmatpush1.bf16.msra.mxu0 %v1536
  %1896 = vmatprep.subr.bf16.mxu0 0
  %1897 = vmatpush1.bf16.msra.mxu0 %v1537
  %1898 = vmatprep.subr.bf16.mxu0 0
  %1899 = vmatpush1.bf16.msra.mxu0 %v1538
  %1900 = vmatprep.subr.bf16.mxu0 0
  %1901 = vmatpush1.bf16.msra.mxu0 %v1539
  %1902 = vmatprep.subr.bf16.mxu0 0
  %1903 = vmatpush1.bf16.msra.mxu0 %v1540
  %1904 = vmatprep.subr.bf16.mxu0 0
  %1905 = vmatpush1.bf16.msra.mxu0 %v1541
  %1906 = vmatprep.subr.bf16.mxu0 0
  %1907 = vmatpush1.bf16.msra.mxu0 %v1542
  %1908 = vmatprep.subr.bf16.mxu0 0
  %1909 = vmatpush1.bf16.msra.mxu0 %v1543
  %1910 = vmatprep.subr.bf16.mxu0 0
  %1911 = vmatpush1.bf16.msra.mxu0 %v1544
  %1912 = vmatprep.subr.bf16.mxu0 0
  %1913 = vmatpush1.bf16.msra.mxu0 %v1545
  %1914 = vmatprep.mubr.bf16.mxu0 %v1831
  %1915 = vmatmul.mubr.bf16.gmra.mrb[0].mxu0 %v1112
  %v1916 = vpop.f32.mrb[0].mxu0
  %v1917 = vadd.f32 %v1876, %v1916
  %v1918 = vpop.f32.mrb[0].mxu0
  %v1919 = vpop.f32.mrb[0].mxu0
  %v1920 = vadd.f32 %v1879, %v1919
  %v1921 = vpop.f32.mrb[0].mxu0
  %1922 = vdwg.mxu0
  %1923 = vmatprep.subr.bf16.mxu0 0
  %1924 = vmatpush1.bf16.msra.mxu0 %v1546
  %1925 = vmatprep.subr.bf16.mxu0 0
  %1926 = vmatpush1.bf16.msra.mxu0 %v1547
  %1927 = vmatprep.subr.bf16.mxu0 0
  %1928 = vmatpush1.bf16.msra.mxu0 %v1548
  %1929 = vmatprep.subr.bf16.mxu0 0
  %1930 = vmatpush1.bf16.msra.mxu0 %v1549
  %1931 = vmatprep.subr.bf16.mxu0 0
  %1932 = vmatpush1.bf16.msra.mxu0 %v1550
  %1933 = vmatprep.subr.bf16.mxu0 0
  %1934 = vmatpush1.bf16.msra.mxu0 %v1551
  %1935 = vmatprep.subr.bf16.mxu0 0
  %1936 = vmatpush1.bf16.msra.mxu0 %v1552
  %1937 = vmatprep.subr.bf16.mxu0 0
  %1938 = vmatpush1.bf16.msra.mxu0 %v1553
  %1939 = vmatprep.subr.bf16.mxu0 0
  %1940 = vmatpush1.bf16.msra.mxu0 %v1554
  %1941 = vmatprep.subr.bf16.mxu0 0
  %1942 = vmatpush1.bf16.msra.mxu0 %v1555
  %1943 = vmatprep.subr.bf16.mxu0 0
  %1944 = vmatpush1.bf16.msra.mxu0 %v1556
  %1945 = vmatprep.subr.bf16.mxu0 0
  %1946 = vmatpush1.bf16.msra.mxu0 %v1557
  %1947 = vmatprep.subr.bf16.mxu0 0
  %1948 = vmatpush1.bf16.msra.mxu0 %v1558
  %1949 = vmatprep.subr.bf16.mxu0 0
  %1950 = vmatpush1.bf16.msra.mxu0 %v1559
  %1951 = vmatprep.subr.bf16.mxu0 0
  %1952 = vmatpush1.bf16.msra.mxu0 %v1560
  %1953 = vmatprep.subr.bf16.mxu0 0
  %1954 = vmatpush1.bf16.msra.mxu0 %v1561
  %1955 = vmatprep.mubr.bf16.mxu0 %v1835
  %1956 = vmatmul.mubr.bf16.gmra.mrb[0].mxu0 %v1120
  %v1957 = vpop.f32.mrb[0].mxu0
  %v1958 = vadd.f32 %v1917, %v1957
  %v1959 = vpop.f32.mrb[0].mxu0
  %v1960 = vpop.f32.mrb[0].mxu0
  %v1961 = vadd.f32 %v1920, %v1960
  %v1962 = vpop.f32.mrb[0].mxu0
  %1963 = vdwg.mxu0
  %1964 = vmatprep.subr.bf16.mxu0 0
  %1965 = vmatpush1.bf16.msra.mxu0 %v1562
  %1966 = vmatprep.subr.bf16.mxu0 0
  %1967 = vmatpush1.bf16.msra.mxu0 %v1563
  %1968 = vmatprep.subr.bf16.mxu0 0
  %1969 = vmatpush1.bf16.msra.mxu0 %v1564
  %1970 = vmatprep.subr.bf16.mxu0 0
  %1971 = vmatpush1.bf16.msra.mxu0 %v1565
  %1972 = vmatprep.subr.bf16.mxu0 0
  %1973 = vmatpush1.bf16.msra.mxu0 %v1566
  %1974 = vmatprep.subr.bf16.mxu0 0
  %1975 = vmatpush1.bf16.msra.mxu0 %v1567
  %1976 = vmatprep.subr.bf16.mxu0 0
  %1977 = vmatpush1.bf16.msra.mxu0 %v1568
  %1978 = vmatprep.subr.bf16.mxu0 0
  %1979 = vmatpush1.bf16.msra.mxu0 %v1569
  %1980 = vmatprep.subr.bf16.mxu0 0
  %1981 = vmatpush1.bf16.msra.mxu0 %v1570
  %1982 = vmatprep.subr.bf16.mxu0 0
  %1983 = vmatpush1.bf16.msra.mxu0 %v1571
  %1984 = vmatprep.subr.bf16.mxu0 0
  %1985 = vmatpush1.bf16.msra.mxu0 %v1572
  %1986 = vmatprep.subr.bf16.mxu0 0
  %1987 = vmatpush1.bf16.msra.mxu0 %v1573
  %1988 = vmatprep.subr.bf16.mxu0 0
  %1989 = vmatpush1.bf16.msra.mxu0 %v1574
  %1990 = vmatprep.subr.bf16.mxu0 0
  %1991 = vmatpush1.bf16.msra.mxu0 %v1575
  %1992 = vmatprep.subr.bf16.mxu0 0
  %1993 = vmatpush1.bf16.msra.mxu0 %v1576
  %1994 = vmatprep.subr.bf16.mxu0 0
  %1995 = vmatpush1.bf16.msra.mxu0 %v1577
  %1996 = vmatprep.mubr.bf16.mxu0 %v1839
  %1997 = vmatmul.mubr.bf16.gmra.mrb[0].mxu0 %v1128
  %v1998 = vpop.f32.mrb[0].mxu0
  %v1999 = vadd.f32 %v1958, %v1998
  %v2000 = vpop.f32.mrb[0].mxu0
  %v2001 = vpop.f32.mrb[0].mxu0
  %v2002 = vadd.f32 %v1961, %v2001
  %v2003 = vpop.f32.mrb[0].mxu0
  %2004 = vdwg.mxu0
  %v2005 = vmax.f32 %v1999, 0.0
  %v2006 = vmax.f32 %v2002, 0.0
  %v2007 = vpack.c.bf16 %v2006, %v2005
  %2008 = vrot.lane.b32.xlu0 %v1070, 64
  %v2009 = vpop.permute.xlu0 %2008
  %2010 = vrot.lane.b32.xlu0 %v1062, 64
  %v2011 = vpop.permute.xlu0 %2010
  %2012 = vrot.lane.b32.xlu0 %v1816, 64
  %v2013 = vpop.permute.xlu0 %2012
  %2014 = vrot.lane.b32.xlu0 %v1821, 64
  %v2015 = vpop.permute.xlu0 %2014
  %v2018 = vsel %vm1097, %v2009, %v1066
  %v2022 = vsel %vm1097, %v2011, %v1058
  %v2026 = vsel %vm1097, %v2013, %v1817
  %v2030 = vsel %vm1097, %v2015, %v1822
  %2032 = vmatprep.subr.bf16.mxu0 0
  %2033 = vmatpush1.bf16.msra.mxu0 %v1514
  %2034 = vmatprep.subr.bf16.mxu0 0
  %2035 = vmatpush1.bf16.msra.mxu0 %v1515
  %2036 = vmatprep.subr.bf16.mxu0 0
  %2037 = vmatpush1.bf16.msra.mxu0 %v1516
  %2038 = vmatprep.subr.bf16.mxu0 0
  %2039 = vmatpush1.bf16.msra.mxu0 %v1517
  %2040 = vmatprep.subr.bf16.mxu0 0
  %2041 = vmatpush1.bf16.msra.mxu0 %v1518
  %2042 = vmatprep.subr.bf16.mxu0 0
  %2043 = vmatpush1.bf16.msra.mxu0 %v1519
  %2044 = vmatprep.subr.bf16.mxu0 0
  %2045 = vmatpush1.bf16.msra.mxu0 %v1520
  %2046 = vmatprep.subr.bf16.mxu0 0
  %2047 = vmatpush1.bf16.msra.mxu0 %v1521
  %2048 = vmatprep.subr.bf16.mxu0 0
  %2049 = vmatpush1.bf16.msra.mxu0 %v1522
  %2050 = vmatprep.subr.bf16.mxu0 0
  %2051 = vmatpush1.bf16.msra.mxu0 %v1523
  %2052 = vmatprep.subr.bf16.mxu0 0
  %2053 = vmatpush1.bf16.msra.mxu0 %v1524
  %2054 = vmatprep.subr.bf16.mxu0 0
  %2055 = vmatpush1.bf16.msra.mxu0 %v1525
  %2056 = vmatprep.subr.bf16.mxu0 0
  %2057 = vmatpush1.bf16.msra.mxu0 %v1526
  %2058 = vmatprep.subr.bf16.mxu0 0
  %2059 = vmatpush1.bf16.msra.mxu0 %v1527
  %2060 = vmatprep.subr.bf16.mxu0 0
  %2061 = vmatpush1.bf16.msra.mxu0 %v1528
  %2062 = vmatprep.subr.bf16.mxu0 0
  %2063 = vmatpush1.bf16.msra.mxu0 %v1529
  %2064 = vmatprep.mubr.bf16.mxu0 %v2018
  %2065 = vmatmul.mubr.bf16.gmra.mrb[0].mxu0 %v1827
  %v2066 = vpop.f32.mrb[0].mxu0
  %v2067 = vadd.f32 0.0, %v2066
  %v2068 = vpop.f32.mrb[0].mxu0
  %v2069 = vpop.f32.mrb[0].mxu0
  %v2070 = vadd.f32 0.0, %v2069
  %v2071 = vpop.f32.mrb[0].mxu0
  %2072 = vdwg.mxu0
  %2073 = vmatprep.subr.bf16.mxu0 0
  %2074 = vmatpush1.bf16.msra.mxu0 %v1530
  %2075 = vmatprep.subr.bf16.mxu0 0
  %2076 = vmatpush1.bf16.msra.mxu0 %v1531
  %2077 = vmatprep.subr.bf16.mxu0 0
  %2078 = vmatpush1.bf16.msra.mxu0 %v1532
  %2079 = vmatprep.subr.bf16.mxu0 0
  %2080 = vmatpush1.bf16.msra.mxu0 %v1533
  %2081 = vmatprep.subr.bf16.mxu0 0
  %2082 = vmatpush1.bf16.msra.mxu0 %v1534
  %2083 = vmatprep.subr.bf16.mxu0 0
  %2084 = vmatpush1.bf16.msra.mxu0 %v1535
  %2085 = vmatprep.subr.bf16.mxu0 0
  %2086 = vmatpush1.bf16.msra.mxu0 %v1536
  %2087 = vmatprep.subr.bf16.mxu0 0
  %2088 = vmatpush1.bf16.msra.mxu0 %v1537
  %2089 = vmatprep.subr.bf16.mxu0 0
  %2090 = vmatpush1.bf16.msra.mxu0 %v1538
  %2091 = vmatprep.subr.bf16.mxu0 0
  %2092 = vmatpush1.bf16.msra.mxu0 %v1539
  %2093 = vmatprep.subr.bf16.mxu0 0
  %2094 = vmatpush1.bf16.msra.mxu0 %v1540
  %2095 = vmatprep.subr.bf16.mxu0 0
  %2096 = vmatpush1.bf16.msra.mxu0 %v1541
  %2097 = vmatprep.subr.bf16.mxu0 0
  %2098 = vmatpush1.bf16.msra.mxu0 %v1542
  %2099 = vmatprep.subr.bf16.mxu0 0
  %2100 = vmatpush1.bf16.msra.mxu0 %v1543
  %2101 = vmatprep.subr.bf16.mxu0 0
  %2102 = vmatpush1.bf16.msra.mxu0 %v1544
  %2103 = vmatprep.subr.bf16.mxu0 0
  %2104 = vmatpush1.bf16.msra.mxu0 %v1545
  %2105 = vmatprep.mubr.bf16.mxu0 %v2022
  %2106 = vmatmul.mubr.bf16.gmra.mrb[0].mxu0 %v1831
  %v2107 = vpop.f32.mrb[0].mxu0
  %v2108 = vadd.f32 %v2067, %v2107
  %v2109 = vpop.f32.mrb[0].mxu0
  %v2110 = vpop.f32.mrb[0].mxu0
  %v2111 = vadd.f32 %v2070, %v2110
  %v2112 = vpop.f32.mrb[0].mxu0
  %2113 = vdwg.mxu0
  %2114 = vmatprep.subr.bf16.mxu0 0
  %2115 = vmatpush1.bf16.msra.mxu0 %v1546
  %2116 = vmatprep.subr.bf16.mxu0 0
  %2117 = vmatpush1.bf16.msra.mxu0 %v1547
  %2118 = vmatprep.subr.bf16.mxu0 0
  %2119 = vmatpush1.bf16.msra.mxu0 %v1548
  %2120 = vmatprep.subr.bf16.mxu0 0
  %2121 = vmatpush1.bf16.msra.mxu0 %v1549
  %2122 = vmatprep.subr.bf16.mxu0 0
  %2123 = vmatpush1.bf16.msra.mxu0 %v1550
  %2124 = vmatprep.subr.bf16.mxu0 0
  %2125 = vmatpush1.bf16.msra.mxu0 %v1551
  %2126 = vmatprep.subr.bf16.mxu0 0
  %2127 = vmatpush1.bf16.msra.mxu0 %v1552
  %2128 = vmatprep.subr.bf16.mxu0 0
  %2129 = vmatpush1.bf16.msra.mxu0 %v1553
  %2130 = vmatprep.subr.bf16.mxu0 0
  %2131 = vmatpush1.bf16.msra.mxu0 %v1554
  %2132 = vmatprep.subr.bf16.mxu0 0
  %2133 = vmatpush1.bf16.msra.mxu0 %v1555
  %2134 = vmatprep.subr.bf16.mxu0 0
  %2135 = vmatpush1.bf16.msra.mxu0 %v1556
  %2136 = vmatprep.subr.bf16.mxu0 0
  %2137 = vmatpush1.bf16.msra.mxu0 %v1557
  %2138 = vmatprep.subr.bf16.mxu0 0
  %2139 = vmatpush1.bf16.msra.mxu0 %v1558
  %2140 = vmatprep.subr.bf16.mxu0 0
  %2141 = vmatpush1.bf16.msra.mxu0 %v1559
  %2142 = vmatprep.subr.bf16.mxu0 0
  %2143 = vmatpush1.bf16.msra.mxu0 %v1560
  %2144 = vmatprep.subr.bf16.mxu0 0
  %2145 = vmatpush1.bf16.msra.mxu0 %v1561
  %2146 = vmatprep.mubr.bf16.mxu0 %v2026
  %2147 = vmatmul.mubr.bf16.gmra.mrb[0].mxu0 %v1835
  %v2148 = vpop.f32.mrb[0].mxu0
  %v2149 = vadd.f32 %v2108, %v2148
  %v2150 = vpop.f32.mrb[0].mxu0
  %v2151 = vpop.f32.mrb[0].mxu0
  %v2152 = vadd.f32 %v2111, %v2151
  %v2153 = vpop.f32.mrb[0].mxu0
  %2154 = vdwg.mxu0
  %2155 = vmatprep.subr.bf16.mxu0 0
  %2156 = vmatpush1.bf16.msra.mxu0 %v1562
  %2157 = vmatprep.subr.bf16.mxu0 0
  %2158 = vmatpush1.bf16.msra.mxu0 %v1563
  %2159 = vmatprep.subr.bf16.mxu0 0
  %2160 = vmatpush1.bf16.msra.mxu0 %v1564
  %2161 = vmatprep.subr.bf16.mxu0 0
  %2162 = vmatpush1.bf16.msra.mxu0 %v1565
  %2163 = vmatprep.subr.bf16.mxu0 0
  %2164 = vmatpush1.bf16.msra.mxu0 %v1566
  %2165 = vmatprep.subr.bf16.mxu0 0
  %2166 = vmatpush1.bf16.msra.mxu0 %v1567
  %2167 = vmatprep.subr.bf16.mxu0 0
  %2168 = vmatpush1.bf16.msra.mxu0 %v1568
  %2169 = vmatprep.subr.bf16.mxu0 0
  %2170 = vmatpush1.bf16.msra.mxu0 %v1569
  %2171 = vmatprep.subr.bf16.mxu0 0
  %2172 = vmatpush1.bf16.msra.mxu0 %v1570
  %2173 = vmatprep.subr.bf16.mxu0 0
  %2174 = vmatpush1.bf16.msra.mxu0 %v1571
  %2175 = vmatprep.subr.bf16.mxu0 0
  %2176 = vmatpush1.bf16.msra.mxu0 %v1572
  %2177 = vmatprep.subr.bf16.mxu0 0
  %2178 = vmatpush1.bf16.msra.mxu0 %v1573
  %2179 = vmatprep.subr.bf16.mxu0 0
  %2180 = vmatpush1.bf16.msra.mxu0 %v1574
  %2181 = vmatprep.subr.bf16.mxu0 0
  %2182 = vmatpush1.bf16.msra.mxu0 %v1575
  %2183 = vmatprep.subr.bf16.mxu0 0
  %2184 = vmatpush1.bf16.msra.mxu0 %v1576
  %2185 = vmatprep.subr.bf16.mxu0 0
  %2186 = vmatpush1.bf16.msra.mxu0 %v1577
  %2187 = vmatprep.mubr.bf16.mxu0 %v2030
  %2188 = vmatmul.mubr.bf16.gmra.mrb[0].mxu0 %v1839
  %v2189 = vpop.f32.mrb[0].mxu0
  %v2190 = vadd.f32 %v2149, %v2189
  %v2191 = vpop.f32.mrb[0].mxu0
  %v2192 = vpop.f32.mrb[0].mxu0
  %v2193 = vadd.f32 %v2152, %v2192
  %v2194 = vpop.f32.mrb[0].mxu0
  %2195 = vdwg.mxu0
  %v2196 = vmax.f32 %v2190, 0.0
  %v2197 = vmax.f32 %v2193, 0.0
  %v2198 = vpack.c.bf16 %v2197, %v2196
  %2200 = vrot.lane.b32.xlu0 %v1067, 64
  %v2201 = vpop.permute.xlu0 %2200
  %2203 = vrot.lane.b32.xlu0 %v1059, 64
  %v2204 = vpop.permute.xlu0 %2203
  %v2206 = vrot.slane %v1071, 1
  %v2207 = vrot.slane %v1067, 1
  %2208 = vrot.lane.b32.xlu0 %v2207, 64
  %v2209 = vpop.permute.xlu0 %2208
  %v2211 = vrot.slane %v1063, 1
  %v2212 = vrot.slane %v1059, 1
  %2213 = vrot.lane.b32.xlu0 %v2212, 64
  %v2214 = vpop.permute.xlu0 %2213
  %v2217 = vsel %vm1097, %v1071, %v2201
  %v2221 = vsel %vm1097, %v1063, %v2204
  %v2225 = vsel %vm1097, %v2206, %v2209
  %v2229 = vsel %vm1097, %v2211, %v2214
  %2231 = vmatprep.subr.bf16.mxu0 0
  %2232 = vmatpush1.bf16.msra.mxu0 %v1514
  %2233 = vmatprep.subr.bf16.mxu0 0
  %2234 = vmatpush1.bf16.msra.mxu0 %v1515
  %2235 = vmatprep.subr.bf16.mxu0 0
  %2236 = vmatpush1.bf16.msra.mxu0 %v1516
  %2237 = vmatprep.subr.bf16.mxu0 0
  %2238 = vmatpush1.bf16.msra.mxu0 %v1517
  %2239 = vmatprep.subr.bf16.mxu0 0
  %2240 = vmatpush1.bf16.msra.mxu0 %v1518
  %2241 = vmatprep.subr.bf16.mxu0 0
  %2242 = vmatpush1.bf16.msra.mxu0 %v1519
  %2243 = vmatprep.subr.bf16.mxu0 0
  %2244 = vmatpush1.bf16.msra.mxu0 %v1520
  %2245 = vmatprep.subr.bf16.mxu0 0
  %2246 = vmatpush1.bf16.msra.mxu0 %v1521
  %2247 = vmatprep.subr.bf16.mxu0 0
  %2248 = vmatpush1.bf16.msra.mxu0 %v1522
  %2249 = vmatprep.subr.bf16.mxu0 0
  %2250 = vmatpush1.bf16.msra.mxu0 %v1523
  %2251 = vmatprep.subr.bf16.mxu0 0
  %2252 = vmatpush1.bf16.msra.mxu0 %v1524
  %2253 = vmatprep.subr.bf16.mxu0 0
  %2254 = vmatpush1.bf16.msra.mxu0 %v1525
  %2255 = vmatprep.subr.bf16.mxu0 0
  %2256 = vmatpush1.bf16.msra.mxu0 %v1526
  %2257 = vmatprep.subr.bf16.mxu0 0
  %2258 = vmatpush1.bf16.msra.mxu0 %v1527
  %2259 = vmatprep.subr.bf16.mxu0 0
  %2260 = vmatpush1.bf16.msra.mxu0 %v1528
  %2261 = vmatprep.subr.bf16.mxu0 0
  %2262 = vmatpush1.bf16.msra.mxu0 %v1529
  %2263 = vmatprep.mubr.bf16.mxu0 %v2217
  %2264 = vmatmul.mubr.bf16.gmra.mrb[0].mxu0 %v2018
  %v2265 = vpop.f32.mrb[0].mxu0
  %v2266 = vadd.f32 0.0, %v2265
  %v2267 = vpop.f32.mrb[0].mxu0
  %v2268 = vpop.f32.mrb[0].mxu0
  %v2269 = vadd.f32 0.0, %v2268
  %v2270 = vpop.f32.mrb[0].mxu0
  %2271 = vdwg.mxu0
  %2272 = vmatprep.subr.bf16.mxu0 0
  %2273 = vmatpush1.bf16.msra.mxu0 %v1530
  %2274 = vmatprep.subr.bf16.mxu0 0
  %2275 = vmatpush1.bf16.msra.mxu0 %v1531
  %2276 = vmatprep.subr.bf16.mxu0 0
  %2277 = vmatpush1.bf16.msra.mxu0 %v1532
  %2278 = vmatprep.subr.bf16.mxu0 0
  %2279 = vmatpush1.bf16.msra.mxu0 %v1533
  %2280 = vmatprep.subr.bf16.mxu0 0
  %2281 = vmatpush1.bf16.msra.mxu0 %v1534
  %2282 = vmatprep.subr.bf16.mxu0 0
  %2283 = vmatpush1.bf16.msra.mxu0 %v1535
  %2284 = vmatprep.subr.bf16.mxu0 0
  %2285 = vmatpush1.bf16.msra.mxu0 %v1536
  %2286 = vmatprep.subr.bf16.mxu0 0
  %2287 = vmatpush1.bf16.msra.mxu0 %v1537
  %2288 = vmatprep.subr.bf16.mxu0 0
  %2289 = vmatpush1.bf16.msra.mxu0 %v1538
  %2290 = vmatprep.subr.bf16.mxu0 0
  %2291 = vmatpush1.bf16.msra.mxu0 %v1539
  %2292 = vmatprep.subr.bf16.mxu0 0
  %2293 = vmatpush1.bf16.msra.mxu0 %v1540
  %2294 = vmatprep.subr.bf16.mxu0 0
  %2295 = vmatpush1.bf16.msra.mxu0 %v1541
  %2296 = vmatprep.subr.bf16.mxu0 0
  %2297 = vmatpush1.bf16.msra.mxu0 %v1542
  %2298 = vmatprep.subr.bf16.mxu0 0
  %2299 = vmatpush1.bf16.msra.mxu0 %v1543
  %2300 = vmatprep.subr.bf16.mxu0 0
  %2301 = vmatpush1.bf16.msra.mxu0 %v1544
  %2302 = vmatprep.subr.bf16.mxu0 0
  %2303 = vmatpush1.bf16.msra.mxu0 %v1545
  %2304 = vmatprep.mubr.bf16.mxu0 %v2221
  %2305 = vmatmul.mubr.bf16.gmra.mrb[0].mxu0 %v2022
  %v2306 = vpop.f32.mrb[0].mxu0
  %v2307 = vadd.f32 %v2266, %v2306
  %v2308 = vpop.f32.mrb[0].mxu0
  %v2309 = vpop.f32.mrb[0].mxu0
  %v2310 = vadd.f32 %v2269, %v2309
  %v2311 = vpop.f32.mrb[0].mxu0
  %2312 = vdwg.mxu0
  %2313 = vmatprep.subr.bf16.mxu0 0
  %2314 = vmatpush1.bf16.msra.mxu0 %v1546
  %2315 = vmatprep.subr.bf16.mxu0 0
  %2316 = vmatpush1.bf16.msra.mxu0 %v1547
  %2317 = vmatprep.subr.bf16.mxu0 0
  %2318 = vmatpush1.bf16.msra.mxu0 %v1548
  %2319 = vmatprep.subr.bf16.mxu0 0
  %2320 = vmatpush1.bf16.msra.mxu0 %v1549
  %2321 = vmatprep.subr.bf16.mxu0 0
  %2322 = vmatpush1.bf16.msra.mxu0 %v1550
  %2323 = vmatprep.subr.bf16.mxu0 0
  %2324 = vmatpush1.bf16.msra.mxu0 %v1551
  %2325 = vmatprep.subr.bf16.mxu0 0
  %2326 = vmatpush1.bf16.msra.mxu0 %v1552
  %2327 = vmatprep.subr.bf16.mxu0 0
  %2328 = vmatpush1.bf16.msra.mxu0 %v1553
  %2329 = vmatprep.subr.bf16.mxu0 0
  %2330 = vmatpush1.bf16.msra.mxu0 %v1554
  %2331 = vmatprep.subr.bf16.mxu0 0
  %2332 = vmatpush1.bf16.msra.mxu0 %v1555
  %2333 = vmatprep.subr.bf16.mxu0 0
  %2334 = vmatpush1.bf16.msra.mxu0 %v1556
  %2335 = vmatprep.subr.bf16.mxu0 0
  %2336 = vmatpush1.bf16.msra.mxu0 %v1557
  %2337 = vmatprep.subr.bf16.mxu0 0
  %2338 = vmatpush1.bf16.msra.mxu0 %v1558
  %2339 = vmatprep.subr.bf16.mxu0 0
  %2340 = vmatpush1.bf16.msra.mxu0 %v1559
  %2341 = vmatprep.subr.bf16.mxu0 0
  %2342 = vmatpush1.bf16.msra.mxu0 %v1560
  %2343 = vmatprep.subr.bf16.mxu0 0
  %2344 = vmatpush1.bf16.msra.mxu0 %v1561
  %2345 = vmatprep.mubr.bf16.mxu0 %v2225
  %2346 = vmatmul.mubr.bf16.gmra.mrb[0].mxu0 %v2026
  %v2347 = vpop.f32.mrb[0].mxu0
  %v2348 = vadd.f32 %v2307, %v2347
  %v2349 = vpop.f32.mrb[0].mxu0
  %v2350 = vpop.f32.mrb[0].mxu0
  %v2351 = vadd.f32 %v2310, %v2350
  %v2352 = vpop.f32.mrb[0].mxu0
  %2353 = vdwg.mxu0
  %2354 = vmatprep.subr.bf16.mxu0 0
  %2355 = vmatpush1.bf16.msra.mxu0 %v1562
  %2356 = vmatprep.subr.bf16.mxu0 0
  %2357 = vmatpush1.bf16.msra.mxu0 %v1563
  %2358 = vmatprep.subr.bf16.mxu0 0
  %2359 = vmatpush1.bf16.msra.mxu0 %v1564
  %2360 = vmatprep.subr.bf16.mxu0 0
  %2361 = vmatpush1.bf16.msra.mxu0 %v1565
  %2362 = vmatprep.subr.bf16.mxu0 0
  %2363 = vmatpush1.bf16.msra.mxu0 %v1566
  %2364 = vmatprep.subr.bf16.mxu0 0
  %2365 = vmatpush1.bf16.msra.mxu0 %v1567
  %2366 = vmatprep.subr.bf16.mxu0 0
  %2367 = vmatpush1.bf16.msra.mxu0 %v1568
  %2368 = vmatprep.subr.bf16.mxu0 0
  %2369 = vmatpush1.bf16.msra.mxu0 %v1569
  %2370 = vmatprep.subr.bf16.mxu0 0
  %2371 = vmatpush1.bf16.msra.mxu0 %v1570
  %2372 = vmatprep.subr.bf16.mxu0 0
  %2373 = vmatpush1.bf16.msra.mxu0 %v1571
  %2374 = vmatprep.subr.bf16.mxu0 0
  %2375 = vmatpush1.bf16.msra.mxu0 %v1572
  %2376 = vmatprep.subr.bf16.mxu0 0
  %2377 = vmatpush1.bf16.msra.mxu0 %v1573
  %2378 = vmatprep.subr.bf16.mxu0 0
  %2379 = vmatpush1.bf16.msra.mxu0 %v1574
  %2380 = vmatprep.subr.bf16.mxu0 0
  %2381 = vmatpush1.bf16.msra.mxu0 %v1575
  %2382 = vmatprep.subr.bf16.mxu0 0
  %2383 = vmatpush1.bf16.msra.mxu0 %v1576
  %2384 = vmatprep.subr.bf16.mxu0 0
  %2385 = vmatpush1.bf16.msra.mxu0 %v1577
  %2386 = vmatprep.mubr.bf16.mxu0 %v2229
  %2387 = vmatmul.mubr.bf16.gmra.mrb[0].mxu0 %v2030
  %v2388 = vpop.f32.mrb[0].mxu0
  %v2389 = vadd.f32 %v2348, %v2388
  %v2390 = vpop.f32.mrb[0].mxu0
  %v2391 = vpop.f32.mrb[0].mxu0
  %v2392 = vadd.f32 %v2351, %v2391
  %v2393 = vpop.f32.mrb[0].mxu0
  %2394 = vdwg.mxu0
  %v2395 = vmax.f32 %v2389, 0.0
  %v2396 = vmax.f32 %v2392, 0.0
  %v2397 = vpack.c.bf16 %v2396, %v2395
  %2398 = vrot.lane.b32.xlu0 %v1071, 64
  %v2399 = vpop.permute.xlu0 %2398
  %2400 = vrot.lane.b32.xlu0 %v1063, 64
  %v2401 = vpop.permute.xlu0 %2400
  %2402 = vrot.lane.b32.xlu0 %v2206, 64
  %v2403 = vpop.permute.xlu0 %2402
  %2404 = vrot.lane.b32.xlu0 %v2211, 64
  %v2405 = vpop.permute.xlu0 %2404
  %v2408 = vsel %vm1097, %v2399, %v1067
  %v2412 = vsel %vm1097, %v2401, %v1059
  %v2416 = vsel %vm1097, %v2403, %v2207
  %v2420 = vsel %vm1097, %v2405, %v2212
  %2422 = vmatprep.subr.bf16.mxu0 0
  %2423 = vmatpush1.bf16.msra.mxu0 %v1514
  %2424 = vmatprep.subr.bf16.mxu0 0
  %2425 = vmatpush1.bf16.msra.mxu0 %v1515
  %2426 = vmatprep.subr.bf16.mxu0 0
  %2427 = vmatpush1.bf16.msra.mxu0 %v1516
  %2428 = vmatprep.subr.bf16.mxu0 0
  %2429 = vmatpush1.bf16.msra.mxu0 %v1517
  %2430 = vmatprep.subr.bf16.mxu0 0
  %2431 = vmatpush1.bf16.msra.mxu0 %v1518
  %2432 = vmatprep.subr.bf16.mxu0 0
  %2433 = vmatpush1.bf16.msra.mxu0 %v1519
  %2434 = vmatprep.subr.bf16.mxu0 0
  %2435 = vmatpush1.bf16.msra.mxu0 %v1520
  %2436 = vmatprep.subr.bf16.mxu0 0
  %2437 = vmatpush1.bf16.msra.mxu0 %v1521
  %2438 = vmatprep.subr.bf16.mxu0 0
  %2439 = vmatpush1.bf16.msra.mxu0 %v1522
  %2440 = vmatprep.subr.bf16.mxu0 0
  %2441 = vmatpush1.bf16.msra.mxu0 %v1523
  %2442 = vmatprep.subr.bf16.mxu0 0
  %2443 = vmatpush1.bf16.msra.mxu0 %v1524
  %2444 = vmatprep.subr.bf16.mxu0 0
  %2445 = vmatpush1.bf16.msra.mxu0 %v1525
  %2446 = vmatprep.subr.bf16.mxu0 0
  %2447 = vmatpush1.bf16.msra.mxu0 %v1526
  %2448 = vmatprep.subr.bf16.mxu0 0
  %2449 = vmatpush1.bf16.msra.mxu0 %v1527
  %2450 = vmatprep.subr.bf16.mxu0 0
  %2451 = vmatpush1.bf16.msra.mxu0 %v1528
  %2452 = vmatprep.subr.bf16.mxu0 0
  %2453 = vmatpush1.bf16.msra.mxu0 %v1529
  %2454 = vmatprep.mubr.bf16.mxu0 %v2408
  %2455 = vmatmul.mubr.bf16.gmra.mrb[0].mxu0 %v2217
  %v2456 = vpop.f32.mrb[0].mxu0
  %v2457 = vadd.f32 0.0, %v2456
  %v2458 = vpop.f32.mrb[0].mxu0
  %v2459 = vpop.f32.mrb[0].mxu0
  %v2460 = vadd.f32 0.0, %v2459
  %v2461 = vpop.f32.mrb[0].mxu0
  %2462 = vdwg.mxu0
  %2463 = vmatprep.subr.bf16.mxu0 0
  %2464 = vmatpush1.bf16.msra.mxu0 %v1530
  %2465 = vmatprep.subr.bf16.mxu0 0
  %2466 = vmatpush1.bf16.msra.mxu0 %v1531
  %2467 = vmatprep.subr.bf16.mxu0 0
  %2468 = vmatpush1.bf16.msra.mxu0 %v1532
  %2469 = vmatprep.subr.bf16.mxu0 0
  %2470 = vmatpush1.bf16.msra.mxu0 %v1533
  %2471 = vmatprep.subr.bf16.mxu0 0
  %2472 = vmatpush1.bf16.msra.mxu0 %v1534
  %2473 = vmatprep.subr.bf16.mxu0 0
  %2474 = vmatpush1.bf16.msra.mxu0 %v1535
  %2475 = vmatprep.subr.bf16.mxu0 0
  %2476 = vmatpush1.bf16.msra.mxu0 %v1536
  %2477 = vmatprep.subr.bf16.mxu0 0
  %2478 = vmatpush1.bf16.msra.mxu0 %v1537
  %2479 = vmatprep.subr.bf16.mxu0 0
  %2480 = vmatpush1.bf16.msra.mxu0 %v1538
  %2481 = vmatprep.subr.bf16.mxu0 0
  %2482 = vmatpush1.bf16.msra.mxu0 %v1539
  %2483 = vmatprep.subr.bf16.mxu0 0
  %2484 = vmatpush1.bf16.msra.mxu0 %v1540
  %2485 = vmatprep.subr.bf16.mxu0 0
  %2486 = vmatpush1.bf16.msra.mxu0 %v1541
  %2487 = vmatprep.subr.bf16.mxu0 0
  %2488 = vmatpush1.bf16.msra.mxu0 %v1542
  %2489 = vmatprep.subr.bf16.mxu0 0
  %2490 = vmatpush1.bf16.msra.mxu0 %v1543
  %2491 = vmatprep.subr.bf16.mxu0 0
  %2492 = vmatpush1.bf16.msra.mxu0 %v1544
  %2493 = vmatprep.subr.bf16.mxu0 0
  %2494 = vmatpush1.bf16.msra.mxu0 %v1545
  %2495 = vmatprep.mubr.bf16.mxu0 %v2412
  %2496 = vmatmul.mubr.bf16.gmra.mrb[0].mxu0 %v2221
  %v2497 = vpop.f32.mrb[0].mxu0
  %v2498 = vadd.f32 %v2457, %v2497
  %v2499 = vpop.f32.mrb[0].mxu0
  %v2500 = vpop.f32.mrb[0].mxu0
  %v2501 = vadd.f32 %v2460, %v2500
  %v2502 = vpop.f32.mrb[0].mxu0
  %2503 = vdwg.mxu0
  %2504 = vmatprep.subr.bf16.mxu0 0
  %2505 = vmatpush1.bf16.msra.mxu0 %v1546
  %2506 = vmatprep.subr.bf16.mxu0 0
  %2507 = vmatpush1.bf16.msra.mxu0 %v1547
  %2508 = vmatprep.subr.bf16.mxu0 0
  %2509 = vmatpush1.bf16.msra.mxu0 %v1548
  %2510 = vmatprep.subr.bf16.mxu0 0
  %2511 = vmatpush1.bf16.msra.mxu0 %v1549
  %2512 = vmatprep.subr.bf16.mxu0 0
  %2513 = vmatpush1.bf16.msra.mxu0 %v1550
  %2514 = vmatprep.subr.bf16.mxu0 0
  %2515 = vmatpush1.bf16.msra.mxu0 %v1551
  %2516 = vmatprep.subr.bf16.mxu0 0
  %2517 = vmatpush1.bf16.msra.mxu0 %v1552
  %2518 = vmatprep.subr.bf16.mxu0 0
  %2519 = vmatpush1.bf16.msra.mxu0 %v1553
  %2520 = vmatprep.subr.bf16.mxu0 0
  %2521 = vmatpush1.bf16.msra.mxu0 %v1554
  %2522 = vmatprep.subr.bf16.mxu0 0
  %2523 = vmatpush1.bf16.msra.mxu0 %v1555
  %2524 = vmatprep.subr.bf16.mxu0 0
  %2525 = vmatpush1.bf16.msra.mxu0 %v1556
  %2526 = vmatprep.subr.bf16.mxu0 0
  %2527 = vmatpush1.bf16.msra.mxu0 %v1557
  %2528 = vmatprep.subr.bf16.mxu0 0
  %2529 = vmatpush1.bf16.msra.mxu0 %v1558
  %2530 = vmatprep.subr.bf16.mxu0 0
  %2531 = vmatpush1.bf16.msra.mxu0 %v1559
  %2532 = vmatprep.subr.bf16.mxu0 0
  %2533 = vmatpush1.bf16.msra.mxu0 %v1560
  %2534 = vmatprep.subr.bf16.mxu0 0
  %2535 = vmatpush1.bf16.msra.mxu0 %v1561
  %2536 = vmatprep.mubr.bf16.mxu0 %v2416
  %2537 = vmatmul.mubr.bf16.gmra.mrb[0].mxu0 %v2225
  %v2538 = vpop.f32.mrb[0].mxu0
  %v2539 = vadd.f32 %v2498, %v2538
  %v2540 = vpop.f32.mrb[0].mxu0
  %v2541 = vpop.f32.mrb[0].mxu0
  %v2542 = vadd.f32 %v2501, %v2541
  %v2543 = vpop.f32.mrb[0].mxu0
  %2544 = vdwg.mxu0
  %2545 = vmatprep.subr.bf16.mxu0 0
  %2546 = vmatpush1.bf16.msra.mxu0 %v1562
  %2547 = vmatprep.subr.bf16.mxu0 0
  %2548 = vmatpush1.bf16.msra.mxu0 %v1563
  %2549 = vmatprep.subr.bf16.mxu0 0
  %2550 = vmatpush1.bf16.msra.mxu0 %v1564
  %2551 = vmatprep.subr.bf16.mxu0 0
  %2552 = vmatpush1.bf16.msra.mxu0 %v1565
  %2553 = vmatprep.subr.bf16.mxu0 0
  %2554 = vmatpush1.bf16.msra.mxu0 %v1566
  %2555 = vmatprep.subr.bf16.mxu0 0
  %2556 = vmatpush1.bf16.msra.mxu0 %v1567
  %2557 = vmatprep.subr.bf16.mxu0 0
  %2558 = vmatpush1.bf16.msra.mxu0 %v1568
  %2559 = vmatprep.subr.bf16.mxu0 0
  %2560 = vmatpush1.bf16.msra.mxu0 %v1569
  %2561 = vmatprep.subr.bf16.mxu0 0
  %2562 = vmatpush1.bf16.msra.mxu0 %v1570
  %2563 = vmatprep.subr.bf16.mxu0 0
  %2564 = vmatpush1.bf16.msra.mxu0 %v1571
  %2565 = vmatprep.subr.bf16.mxu0 0
  %2566 = vmatpush1.bf16.msra.mxu0 %v1572
  %2567 = vmatprep.subr.bf16.mxu0 0
  %2568 = vmatpush1.bf16.msra.mxu0 %v1573
  %2569 = vmatprep.subr.bf16.mxu0 0
  %2570 = vmatpush1.bf16.msra.mxu0 %v1574
  %2571 = vmatprep.subr.bf16.mxu0 0
  %2572 = vmatpush1.bf16.msra.mxu0 %v1575
  %2573 = vmatprep.subr.bf16.mxu0 0
  %2574 = vmatpush1.bf16.msra.mxu0 %v1576
  %2575 = vmatprep.subr.bf16.mxu0 0
  %2576 = vmatpush1.bf16.msra.mxu0 %v1577
  %2577 = vmatprep.mubr.bf16.mxu0 %v2420
  %2578 = vmatmul.mubr.bf16.gmra.mrb[0].mxu0 %v2229
  %v2579 = vpop.f32.mrb[0].mxu0
  %v2580 = vadd.f32 %v2539, %v2579
  %v2581 = vpop.f32.mrb[0].mxu0
  %v2582 = vpop.f32.mrb[0].mxu0
  %v2583 = vadd.f32 %v2542, %v2582
  %v2584 = vpop.f32.mrb[0].mxu0
  %2585 = vdwg.mxu0
  %v2586 = vmax.f32 %v2580, 0.0
  %v2587 = vmax.f32 %v2583, 0.0
  %v2588 = vpack.c.bf16 %v2587, %v2586
  %2590 = vrot.lane.b32.xlu0 %v1068, 64
  %v2591 = vpop.permute.xlu0 %2590
  %2593 = vrot.lane.b32.xlu0 %v1060, 64
  %v2594 = vpop.permute.xlu0 %2593
  %v2596 = vrot.slane %v1072, 1
  %v2597 = vrot.slane %v1068, 1
  %2598 = vrot.lane.b32.xlu0 %v2597, 64
  %v2599 = vpop.permute.xlu0 %2598
  %v2601 = vrot.slane %v1064, 1
  %v2602 = vrot.slane %v1060, 1
  %2603 = vrot.lane.b32.xlu0 %v2602, 64
  %v2604 = vpop.permute.xlu0 %2603
  %v2607 = vsel %vm1097, %v1072, %v2591
  %v2611 = vsel %vm1097, %v1064, %v2594
  %v2615 = vsel %vm1097, %v2596, %v2599
  %v2619 = vsel %vm1097, %v2601, %v2604
  %2621 = vmatprep.subr.bf16.mxu0 0
  %2622 = vmatpush1.bf16.msra.mxu0 %v1514
  %2623 = vmatprep.subr.bf16.mxu0 0
  %2624 = vmatpush1.bf16.msra.mxu0 %v1515
  %2625 = vmatprep.subr.bf16.mxu0 0
  %2626 = vmatpush1.bf16.msra.mxu0 %v1516
  %2627 = vmatprep.subr.bf16.mxu0 0
  %2628 = vmatpush1.bf16.msra.mxu0 %v1517
  %2629 = vmatprep.subr.bf16.mxu0 0
  %2630 = vmatpush1.bf16.msra.mxu0 %v1518
  %2631 = vmatprep.subr.bf16.mxu0 0
  %2632 = vmatpush1.bf16.msra.mxu0 %v1519
  %2633 = vmatprep.subr.bf16.mxu0 0
  %2634 = vmatpush1.bf16.msra.mxu0 %v1520
  %2635 = vmatprep.subr.bf16.mxu0 0
  %2636 = vmatpush1.bf16.msra.mxu0 %v1521
  %2637 = vmatprep.subr.bf16.mxu0 0
  %2638 = vmatpush1.bf16.msra.mxu0 %v1522
  %2639 = vmatprep.subr.bf16.mxu0 0
  %2640 = vmatpush1.bf16.msra.mxu0 %v1523
  %2641 = vmatprep.subr.bf16.mxu0 0
  %2642 = vmatpush1.bf16.msra.mxu0 %v1524
  %2643 = vmatprep.subr.bf16.mxu0 0
  %2644 = vmatpush1.bf16.msra.mxu0 %v1525
  %2645 = vmatprep.subr.bf16.mxu0 0
  %2646 = vmatpush1.bf16.msra.mxu0 %v1526
  %2647 = vmatprep.subr.bf16.mxu0 0
  %2648 = vmatpush1.bf16.msra.mxu0 %v1527
  %2649 = vmatprep.subr.bf16.mxu0 0
  %2650 = vmatpush1.bf16.msra.mxu0 %v1528
  %2651 = vmatprep.subr.bf16.mxu0 0
  %2652 = vmatpush1.bf16.msra.mxu0 %v1529
  %2653 = vmatprep.mubr.bf16.mxu0 %v2607
  %2654 = vmatmul.mubr.bf16.gmra.mrb[0].mxu0 %v2408
  %v2655 = vpop.f32.mrb[0].mxu0
  %v2656 = vadd.f32 0.0, %v2655
  %v2657 = vpop.f32.mrb[0].mxu0
  %v2658 = vpop.f32.mrb[0].mxu0
  %v2659 = vadd.f32 0.0, %v2658
  %v2660 = vpop.f32.mrb[0].mxu0
  %2661 = vdwg.mxu0
  %2662 = vmatprep.subr.bf16.mxu0 0
  %2663 = vmatpush1.bf16.msra.mxu0 %v1530
  %2664 = vmatprep.subr.bf16.mxu0 0
  %2665 = vmatpush1.bf16.msra.mxu0 %v1531
  %2666 = vmatprep.subr.bf16.mxu0 0
  %2667 = vmatpush1.bf16.msra.mxu0 %v1532
  %2668 = vmatprep.subr.bf16.mxu0 0
  %2669 = vmatpush1.bf16.msra.mxu0 %v1533
  %2670 = vmatprep.subr.bf16.mxu0 0
  %2671 = vmatpush1.bf16.msra.mxu0 %v1534
  %2672 = vmatprep.subr.bf16.mxu0 0
  %2673 = vmatpush1.bf16.msra.mxu0 %v1535
  %2674 = vmatprep.subr.bf16.mxu0 0
  %2675 = vmatpush1.bf16.msra.mxu0 %v1536
  %2676 = vmatprep.subr.bf16.mxu0 0
  %2677 = vmatpush1.bf16.msra.mxu0 %v1537
  %2678 = vmatprep.subr.bf16.mxu0 0
  %2679 = vmatpush1.bf16.msra.mxu0 %v1538
  %2680 = vmatprep.subr.bf16.mxu0 0
  %2681 = vmatpush1.bf16.msra.mxu0 %v1539
  %2682 = vmatprep.subr.bf16.mxu0 0
  %2683 = vmatpush1.bf16.msra.mxu0 %v1540
  %2684 = vmatprep.subr.bf16.mxu0 0
  %2685 = vmatpush1.bf16.msra.mxu0 %v1541
  %2686 = vmatprep.subr.bf16.mxu0 0
  %2687 = vmatpush1.bf16.msra.mxu0 %v1542
  %2688 = vmatprep.subr.bf16.mxu0 0
  %2689 = vmatpush1.bf16.msra.mxu0 %v1543
  %2690 = vmatprep.subr.bf16.mxu0 0
  %2691 = vmatpush1.bf16.msra.mxu0 %v1544
  %2692 = vmatprep.subr.bf16.mxu0 0
  %2693 = vmatpush1.bf16.msra.mxu0 %v1545
  %2694 = vmatprep.mubr.bf16.mxu0 %v2611
  %2695 = vmatmul.mubr.bf16.gmra.mrb[0].mxu0 %v2412
  %v2696 = vpop.f32.mrb[0].mxu0
  %v2697 = vadd.f32 %v2656, %v2696
  %v2698 = vpop.f32.mrb[0].mxu0
  %v2699 = vpop.f32.mrb[0].mxu0
  %v2700 = vadd.f32 %v2659, %v2699
  %v2701 = vpop.f32.mrb[0].mxu0
  %2702 = vdwg.mxu0
  %2703 = vmatprep.subr.bf16.mxu0 0
  %2704 = vmatpush1.bf16.msra.mxu0 %v1546
  %2705 = vmatprep.subr.bf16.mxu0 0
  %2706 = vmatpush1.bf16.msra.mxu0 %v1547
  %2707 = vmatprep.subr.bf16.mxu0 0
  %2708 = vmatpush1.bf16.msra.mxu0 %v1548
  %2709 = vmatprep.subr.bf16.mxu0 0
  %2710 = vmatpush1.bf16.msra.mxu0 %v1549
  %2711 = vmatprep.subr.bf16.mxu0 0
  %2712 = vmatpush1.bf16.msra.mxu0 %v1550
  %2713 = vmatprep.subr.bf16.mxu0 0
  %2714 = vmatpush1.bf16.msra.mxu0 %v1551
  %2715 = vmatprep.subr.bf16.mxu0 0
  %2716 = vmatpush1.bf16.msra.mxu0 %v1552
  %2717 = vmatprep.subr.bf16.mxu0 0
  %2718 = vmatpush1.bf16.msra.mxu0 %v1553
  %2719 = vmatprep.subr.bf16.mxu0 0
  %2720 = vmatpush1.bf16.msra.mxu0 %v1554
  %2721 = vmatprep.subr.bf16.mxu0 0
  %2722 = vmatpush1.bf16.msra.mxu0 %v1555
  %2723 = vmatprep.subr.bf16.mxu0 0
  %2724 = vmatpush1.bf16.msra.mxu0 %v1556
  %2725 = vmatprep.subr.bf16.mxu0 0
  %2726 = vmatpush1.bf16.msra.mxu0 %v1557
  %2727 = vmatprep.subr.bf16.mxu0 0
  %2728 = vmatpush1.bf16.msra.mxu0 %v1558
  %2729 = vmatprep.subr.bf16.mxu0 0
  %2730 = vmatpush1.bf16.msra.mxu0 %v1559
  %2731 = vmatprep.subr.bf16.mxu0 0
  %2732 = vmatpush1.bf16.msra.mxu0 %v1560
  %2733 = vmatprep.subr.bf16.mxu0 0
  %2734 = vmatpush1.bf16.msra.mxu0 %v1561
  %2735 = vmatprep.mubr.bf16.mxu0 %v2615
  %2736 = vmatmul.mubr.bf16.gmra.mrb[0].mxu0 %v2416
  %v2737 = vpop.f32.mrb[0].mxu0
  %v2738 = vadd.f32 %v2697, %v2737
  %v2739 = vpop.f32.mrb[0].mxu0
  %v2740 = vpop.f32.mrb[0].mxu0
  %v2741 = vadd.f32 %v2700, %v2740
  %v2742 = vpop.f32.mrb[0].mxu0
  %2743 = vdwg.mxu0
  %2744 = vmatprep.subr.bf16.mxu0 0
  %2745 = vmatpush1.bf16.msra.mxu0 %v1562
  %2746 = vmatprep.subr.bf16.mxu0 0
  %2747 = vmatpush1.bf16.msra.mxu0 %v1563
  %2748 = vmatprep.subr.bf16.mxu0 0
  %2749 = vmatpush1.bf16.msra.mxu0 %v1564
  %2750 = vmatprep.subr.bf16.mxu0 0
  %2751 = vmatpush1.bf16.msra.mxu0 %v1565
  %2752 = vmatprep.subr.bf16.mxu0 0
  %2753 = vmatpush1.bf16.msra.mxu0 %v1566
  %2754 = vmatprep.subr.bf16.mxu0 0
  %2755 = vmatpush1.bf16.msra.mxu0 %v1567
  %2756 = vmatprep.subr.bf16.mxu0 0
  %2757 = vmatpush1.bf16.msra.mxu0 %v1568
  %2758 = vmatprep.subr.bf16.mxu0 0
  %2759 = vmatpush1.bf16.msra.mxu0 %v1569
  %2760 = vmatprep.subr.bf16.mxu0 0
  %2761 = vmatpush1.bf16.msra.mxu0 %v1570
  %2762 = vmatprep.subr.bf16.mxu0 0
  %2763 = vmatpush1.bf16.msra.mxu0 %v1571
  %2764 = vmatprep.subr.bf16.mxu0 0
  %2765 = vmatpush1.bf16.msra.mxu0 %v1572
  %2766 = vmatprep.subr.bf16.mxu0 0
  %2767 = vmatpush1.bf16.msra.mxu0 %v1573
  %2768 = vmatprep.subr.bf16.mxu0 0
  %2769 = vmatpush1.bf16.msra.mxu0 %v1574
  %2770 = vmatprep.subr.bf16.mxu0 0
  %2771 = vmatpush1.bf16.msra.mxu0 %v1575
  %2772 = vmatprep.subr.bf16.mxu0 0
  %2773 = vmatpush1.bf16.msra.mxu0 %v1576
  %2774 = vmatprep.subr.bf16.mxu0 0
  %2775 = vmatpush1.bf16.msra.mxu0 %v1577
  %2776 = vmatprep.mubr.bf16.mxu0 %v2619
  %2777 = vmatmul.mubr.bf16.gmra.mrb[0].mxu0 %v2420
  %v2778 = vpop.f32.mrb[0].mxu0
  %v2779 = vadd.f32 %v2738, %v2778
  %v2780 = vpop.f32.mrb[0].mxu0
  %v2781 = vpop.f32.mrb[0].mxu0
  %v2782 = vadd.f32 %v2741, %v2781
  %v2783 = vpop.f32.mrb[0].mxu0
  %2784 = vdwg.mxu0
  %v2785 = vmax.f32 %v2779, 0.0
  %v2786 = vmax.f32 %v2782, 0.0
  %v2787 = vpack.c.bf16 %v2786, %v2785
  %2788 = vrot.lane.b32.xlu0 %v1072, 64
  %v2789 = vpop.permute.xlu0 %2788
  %2790 = vrot.lane.b32.xlu0 %v1064, 64
  %v2791 = vpop.permute.xlu0 %2790
  %2792 = vrot.lane.b32.xlu0 %v2596, 64
  %v2793 = vpop.permute.xlu0 %2792
  %2794 = vrot.lane.b32.xlu0 %v2601, 64
  %v2795 = vpop.permute.xlu0 %2794
  %v2798 = vsel %vm1097, %v2789, %v1068
  %v2802 = vsel %vm1097, %v2791, %v1060
  %v2806 = vsel %vm1097, %v2793, %v2597
  %v2810 = vsel %vm1097, %v2795, %v2602
  %2812 = vmatprep.subr.bf16.mxu0 0
  %2813 = vmatpush1.bf16.msra.mxu0 %v1514
  %2814 = vmatprep.subr.bf16.mxu0 0
  %2815 = vmatpush1.bf16.msra.mxu0 %v1515
  %2816 = vmatprep.subr.bf16.mxu0 0
  %2817 = vmatpush1.bf16.msra.mxu0 %v1516
  %2818 = vmatprep.subr.bf16.mxu0 0
  %2819 = vmatpush1.bf16.msra.mxu0 %v1517
  %2820 = vmatprep.subr.bf16.mxu0 0
  %2821 = vmatpush1.bf16.msra.mxu0 %v1518
  %2822 = vmatprep.subr.bf16.mxu0 0
  %2823 = vmatpush1.bf16.msra.mxu0 %v1519
  %2824 = vmatprep.subr.bf16.mxu0 0
  %2825 = vmatpush1.bf16.msra.mxu0 %v1520
  %2826 = vmatprep.subr.bf16.mxu0 0
  %2827 = vmatpush1.bf16.msra.mxu0 %v1521
  %2828 = vmatprep.subr.bf16.mxu0 0
  %2829 = vmatpush1.bf16.msra.mxu0 %v1522
  %2830 = vmatprep.subr.bf16.mxu0 0
  %2831 = vmatpush1.bf16.msra.mxu0 %v1523
  %2832 = vmatprep.subr.bf16.mxu0 0
  %2833 = vmatpush1.bf16.msra.mxu0 %v1524
  %2834 = vmatprep.subr.bf16.mxu0 0
  %2835 = vmatpush1.bf16.msra.mxu0 %v1525
  %2836 = vmatprep.subr.bf16.mxu0 0
  %2837 = vmatpush1.bf16.msra.mxu0 %v1526
  %2838 = vmatprep.subr.bf16.mxu0 0
  %2839 = vmatpush1.bf16.msra.mxu0 %v1527
  %2840 = vmatprep.subr.bf16.mxu0 0
  %2841 = vmatpush1.bf16.msra.mxu0 %v1528
  %2842 = vmatprep.subr.bf16.mxu0 0
  %2843 = vmatpush1.bf16.msra.mxu0 %v1529
  %2844 = vmatprep.mubr.bf16.mxu0 %v2798
  %2845 = vmatmul.mubr.bf16.gmra.mrb[0].mxu0 %v2607
  %v2846 = vpop.f32.mrb[0].mxu0
  %v2847 = vadd.f32 0.0, %v2846
  %v2848 = vpop.f32.mrb[0].mxu0
  %v2849 = vpop.f32.mrb[0].mxu0
  %v2850 = vadd.f32 0.0, %v2849
  %v2851 = vpop.f32.mrb[0].mxu0
  %2852 = vdwg.mxu0
  %2853 = vmatprep.subr.bf16.mxu0 0
  %2854 = vmatpush1.bf16.msra.mxu0 %v1530
  %2855 = vmatprep.subr.bf16.mxu0 0
  %2856 = vmatpush1.bf16.msra.mxu0 %v1531
  %2857 = vmatprep.subr.bf16.mxu0 0
  %2858 = vmatpush1.bf16.msra.mxu0 %v1532
  %2859 = vmatprep.subr.bf16.mxu0 0
  %2860 = vmatpush1.bf16.msra.mxu0 %v1533
  %2861 = vmatprep.subr.bf16.mxu0 0
  %2862 = vmatpush1.bf16.msra.mxu0 %v1534
  %2863 = vmatprep.subr.bf16.mxu0 0
  %2864 = vmatpush1.bf16.msra.mxu0 %v1535
  %2865 = vmatprep.subr.bf16.mxu0 0
  %2866 = vmatpush1.bf16.msra.mxu0 %v1536
  %2867 = vmatprep.subr.bf16.mxu0 0
  %2868 = vmatpush1.bf16.msra.mxu0 %v1537
  %2869 = vmatprep.subr.bf16.mxu0 0
  %2870 = vmatpush1.bf16.msra.mxu0 %v1538
  %2871 = vmatprep.subr.bf16.mxu0 0
  %2872 = vmatpush1.bf16.msra.mxu0 %v1539
  %2873 = vmatprep.subr.bf16.mxu0 0
  %2874 = vmatpush1.bf16.msra.mxu0 %v1540
  %2875 = vmatprep.subr.bf16.mxu0 0
  %2876 = vmatpush1.bf16.msra.mxu0 %v1541
  %2877 = vmatprep.subr.bf16.mxu0 0
  %2878 = vmatpush1.bf16.msra.mxu0 %v1542
  %2879 = vmatprep.subr.bf16.mxu0 0
  %2880 = vmatpush1.bf16.msra.mxu0 %v1543
  %2881 = vmatprep.subr.bf16.mxu0 0
  %2882 = vmatpush1.bf16.msra.mxu0 %v1544
  %2883 = vmatprep.subr.bf16.mxu0 0
  %2884 = vmatpush1.bf16.msra.mxu0 %v1545
  %2885 = vmatprep.mubr.bf16.mxu0 %v2802
  %2886 = vmatmul.mubr.bf16.gmra.mrb[0].mxu0 %v2611
  %v2887 = vpop.f32.mrb[0].mxu0
  %v2888 = vadd.f32 %v2847, %v2887
  %v2889 = vpop.f32.mrb[0].mxu0
  %v2890 = vpop.f32.mrb[0].mxu0
  %v2891 = vadd.f32 %v2850, %v2890
  %v2892 = vpop.f32.mrb[0].mxu0
  %2893 = vdwg.mxu0
  %2894 = vmatprep.subr.bf16.mxu0 0
  %2895 = vmatpush1.bf16.msra.mxu0 %v1546
  %2896 = vmatprep.subr.bf16.mxu0 0
  %2897 = vmatpush1.bf16.msra.mxu0 %v1547
  %2898 = vmatprep.subr.bf16.mxu0 0
  %2899 = vmatpush1.bf16.msra.mxu0 %v1548
  %2900 = vmatprep.subr.bf16.mxu0 0
  %2901 = vmatpush1.bf16.msra.mxu0 %v1549
  %2902 = vmatprep.subr.bf16.mxu0 0
  %2903 = vmatpush1.bf16.msra.mxu0 %v1550
  %2904 = vmatprep.subr.bf16.mxu0 0
  %2905 = vmatpush1.bf16.msra.mxu0 %v1551
  %2906 = vmatprep.subr.bf16.mxu0 0
  %2907 = vmatpush1.bf16.msra.mxu0 %v1552
  %2908 = vmatprep.subr.bf16.mxu0 0
  %2909 = vmatpush1.bf16.msra.mxu0 %v1553
  %2910 = vmatprep.subr.bf16.mxu0 0
  %2911 = vmatpush1.bf16.msra.mxu0 %v1554
  %2912 = vmatprep.subr.bf16.mxu0 0
  %2913 = vmatpush1.bf16.msra.mxu0 %v1555
  %2914 = vmatprep.subr.bf16.mxu0 0
  %2915 = vmatpush1.bf16.msra.mxu0 %v1556
  %2916 = vmatprep.subr.bf16.mxu0 0
  %2917 = vmatpush1.bf16.msra.mxu0 %v1557
  %2918 = vmatprep.subr.bf16.mxu0 0
  %2919 = vmatpush1.bf16.msra.mxu0 %v1558
  %2920 = vmatprep.subr.bf16.mxu0 0
  %2921 = vmatpush1.bf16.msra.mxu0 %v1559
  %2922 = vmatprep.subr.bf16.mxu0 0
  %2923 = vmatpush1.bf16.msra.mxu0 %v1560
  %2924 = vmatprep.subr.bf16.mxu0 0
  %2925 = vmatpush1.bf16.msra.mxu0 %v1561
  %2926 = vmatprep.mubr.bf16.mxu0 %v2806
  %2927 = vmatmul.mubr.bf16.gmra.mrb[0].mxu0 %v2615
  %v2928 = vpop.f32.mrb[0].mxu0
  %v2929 = vadd.f32 %v2888, %v2928
  %v2930 = vpop.f32.mrb[0].mxu0
  %v2931 = vpop.f32.mrb[0].mxu0
  %v2932 = vadd.f32 %v2891, %v2931
  %v2933 = vpop.f32.mrb[0].mxu0
  %2934 = vdwg.mxu0
  %2935 = vmatprep.subr.bf16.mxu0 0
  %2936 = vmatpush1.bf16.msra.mxu0 %v1562
  %2937 = vmatprep.subr.bf16.mxu0 0
  %2938 = vmatpush1.bf16.msra.mxu0 %v1563
  %2939 = vmatprep.subr.bf16.mxu0 0
  %2940 = vmatpush1.bf16.msra.mxu0 %v1564
  %2941 = vmatprep.subr.bf16.mxu0 0
  %2942 = vmatpush1.bf16.msra.mxu0 %v1565
  %2943 = vmatprep.subr.bf16.mxu0 0
  %2944 = vmatpush1.bf16.msra.mxu0 %v1566
  %2945 = vmatprep.subr.bf16.mxu0 0
  %2946 = vmatpush1.bf16.msra.mxu0 %v1567
  %2947 = vmatprep.subr.bf16.mxu0 0
  %2948 = vmatpush1.bf16.msra.mxu0 %v1568
  %2949 = vmatprep.subr.bf16.mxu0 0
  %2950 = vmatpush1.bf16.msra.mxu0 %v1569
  %2951 = vmatprep.subr.bf16.mxu0 0
  %2952 = vmatpush1.bf16.msra.mxu0 %v1570
  %2953 = vmatprep.subr.bf16.mxu0 0
  %2954 = vmatpush1.bf16.msra.mxu0 %v1571
  %2955 = vmatprep.subr.bf16.mxu0 0
  %2956 = vmatpush1.bf16.msra.mxu0 %v1572
  %2957 = vmatprep.subr.bf16.mxu0 0
  %2958 = vmatpush1.bf16.msra.mxu0 %v1573
  %2959 = vmatprep.subr.bf16.mxu0 0
  %2960 = vmatpush1.bf16.msra.mxu0 %v1574
  %2961 = vmatprep.subr.bf16.mxu0 0
  %2962 = vmatpush1.bf16.msra.mxu0 %v1575
  %2963 = vmatprep.subr.bf16.mxu0 0
  %2964 = vmatpush1.bf16.msra.mxu0 %v1576
  %2965 = vmatprep.subr.bf16.mxu0 0
  %2966 = vmatpush1.bf16.msra.mxu0 %v1577
  %2967 = vmatprep.mubr.bf16.mxu0 %v2810
  %2968 = vmatmul.mubr.bf16.gmra.mrb[0].mxu0 %v2619
  %v2969 = vpop.f32.mrb[0].mxu0
  %v2970 = vadd.f32 %v2929, %v2969
  %v2971 = vpop.f32.mrb[0].mxu0
  %v2972 = vpop.f32.mrb[0].mxu0
  %v2973 = vadd.f32 %v2932, %v2972
  %v2974 = vpop.f32.mrb[0].mxu0
  %2975 = vdwg.mxu0
  %v2976 = vmax.f32 %v2970, 0.0
  %v2977 = vmax.f32 %v2973, 0.0
  %v2978 = vpack.c.bf16 %v2977, %v2976
  %2980 = vrot.lane.b32.xlu0 %v2007, 32
  %v2981 = vpop.permute.xlu0 %2980
  %2983 = vrot.lane.b32.xlu0 %v2198, 64
  %v2984 = vpop.permute.xlu0 %2983
  %2986 = vrot.lane.b32.xlu0 %v2397, 96
  %v2987 = vpop.permute.xlu0 %2986
  %2989 = vrot.lane.b32.xlu0 %v2787, 32
  %v2990 = vpop.permute.xlu0 %2989
  %2992 = vrot.lane.b32.xlu0 %v2978, 64
  %v2993 = vpop.permute.xlu0 %2992
  %vm2994 = vcmask 261120
  %v2997 = vsel %vm2994, %v1808, %v2981
  %v2999 = vsel %vm1097, %v2997, %v2984
  %vm3000 = vcmask 785408
  %v3002 = vsel %vm3000, %v2999, %v2987
  %v3006 = vsel %vm2994, %v2588, %v2990
  %v3008 = vsel %vm1097, %v3006, %v2993
  %v3009 = vld [vmem:[%s3] sm:$0xff]
  %v3010 = vld [vmem:[%s3 + $0x8] sm:$0xff]
  %v3011 = vld [vmem:[%s3 + $0x10] sm:$0xff]
  %v3012 = vld [vmem:[%s3 + $0x18] sm:$0xff]
  %v3013 = vld [vmem:[%s3 + $0x20] sm:$0xff]
  %v3014 = vld [vmem:[%s3 + $0x28] sm:$0xff]
  %v3015 = vld [vmem:[%s3 + $0x30] sm:$0xff]
  %v3016 = vld [vmem:[%s3 + $0x38] sm:$0xff]
  %v3017 = vld [vmem:[%s3 + $0x40] sm:$0xff]
  %v3018 = vld [vmem:[%s3 + $0x48] sm:$0xff]
  %v3019 = vld [vmem:[%s3 + $0x50] sm:$0xff]
  %v3020 = vld [vmem:[%s3 + $0x58] sm:$0xff]
  %v3021 = vld [vmem:[%s3 + $0x60] sm:$0xff]
  %v3022 = vld [vmem:[%s3 + $0x68] sm:$0xff]
  %v3023 = vld [vmem:[%s3 + $0x70] sm:$0xff]
  %v3024 = vld [vmem:[%s3 + $0x78] sm:$0xff]
  %v3025 = vld [vmem:[%s3 + $0x80] sm:$0xff]
  %v3026 = vld [vmem:[%s3 + $0x88] sm:$0xff]
  %v3027 = vld [vmem:[%s3 + $0x90] sm:$0xff]
  %v3028 = vld [vmem:[%s3 + $0x98] sm:$0xff]
  %v3029 = vld [vmem:[%s3 + $0xa0] sm:$0xff]
  %v3030 = vld [vmem:[%s3 + $0xa8] sm:$0xff]
  %v3031 = vld [vmem:[%s3 + $0xb0] sm:$0xff]
  %v3032 = vld [vmem:[%s3 + $0xb8] sm:$0xff]
  %v3033 = vld [vmem:[%s3 + $0xc0] sm:$0xff]
  %v3034 = vld [vmem:[%s3 + $0xc8] sm:$0xff]
  %v3035 = vld [vmem:[%s3 + $0xd0] sm:$0xff]
  %v3036 = vld [vmem:[%s3 + $0xd8] sm:$0xff]
  %v3037 = vld [vmem:[%s3 + $0xe0] sm:$0xff]
  %v3038 = vld [vmem:[%s3 + $0xe8] sm:$0xff]
  %v3039 = vld [vmem:[%s3 + $0xf0] sm:$0xff]
  %v3040 = vld [vmem:[%s3 + $0xf8] sm:$0xff]
  %v3041 = vld [vmem:[%s3 + $0x100] sm:$0xff]
  %v3042 = vld [vmem:[%s3 + $0x108] sm:$0xff]
  %v3043 = vld [vmem:[%s3 + $0x110] sm:$0xff]
  %v3044 = vld [vmem:[%s3 + $0x118] sm:$0xff]
  %v3045 = vld [vmem:[%s3 + $0x120] sm:$0xff]
  %v3046 = vld [vmem:[%s3 + $0x128] sm:$0xff]
  %v3047 = vld [vmem:[%s3 + $0x130] sm:$0xff]
  %v3048 = vld [vmem:[%s3 + $0x138] sm:$0xff]
  %v3049 = vld [vmem:[%s3 + $0x140] sm:$0xff]
  %v3050 = vld [vmem:[%s3 + $0x148] sm:$0xff]
  %v3051 = vld [vmem:[%s3 + $0x150] sm:$0xff]
  %v3052 = vld [vmem:[%s3 + $0x158] sm:$0xff]
  %v3053 = vld [vmem:[%s3 + $0x160] sm:$0xff]
  %v3054 = vld [vmem:[%s3 + $0x168] sm:$0xff]
  %v3055 = vld [vmem:[%s3 + $0x170] sm:$0xff]
  %v3056 = vld [vmem:[%s3 + $0x178] sm:$0xff]
  %v3057 = vld [vmem:[%s3 + $0x180] sm:$0xff]
  %v3058 = vld [vmem:[%s3 + $0x188] sm:$0xff]
  %v3059 = vld [vmem:[%s3 + $0x190] sm:$0xff]
  %v3060 = vld [vmem:[%s3 + $0x198] sm:$0xff]
  %v3061 = vld [vmem:[%s3 + $0x1a0] sm:$0xff]
  %v3062 = vld [vmem:[%s3 + $0x1a8] sm:$0xff]
  %v3063 = vld [vmem:[%s3 + $0x1b0] sm:$0xff]
  %v3064 = vld [vmem:[%s3 + $0x1b8] sm:$0xff]
  %v3067 = vrot.slane %v3002, 1
  %v3068 = vrot.slane %v3008, 1
  %v3098 = vunpack.c.l.b16 %v3037
  %v3099 = vunpack.c.h.b16 %v3037
  %v3100 = vunpack.c.l.b16 %v3038
  %v3101 = vunpack.c.h.b16 %v3038
  %v3102 = vunpack.c.l.b16 %v3039
  %v3103 = vunpack.c.h.b16 %v3039
  %v3104 = vunpack.c.l.b16 %v3040
  %v3105 = vunpack.c.h.b16 %v3040
  %v3106 = vunpack.c.l.b16 %v3041
  %v3107 = vunpack.c.h.b16 %v3041
  %v3108 = vunpack.c.l.b16 %v3042
  %v3109 = vunpack.c.h.b16 %v3042
  %v3110 = vunpack.c.l.b16 %v3043
  %v3111 = vunpack.c.h.b16 %v3043
  %v3112 = vunpack.c.l.b16 %v3044
  %v3113 = vunpack.c.h.b16 %v3044
  %v3114 = vunpack.c.l.b16 %v3045
  %v3115 = vunpack.c.h.b16 %v3045
  %v3116 = vunpack.c.l.b16 %v3046
  %v3117 = vunpack.c.h.b16 %v3046
  %v3118 = vunpack.c.l.b16 %v3047
  %v3119 = vunpack.c.h.b16 %v3047
  %v3120 = vunpack.c.l.b16 %v3048
  %v3121 = vunpack.c.h.b16 %v3048
  %v3122 = vunpack.c.l.b16 %v3049
  %v3123 = vunpack.c.h.b16 %v3049
  %v3124 = vunpack.c.l.b16 %v3050
  %v3125 = vunpack.c.h.b16 %v3050
  %v3126 = vunpack.c.l.b16 %v3051
  %v3127 = vunpack.c.h.b16 %v3051
  %v3128 = vunpack.c.l.b16 %v3052
  %v3129 = vunpack.c.h.b16 %v3052
  %v3130 = vunpack.c.l.b16 %v3053
  %v3131 = vunpack.c.h.b16 %v3053
  %v3132 = vunpack.c.l.b16 %v3054
  %v3133 = vunpack.c.h.b16 %v3054
  %v3134 = vunpack.c.l.b16 %v3055
  %v3135 = vunpack.c.h.b16 %v3055
  %v3136 = vunpack.c.l.b16 %v3056
  %v3137 = vunpack.c.h.b16 %v3056
  %v3138 = vunpack.c.l.b16 %v3057
  %v3139 = vunpack.c.h.b16 %v3057
  %v3140 = vunpack.c.l.b16 %v3058
  %v3141 = vunpack.c.h.b16 %v3058
  %v3142 = vunpack.c.l.b16 %v3059
  %v3143 = vunpack.c.h.b16 %v3059
  %v3144 = vunpack.c.l.b16 %v3060
  %v3145 = vunpack.c.h.b16 %v3060
  %v3146 = vunpack.c.l.b16 %v3061
  %v3147 = vunpack.c.h.b16 %v3061
  %v3148 = vunpack.c.l.b16 %v3062
  %v3149 = vunpack.c.h.b16 %v3062
  %v3150 = vunpack.c.l.b16 %v3063
  %v3151 = vunpack.c.h.b16 %v3063
  %v3152 = vunpack.c.l.b16 %v3064
  %v3153 = vunpack.c.h.b16 %v3064
  %v3154 = vpack.c.b16 %v3100, %v3098
  %v3155 = vpack.c.b16 %v3101, %v3099
  %v3156 = vpack.c.b16 %v3104, %v3102
  %v3157 = vpack.c.b16 %v3105, %v3103
  %v3158 = vpack.c.b16 %v3108, %v3106
  %v3159 = vpack.c.b16 %v3109, %v3107
  %v3160 = vpack.c.b16 %v3112, %v3110
  %v3161 = vpack.c.b16 %v3113, %v3111
  %v3162 = vpack.c.b16 %v3116, %v3114
  %v3163 = vpack.c.b16 %v3117, %v3115
  %v3164 = vpack.c.b16 %v3120, %v3118
  %v3165 = vpack.c.b16 %v3121, %v3119
  %v3166 = vpack.c.b16 %v3124, %v3122
  %v3167 = vpack.c.b16 %v3125, %v3123
  %v3168 = vpack.c.b16 %v3128, %v3126
  %v3169 = vpack.c.b16 %v3129, %v3127
  %v3170 = vpack.c.b16 %v3132, %v3130
  %v3171 = vpack.c.b16 %v3133, %v3131
  %v3172 = vpack.c.b16 %v3136, %v3134
  %v3173 = vpack.c.b16 %v3137, %v3135
  %v3174 = vpack.c.b16 %v3140, %v3138
  %v3175 = vpack.c.b16 %v3141, %v3139
  %v3176 = vpack.c.b16 %v3144, %v3142
  %v3177 = vpack.c.b16 %v3145, %v3143
  %v3178 = vpack.c.b16 %v3148, %v3146
  %v3179 = vpack.c.b16 %v3149, %v3147
  %v3180 = vpack.c.b16 %v3152, %v3150
  %v3181 = vpack.c.b16 %v3153, %v3151
  %v3211 = vsel %vm3000, %v3068, 0
  %3213 = vmatprep.subr.bf16.mxu0 %v3155
  %3214 = vmatpush1.bf16.msra.mxu0 %v3154
  %3215 = vmatprep.subr.bf16.mxu0 %v3157
  %3216 = vmatpush1.bf16.msra.mxu0 %v3156
  %3217 = vmatprep.subr.bf16.mxu0 %v3159
  %3218 = vmatpush1.bf16.msra.mxu0 %v3158
  %3219 = vmatprep.subr.bf16.mxu0 %v3161
  %3220 = vmatpush1.bf16.msra.mxu0 %v3160
  %3221 = vmatprep.subr.bf16.mxu0 %v3163
  %3222 = vmatpush1.bf16.msra.mxu0 %v3162
  %3223 = vmatprep.subr.bf16.mxu0 %v3165
  %3224 = vmatpush1.bf16.msra.mxu0 %v3164
  %3225 = vmatprep.subr.bf16.mxu0 %v3167
  %3226 = vmatpush1.bf16.msra.mxu0 %v3166
  %3227 = vmatprep.subr.bf16.mxu0 %v3169
  %3228 = vmatpush1.bf16.msra.mxu0 %v3168
  %3229 = vmatprep.subr.bf16.mxu0 %v3171
  %3230 = vmatpush1.bf16.msra.mxu0 %v3170
  %3231 = vmatprep.subr.bf16.mxu0 %v3173
  %3232 = vmatpush1.bf16.msra.mxu0 %v3172
  %3233 = vmatprep.subr.bf16.mxu0 %v3175
  %3234 = vmatpush1.bf16.msra.mxu0 %v3174
  %3235 = vmatprep.subr.bf16.mxu0 %v3177
  %3236 = vmatpush1.bf16.msra.mxu0 %v3176
  %3237 = vmatprep.subr.bf16.mxu0 %v3179
  %3238 = vmatpush1.bf16.msra.mxu0 %v3178
  %3239 = vmatprep.subr.bf16.mxu0 %v3181
  %3240 = vmatpush1.bf16.msra.mxu0 %v3180
  %3241 = vmatprep.subr.bf16.mxu0 0
  %3242 = vmatpush1.bf16.msra.mxu0 0
  %3243 = vmatprep.subr.bf16.mxu0 0
  %3244 = vmatpush1.bf16.msra.mxu0 0
  %3245 = vmatprep.mubr.bf16.mxu0 %v3211
  %3246 = vmatmul.mubr.bf16.gmra.mrb[0].mxu0 %v3067
  %v3247 = vpop.f32.mrb[0].mxu0
  %v3248 = vadd.f32 0.0, %v3247
  %v3249 = vpop.f32.mrb[0].mxu0
  %v3250 = vadd.f32 0.0, %v3249
  %v3251 = vpop.f32.mrb[0].mxu0
  %v3252 = vpop.f32.mrb[0].mxu0
  %3253 = vdwg.mxu0
  %v3282 = vunpack.c.l.b16 %v3009
  %v3283 = vunpack.c.h.b16 %v3009
  %v3284 = vunpack.c.l.b16 %v3010
  %v3285 = vunpack.c.h.b16 %v3010
  %v3286 = vunpack.c.l.b16 %v3011
  %v3287 = vunpack.c.h.b16 %v3011
  %v3288 = vunpack.c.l.b16 %v3012
  %v3289 = vunpack.c.h.b16 %v3012
  %v3290 = vunpack.c.l.b16 %v3013
  %v3291 = vunpack.c.h.b16 %v3013
  %v3292 = vunpack.c.l.b16 %v3014
  %v3293 = vunpack.c.h.b16 %v3014
  %v3294 = vunpack.c.l.b16 %v3015
  %v3295 = vunpack.c.h.b16 %v3015
  %v3296 = vunpack.c.l.b16 %v3016
  %v3297 = vunpack.c.h.b16 %v3016
  %v3298 = vunpack.c.l.b16 %v3017
  %v3299 = vunpack.c.h.b16 %v3017
  %v3300 = vunpack.c.l.b16 %v3018
  %v3301 = vunpack.c.h.b16 %v3018
  %v3302 = vunpack.c.l.b16 %v3019
  %v3303 = vunpack.c.h.b16 %v3019
  %v3304 = vunpack.c.l.b16 %v3020
  %v3305 = vunpack.c.h.b16 %v3020
  %v3306 = vunpack.c.l.b16 %v3021
  %v3307 = vunpack.c.h.b16 %v3021
  %v3308 = vunpack.c.l.b16 %v3022
  %v3309 = vunpack.c.h.b16 %v3022
  %v3310 = vunpack.c.l.b16 %v3023
  %v3311 = vunpack.c.h.b16 %v3023
  %v3312 = vunpack.c.l.b16 %v3024
  %v3313 = vunpack.c.h.b16 %v3024
  %v3314 = vunpack.c.l.b16 %v3025
  %v3315 = vunpack.c.h.b16 %v3025
  %v3316 = vunpack.c.l.b16 %v3026
  %v3317 = vunpack.c.h.b16 %v3026
  %v3318 = vunpack.c.l.b16 %v3027
  %v3319 = vunpack.c.h.b16 %v3027
  %v3320 = vunpack.c.l.b16 %v3028
  %v3321 = vunpack.c.h.b16 %v3028
  %v3322 = vunpack.c.l.b16 %v3029
  %v3323 = vunpack.c.h.b16 %v3029
  %v3324 = vunpack.c.l.b16 %v3030
  %v3325 = vunpack.c.h.b16 %v3030
  %v3326 = vunpack.c.l.b16 %v3031
  %v3327 = vunpack.c.h.b16 %v3031
  %v3328 = vunpack.c.l.b16 %v3032
  %v3329 = vunpack.c.h.b16 %v3032
  %v3330 = vunpack.c.l.b16 %v3033
  %v3331 = vunpack.c.h.b16 %v3033
  %v3332 = vunpack.c.l.b16 %v3034
  %v3333 = vunpack.c.h.b16 %v3034
  %v3334 = vunpack.c.l.b16 %v3035
  %v3335 = vunpack.c.h.b16 %v3035
  %v3336 = vunpack.c.l.b16 %v3036
  %v3337 = vunpack.c.h.b16 %v3036
  %v3338 = vpack.c.b16 %v3284, %v3282
  %v3339 = vpack.c.b16 %v3285, %v3283
  %v3340 = vpack.c.b16 %v3288, %v3286
  %v3341 = vpack.c.b16 %v3289, %v3287
  %v3342 = vpack.c.b16 %v3292, %v3290
  %v3343 = vpack.c.b16 %v3293, %v3291
  %v3344 = vpack.c.b16 %v3296, %v3294
  %v3345 = vpack.c.b16 %v3297, %v3295
  %v3346 = vpack.c.b16 %v3300, %v3298
  %v3347 = vpack.c.b16 %v3301, %v3299
  %v3348 = vpack.c.b16 %v3304, %v3302
  %v3349 = vpack.c.b16 %v3305, %v3303
  %v3350 = vpack.c.b16 %v3308, %v3306
  %v3351 = vpack.c.b16 %v3309, %v3307
  %v3352 = vpack.c.b16 %v3312, %v3310
  %v3353 = vpack.c.b16 %v3313, %v3311
  %v3354 = vpack.c.b16 %v3316, %v3314
  %v3355 = vpack.c.b16 %v3317, %v3315
  %v3356 = vpack.c.b16 %v3320, %v3318
  %v3357 = vpack.c.b16 %v3321, %v3319
  %v3358 = vpack.c.b16 %v3324, %v3322
  %v3359 = vpack.c.b16 %v3325, %v3323
  %v3360 = vpack.c.b16 %v3328, %v3326
  %v3361 = vpack.c.b16 %v3329, %v3327
  %v3362 = vpack.c.b16 %v3332, %v3330
  %v3363 = vpack.c.b16 %v3333, %v3331
  %v3364 = vpack.c.b16 %v3336, %v3334
  %v3365 = vpack.c.b16 %v3337, %v3335
  %v3394 = vsel %vm3000, %v3008, 0
  %3396 = vmatprep.subr.bf16.mxu0 %v3339
  %3397 = vmatpush1.bf16.msra.mxu0 %v3338
  %3398 = vmatprep.subr.bf16.mxu0 %v3341
  %3399 = vmatpush1.bf16.msra.mxu0 %v3340
  %3400 = vmatprep.subr.bf16.mxu0 %v3343
  %3401 = vmatpush1.bf16.msra.mxu0 %v3342
  %3402 = vmatprep.subr.bf16.mxu0 %v3345
  %3403 = vmatpush1.bf16.msra.mxu0 %v3344
  %3404 = vmatprep.subr.bf16.mxu0 %v3347
  %3405 = vmatpush1.bf16.msra.mxu0 %v3346
  %3406 = vmatprep.subr.bf16.mxu0 %v3349
  %3407 = vmatpush1.bf16.msra.mxu0 %v3348
  %3408 = vmatprep.subr.bf16.mxu0 %v3351
  %3409 = vmatpush1.bf16.msra.mxu0 %v3350
  %3410 = vmatprep.subr.bf16.mxu0 %v3353
  %3411 = vmatpush1.bf16.msra.mxu0 %v3352
  %3412 = vmatprep.subr.bf16.mxu0 %v3355
  %3413 = vmatpush1.bf16.msra.mxu0 %v3354
  %3414 = vmatprep.subr.bf16.mxu0 %v3357
  %3415 = vmatpush1.bf16.msra.mxu0 %v3356
  %3416 = vmatprep.subr.bf16.mxu0 %v3359
  %3417 = vmatpush1.bf16.msra.mxu0 %v3358
  %3418 = vmatprep.subr.bf16.mxu0 %v3361
  %3419 = vmatpush1.bf16.msra.mxu0 %v3360
  %3420 = vmatprep.subr.bf16.mxu0 %v3363
  %3421 = vmatpush1.bf16.msra.mxu0 %v3362
  %3422 = vmatprep.subr.bf16.mxu0 %v3365
  %3423 = vmatpush1.bf16.msra.mxu0 %v3364
  %3424 = vmatprep.subr.bf16.mxu0 0
  %3425 = vmatpush1.bf16.msra.mxu0 0
  %3426 = vmatprep.subr.bf16.mxu0 0
  %3427 = vmatpush1.bf16.msra.mxu0 0
  %3428 = vmatprep.mubr.bf16.mxu0 %v3394
  %3429 = vmatmul.mubr.bf16.gmra.mrb[0].mxu0 %v3002
  %v3430 = vpop.f32.mrb[0].mxu0
  %v3431 = vadd.f32 %v3248, %v3430
  %v3432 = vpop.f32.mrb[0].mxu0
  %v3433 = vadd.f32 %v3250, %v3432
  %v3434 = vpop.f32.mrb[0].mxu0
  %v3435 = vpop.f32.mrb[0].mxu0
  %3436 = vdwg.mxu0
  %v3437 = vld [vmem:[%s3 + $0x1c0] sm:$0xff]
  %v3438 = vld [vmem:[%s3 + $0x1c8] sm:$0xff]
  %v3439 = vld [vmem:[%s3 + $0x1d0] sm:$0xff]
  %v3440 = vld [vmem:[%s3 + $0x1d8] sm:$0xff]
  %v3441 = vld [vmem:[%s3 + $0x1e0] sm:$0xff]
  %v3442 = vld [vmem:[%s3 + $0x1e8] sm:$0xff]
  %v3443 = vld [vmem:[%s3 + $0x1f0] sm:$0xff]
  %v3444 = vld [vmem:[%s3 + $0x1f8] sm:$0xff]
  %v3445 = vld [vmem:[%s3 + $0x200] sm:$0xff]
  %v3446 = vld [vmem:[%s3 + $0x208] sm:$0xff]
  %v3447 = vld [vmem:[%s3 + $0x210] sm:$0xff]
  %v3448 = vld [vmem:[%s3 + $0x218] sm:$0xff]
  %v3449 = vld [vmem:[%s3 + $0x220] sm:$0xff]
  %v3450 = vld [vmem:[%s3 + $0x228] sm:$0xff]
  %v3451 = vld [vmem:[%s3 + $0x230] sm:$0xff]
  %v3452 = vld [vmem:[%s3 + $0x238] sm:$0xff]
  %v3453 = vld [vmem:[%s3 + $0x240] sm:$0xff]
  %v3454 = vld [vmem:[%s3 + $0x248] sm:$0xff]
  %v3455 = vld [vmem:[%s3 + $0x250] sm:$0xff]
  %v3456 = vld [vmem:[%s3 + $0x258] sm:$0xff]
  %v3457 = vld [vmem:[%s3 + $0x260] sm:$0xff]
  %v3458 = vld [vmem:[%s3 + $0x268] sm:$0xff]
  %v3459 = vld [vmem:[%s3 + $0x270] sm:$0xff]
  %v3460 = vld [vmem:[%s3 + $0x278] sm:$0xff]
  %v3461 = vld [vmem:[%s3 + $0x280] sm:$0xff]
  %v3462 = vld [vmem:[%s3 + $0x288] sm:$0xff]
  %v3463 = vld [vmem:[%s3 + $0x290] sm:$0xff]
  %v3464 = vld [vmem:[%s3 + $0x298] sm:$0xff]
  %v3465 = vrot.slane %v3002, 2
  %v3466 = vrot.slane %v3008, 2
  %v3496 = vunpack.c.l.b16 %v3437
  %v3497 = vunpack.c.h.b16 %v3437
  %v3498 = vunpack.c.l.b16 %v3438
  %v3499 = vunpack.c.h.b16 %v3438
  %v3500 = vunpack.c.l.b16 %v3439
  %v3501 = vunpack.c.h.b16 %v3439
  %v3502 = vunpack.c.l.b16 %v3440
  %v3503 = vunpack.c.h.b16 %v3440
  %v3504 = vunpack.c.l.b16 %v3441
  %v3505 = vunpack.c.h.b16 %v3441
  %v3506 = vunpack.c.l.b16 %v3442
  %v3507 = vunpack.c.h.b16 %v3442
  %v3508 = vunpack.c.l.b16 %v3443
  %v3509 = vunpack.c.h.b16 %v3443
  %v3510 = vunpack.c.l.b16 %v3444
  %v3511 = vunpack.c.h.b16 %v3444
  %v3512 = vunpack.c.l.b16 %v3445
  %v3513 = vunpack.c.h.b16 %v3445
  %v3514 = vunpack.c.l.b16 %v3446
  %v3515 = vunpack.c.h.b16 %v3446
  %v3516 = vunpack.c.l.b16 %v3447
  %v3517 = vunpack.c.h.b16 %v3447
  %v3518 = vunpack.c.l.b16 %v3448
  %v3519 = vunpack.c.h.b16 %v3448
  %v3520 = vunpack.c.l.b16 %v3449
  %v3521 = vunpack.c.h.b16 %v3449
  %v3522 = vunpack.c.l.b16 %v3450
  %v3523 = vunpack.c.h.b16 %v3450
  %v3524 = vunpack.c.l.b16 %v3451
  %v3525 = vunpack.c.h.b16 %v3451
  %v3526 = vunpack.c.l.b16 %v3452
  %v3527 = vunpack.c.h.b16 %v3452
  %v3528 = vunpack.c.l.b16 %v3453
  %v3529 = vunpack.c.h.b16 %v3453
  %v3530 = vunpack.c.l.b16 %v3454
  %v3531 = vunpack.c.h.b16 %v3454
  %v3532 = vunpack.c.l.b16 %v3455
  %v3533 = vunpack.c.h.b16 %v3455
  %v3534 = vunpack.c.l.b16 %v3456
  %v3535 = vunpack.c.h.b16 %v3456
  %v3536 = vunpack.c.l.b16 %v3457
  %v3537 = vunpack.c.h.b16 %v3457
  %v3538 = vunpack.c.l.b16 %v3458
  %v3539 = vunpack.c.h.b16 %v3458
  %v3540 = vunpack.c.l.b16 %v3459
  %v3541 = vunpack.c.h.b16 %v3459
  %v3542 = vunpack.c.l.b16 %v3460
  %v3543 = vunpack.c.h.b16 %v3460
  %v3544 = vunpack.c.l.b16 %v3461
  %v3545 = vunpack.c.h.b16 %v3461
  %v3546 = vunpack.c.l.b16 %v3462
  %v3547 = vunpack.c.h.b16 %v3462
  %v3548 = vunpack.c.l.b16 %v3463
  %v3549 = vunpack.c.h.b16 %v3463
  %v3550 = vunpack.c.l.b16 %v3464
  %v3551 = vunpack.c.h.b16 %v3464
  %v3552 = vpack.c.b16 %v3498, %v3496
  %v3553 = vpack.c.b16 %v3499, %v3497
  %v3554 = vpack.c.b16 %v3502, %v3500
  %v3555 = vpack.c.b16 %v3503, %v3501
  %v3556 = vpack.c.b16 %v3506, %v3504
  %v3557 = vpack.c.b16 %v3507, %v3505
  %v3558 = vpack.c.b16 %v3510, %v3508
  %v3559 = vpack.c.b16 %v3511, %v3509
  %v3560 = vpack.c.b16 %v3514, %v3512
  %v3561 = vpack.c.b16 %v3515, %v3513
  %v3562 = vpack.c.b16 %v3518, %v3516
  %v3563 = vpack.c.b16 %v3519, %v3517
  %v3564 = vpack.c.b16 %v3522, %v3520
  %v3565 = vpack.c.b16 %v3523, %v3521
  %v3566 = vpack.c.b16 %v3526, %v3524
  %v3567 = vpack.c.b16 %v3527, %v3525
  %v3568 = vpack.c.b16 %v3530, %v3528
  %v3569 = vpack.c.b16 %v3531, %v3529
  %v3570 = vpack.c.b16 %v3534, %v3532
  %v3571 = vpack.c.b16 %v3535, %v3533
  %v3572 = vpack.c.b16 %v3538, %v3536
  %v3573 = vpack.c.b16 %v3539, %v3537
  %v3574 = vpack.c.b16 %v3542, %v3540
  %v3575 = vpack.c.b16 %v3543, %v3541
  %v3576 = vpack.c.b16 %v3546, %v3544
  %v3577 = vpack.c.b16 %v3547, %v3545
  %v3578 = vpack.c.b16 %v3550, %v3548
  %v3579 = vpack.c.b16 %v3551, %v3549
  %v3609 = vsel %vm3000, %v3466, 0
  %3611 = vmatprep.subr.bf16.mxu0 %v3553
  %3612 = vmatpush1.bf16.msra.mxu0 %v3552
  %3613 = vmatprep.subr.bf16.mxu0 %v3555
  %3614 = vmatpush1.bf16.msra.mxu0 %v3554
  %3615 = vmatprep.subr.bf16.mxu0 %v3557
  %3616 = vmatpush1.bf16.msra.mxu0 %v3556
  %3617 = vmatprep.subr.bf16.mxu0 %v3559
  %3618 = vmatpush1.bf16.msra.mxu0 %v3558
  %3619 = vmatprep.subr.bf16.mxu0 %v3561
  %3620 = vmatpush1.bf16.msra.mxu0 %v3560
  %3621 = vmatprep.subr.bf16.mxu0 %v3563
  %3622 = vmatpush1.bf16.msra.mxu0 %v3562
  %3623 = vmatprep.subr.bf16.mxu0 %v3565
  %3624 = vmatpush1.bf16.msra.mxu0 %v3564
  %3625 = vmatprep.subr.bf16.mxu0 %v3567
  %3626 = vmatpush1.bf16.msra.mxu0 %v3566
  %3627 = vmatprep.subr.bf16.mxu0 %v3569
  %3628 = vmatpush1.bf16.msra.mxu0 %v3568
  %3629 = vmatprep.subr.bf16.mxu0 %v3571
  %3630 = vmatpush1.bf16.msra.mxu0 %v3570
  %3631 = vmatprep.subr.bf16.mxu0 %v3573
  %3632 = vmatpush1.bf16.msra.mxu0 %v3572
  %3633 = vmatprep.subr.bf16.mxu0 %v3575
  %3634 = vmatpush1.bf16.msra.mxu0 %v3574
  %3635 = vmatprep.subr.bf16.mxu0 %v3577
  %3636 = vmatpush1.bf16.msra.mxu0 %v3576
  %3637 = vmatprep.subr.bf16.mxu0 %v3579
  %3638 = vmatpush1.bf16.msra.mxu0 %v3578
  %3639 = vmatprep.subr.bf16.mxu0 0
  %3640 = vmatpush1.bf16.msra.mxu0 0
  %3641 = vmatprep.subr.bf16.mxu0 0
  %3642 = vmatpush1.bf16.msra.mxu0 0
  %3643 = vmatprep.mubr.bf16.mxu0 %v3609
  %3644 = vmatmul.mubr.bf16.gmra.mrb[0].mxu0 %v3465
  %v3645 = vpop.f32.mrb[0].mxu0
  %v3646 = vadd.f32 0.0, %v3645
  %v3647 = vpop.f32.mrb[0].mxu0
  %v3648 = vadd.f32 0.0, %v3647
  %v3649 = vpop.f32.mrb[0].mxu0
  %v3650 = vpop.f32.mrb[0].mxu0
  %3651 = vdwg.mxu0
  %v3652 = vadd.f32 %v3431, %v3646
  %v3653 = vadd.f32 %v3433, %v3648
  %v3654 = vld [vmem:[%s3 + $0x2a0] sm:$0xff]
  %v3655 = vld [vmem:[%s3 + $0x2a8] sm:$0xff]
  %v3656 = vld [vmem:[%s3 + $0x2b0] sm:$0xff]
  %v3657 = vld [vmem:[%s3 + $0x2b8] sm:$0xff]
  %v3658 = vld [vmem:[%s3 + $0x2c0] sm:$0xff]
  %v3659 = vld [vmem:[%s3 + $0x2c8] sm:$0xff]
  %v3660 = vld [vmem:[%s3 + $0x2d0] sm:$0xff]
  %v3661 = vld [vmem:[%s3 + $0x2d8] sm:$0xff]
  %v3662 = vld [vmem:[%s3 + $0x2e0] sm:$0xff]
  %v3663 = vld [vmem:[%s3 + $0x2e8] sm:$0xff]
  %v3664 = vld [vmem:[%s3 + $0x2f0] sm:$0xff]
  %v3665 = vld [vmem:[%s3 + $0x2f8] sm:$0xff]
  %v3666 = vld [vmem:[%s3 + $0x300] sm:$0xff]
  %v3667 = vld [vmem:[%s3 + $0x308] sm:$0xff]
  %v3668 = vld [vmem:[%s3 + $0x310] sm:$0xff]
  %v3669 = vld [vmem:[%s3 + $0x318] sm:$0xff]
  %v3670 = vld [vmem:[%s3 + $0x320] sm:$0xff]
  %v3671 = vld [vmem:[%s3 + $0x328] sm:$0xff]
  %v3672 = vld [vmem:[%s3 + $0x330] sm:$0xff]
  %v3673 = vld [vmem:[%s3 + $0x338] sm:$0xff]
  %v3674 = vld [vmem:[%s3 + $0x340] sm:$0xff]
  %v3675 = vld [vmem:[%s3 + $0x348] sm:$0xff]
  %v3676 = vld [vmem:[%s3 + $0x350] sm:$0xff]
  %v3677 = vld [vmem:[%s3 + $0x358] sm:$0xff]
  %v3678 = vld [vmem:[%s3 + $0x360] sm:$0xff]
  %v3679 = vld [vmem:[%s3 + $0x368] sm:$0xff]
  %v3680 = vld [vmem:[%s3 + $0x370] sm:$0xff]
  %v3681 = vld [vmem:[%s3 + $0x378] sm:$0xff]
  %v3682 = vrot.slane %v3002, 3
  %v3683 = vrot.slane %v3008, 3
  %v3713 = vunpack.c.l.b16 %v3654
  %v3714 = vunpack.c.h.b16 %v3654
  %v3715 = vunpack.c.l.b16 %v3655
  %v3716 = vunpack.c.h.b16 %v3655
  %v3717 = vunpack.c.l.b16 %v3656
  %v3718 = vunpack.c.h.b16 %v3656
  %v3719 = vunpack.c.l.b16 %v3657
  %v3720 = vunpack.c.h.b16 %v3657
  %v3721 = vunpack.c.l.b16 %v3658
  %v3722 = vunpack.c.h.b16 %v3658
  %v3723 = vunpack.c.l.b16 %v3659
  %v3724 = vunpack.c.h.b16 %v3659
  %v3725 = vunpack.c.l.b16 %v3660
  %v3726 = vunpack.c.h.b16 %v3660
  %v3727 = vunpack.c.l.b16 %v3661
  %v3728 = vunpack.c.h.b16 %v3661
  %v3729 = vunpack.c.l.b16 %v3662
  %v3730 = vunpack.c.h.b16 %v3662
  %v3731 = vunpack.c.l.b16 %v3663
  %v3732 = vunpack.c.h.b16 %v3663
  %v3733 = vunpack.c.l.b16 %v3664
  %v3734 = vunpack.c.h.b16 %v3664
  %v3735 = vunpack.c.l.b16 %v3665
  %v3736 = vunpack.c.h.b16 %v3665
  %v3737 = vunpack.c.l.b16 %v3666
  %v3738 = vunpack.c.h.b16 %v3666
  %v3739 = vunpack.c.l.b16 %v3667
  %v3740 = vunpack.c.h.b16 %v3667
  %v3741 = vunpack.c.l.b16 %v3668
  %v3742 = vunpack.c.h.b16 %v3668
  %v3743 = vunpack.c.l.b16 %v3669
  %v3744 = vunpack.c.h.b16 %v3669
  %v3745 = vunpack.c.l.b16 %v3670
  %v3746 = vunpack.c.h.b16 %v3670
  %v3747 = vunpack.c.l.b16 %v3671
  %v3748 = vunpack.c.h.b16 %v3671
  %v3749 = vunpack.c.l.b16 %v3672
  %v3750 = vunpack.c.h.b16 %v3672
  %v3751 = vunpack.c.l.b16 %v3673
  %v3752 = vunpack.c.h.b16 %v3673
  %v3753 = vunpack.c.l.b16 %v3674
  %v3754 = vunpack.c.h.b16 %v3674
  %v3755 = vunpack.c.l.b16 %v3675
  %v3756 = vunpack.c.h.b16 %v3675
  %v3757 = vunpack.c.l.b16 %v3676
  %v3758 = vunpack.c.h.b16 %v3676
  %v3759 = vunpack.c.l.b16 %v3677
  %v3760 = vunpack.c.h.b16 %v3677
  %v3761 = vunpack.c.l.b16 %v3678
  %v3762 = vunpack.c.h.b16 %v3678
  %v3763 = vunpack.c.l.b16 %v3679
  %v3764 = vunpack.c.h.b16 %v3679
  %v3765 = vunpack.c.l.b16 %v3680
  %v3766 = vunpack.c.h.b16 %v3680
  %v3767 = vunpack.c.l.b16 %v3681
  %v3768 = vunpack.c.h.b16 %v3681
  %v3769 = vpack.c.b16 %v3715, %v3713
  %v3770 = vpack.c.b16 %v3716, %v3714
  %v3771 = vpack.c.b16 %v3719, %v3717
  %v3772 = vpack.c.b16 %v3720, %v3718
  %v3773 = vpack.c.b16 %v3723, %v3721
  %v3774 = vpack.c.b16 %v3724, %v3722
  %v3775 = vpack.c.b16 %v3727, %v3725
  %v3776 = vpack.c.b16 %v3728, %v3726
  %v3777 = vpack.c.b16 %v3731, %v3729
  %v3778 = vpack.c.b16 %v3732, %v3730
  %v3779 = vpack.c.b16 %v3735, %v3733
  %v3780 = vpack.c.b16 %v3736, %v3734
  %v3781 = vpack.c.b16 %v3739, %v3737
  %v3782 = vpack.c.b16 %v3740, %v3738
  %v3783 = vpack.c.b16 %v3743, %v3741
  %v3784 = vpack.c.b16 %v3744, %v3742
  %v3785 = vpack.c.b16 %v3747, %v3745
  %v3786 = vpack.c.b16 %v3748, %v3746
  %v3787 = vpack.c.b16 %v3751, %v3749
  %v3788 = vpack.c.b16 %v3752, %v3750
  %v3789 = vpack.c.b16 %v3755, %v3753
  %v3790 = vpack.c.b16 %v3756, %v3754
  %v3791 = vpack.c.b16 %v3759, %v3757
  %v3792 = vpack.c.b16 %v3760, %v3758
  %v3793 = vpack.c.b16 %v3763, %v3761
  %v3794 = vpack.c.b16 %v3764, %v3762
  %v3795 = vpack.c.b16 %v3767, %v3765
  %v3796 = vpack.c.b16 %v3768, %v3766
  %v3826 = vsel %vm3000, %v3683, 0
  %3828 = vmatprep.subr.bf16.mxu0 %v3770
  %3829 = vmatpush1.bf16.msra.mxu0 %v3769
  %3830 = vmatprep.subr.bf16.mxu0 %v3772
  %3831 = vmatpush1.bf16.msra.mxu0 %v3771
  %3832 = vmatprep.subr.bf16.mxu0 %v3774
  %3833 = vmatpush1.bf16.msra.mxu0 %v3773
  %3834 = vmatprep.subr.bf16.mxu0 %v3776
  %3835 = vmatpush1.bf16.msra.mxu0 %v3775
  %3836 = vmatprep.subr.bf16.mxu0 %v3778
  %3837 = vmatpush1.bf16.msra.mxu0 %v3777
  %3838 = vmatprep.subr.bf16.mxu0 %v3780
  %3839 = vmatpush1.bf16.msra.mxu0 %v3779
  %3840 = vmatprep.subr.bf16.mxu0 %v3782
  %3841 = vmatpush1.bf16.msra.mxu0 %v3781
  %3842 = vmatprep.subr.bf16.mxu0 %v3784
  %3843 = vmatpush1.bf16.msra.mxu0 %v3783
  %3844 = vmatprep.subr.bf16.mxu0 %v3786
  %3845 = vmatpush1.bf16.msra.mxu0 %v3785
  %3846 = vmatprep.subr.bf16.mxu0 %v3788
  %3847 = vmatpush1.bf16.msra.mxu0 %v3787
  %3848 = vmatprep.subr.bf16.mxu0 %v3790
  %3849 = vmatpush1.bf16.msra.mxu0 %v3789
  %3850 = vmatprep.subr.bf16.mxu0 %v3792
  %3851 = vmatpush1.bf16.msra.mxu0 %v3791
  %3852 = vmatprep.subr.bf16.mxu0 %v3794
  %3853 = vmatpush1.bf16.msra.mxu0 %v3793
  %3854 = vmatprep.subr.bf16.mxu0 %v3796
  %3855 = vmatpush1.bf16.msra.mxu0 %v3795
  %3856 = vmatprep.subr.bf16.mxu0 0
  %3857 = vmatpush1.bf16.msra.mxu0 0
  %3858 = vmatprep.subr.bf16.mxu0 0
  %3859 = vmatpush1.bf16.msra.mxu0 0
  %3860 = vmatprep.mubr.bf16.mxu0 %v3826
  %3861 = vmatmul.mubr.bf16.gmra.mrb[0].mxu0 %v3682
  %v3862 = vpop.f32.mrb[0].mxu0
  %v3863 = vadd.f32 0.0, %v3862
  %v3864 = vpop.f32.mrb[0].mxu0
  %v3865 = vadd.f32 0.0, %v3864
  %v3866 = vpop.f32.mrb[0].mxu0
  %v3867 = vpop.f32.mrb[0].mxu0
  %3868 = vdwg.mxu0
  %v3869 = vadd.f32 %v3652, %v3863
  %v3870 = vadd.f32 %v3653, %v3865
  %v3871 = vld [vmem:[%s3 + $0x380] sm:$0xff]
  %v3872 = vld [vmem:[%s3 + $0x388] sm:$0xff]
  %v3873 = vld [vmem:[%s3 + $0x390] sm:$0xff]
  %v3874 = vld [vmem:[%s3 + $0x398] sm:$0xff]
  %v3875 = vld [vmem:[%s3 + $0x3a0] sm:$0xff]
  %v3876 = vld [vmem:[%s3 + $0x3a8] sm:$0xff]
  %v3877 = vld [vmem:[%s3 + $0x3b0] sm:$0xff]
  %v3878 = vld [vmem:[%s3 + $0x3b8] sm:$0xff]
  %v3879 = vld [vmem:[%s3 + $0x3c0] sm:$0xff]
  %v3880 = vld [vmem:[%s3 + $0x3c8] sm:$0xff]
  %v3881 = vld [vmem:[%s3 + $0x3d0] sm:$0xff]
  %v3882 = vld [vmem:[%s3 + $0x3d8] sm:$0xff]
  %v3883 = vld [vmem:[%s3 + $0x3e0] sm:$0xff]
  %v3884 = vld [vmem:[%s3 + $0x3e8] sm:$0xff]
  %v3885 = vld [vmem:[%s3 + $0x3f0] sm:$0xff]
  %v3886 = vld [vmem:[%s3 + $0x3f8] sm:$0xff]
  %v3887 = vld [vmem:[%s3 + $0x400] sm:$0xff]
  %v3888 = vld [vmem:[%s3 + $0x408] sm:$0xff]
  %v3889 = vld [vmem:[%s3 + $0x410] sm:$0xff]
  %v3890 = vld [vmem:[%s3 + $0x418] sm:$0xff]
  %v3891 = vld [vmem:[%s3 + $0x420] sm:$0xff]
  %v3892 = vld [vmem:[%s3 + $0x428] sm:$0xff]
  %v3893 = vld [vmem:[%s3 + $0x430] sm:$0xff]
  %v3894 = vld [vmem:[%s3 + $0x438] sm:$0xff]
  %v3895 = vld [vmem:[%s3 + $0x440] sm:$0xff]
  %v3896 = vld [vmem:[%s3 + $0x448] sm:$0xff]
  %v3897 = vld [vmem:[%s3 + $0x450] sm:$0xff]
  %v3898 = vld [vmem:[%s3 + $0x458] sm:$0xff]
  %v3899 = vrot.slane %v3002, 4
  %v3900 = vrot.slane %v3008, 4
  %v3930 = vunpack.c.l.b16 %v3871
  %v3931 = vunpack.c.h.b16 %v3871
  %v3932 = vunpack.c.l.b16 %v3872
  %v3933 = vunpack.c.h.b16 %v3872
  %v3934 = vunpack.c.l.b16 %v3873
  %v3935 = vunpack.c.h.b16 %v3873
  %v3936 = vunpack.c.l.b16 %v3874
  %v3937 = vunpack.c.h.b16 %v3874
  %v3938 = vunpack.c.l.b16 %v3875
  %v3939 = vunpack.c.h.b16 %v3875
  %v3940 = vunpack.c.l.b16 %v3876
  %v3941 = vunpack.c.h.b16 %v3876
  %v3942 = vunpack.c.l.b16 %v3877
  %v3943 = vunpack.c.h.b16 %v3877
  %v3944 = vunpack.c.l.b16 %v3878
  %v3945 = vunpack.c.h.b16 %v3878
  %v3946 = vunpack.c.l.b16 %v3879
  %v3947 = vunpack.c.h.b16 %v3879
  %v3948 = vunpack.c.l.b16 %v3880
  %v3949 = vunpack.c.h.b16 %v3880
  %v3950 = vunpack.c.l.b16 %v3881
  %v3951 = vunpack.c.h.b16 %v3881
  %v3952 = vunpack.c.l.b16 %v3882
  %v3953 = vunpack.c.h.b16 %v3882
  %v3954 = vunpack.c.l.b16 %v3883
  %v3955 = vunpack.c.h.b16 %v3883
  %v3956 = vunpack.c.l.b16 %v3884
  %v3957 = vunpack.c.h.b16 %v3884
  %v3958 = vunpack.c.l.b16 %v3885
  %v3959 = vunpack.c.h.b16 %v3885
  %v3960 = vunpack.c.l.b16 %v3886
  %v3961 = vunpack.c.h.b16 %v3886
  %v3962 = vunpack.c.l.b16 %v3887
  %v3963 = vunpack.c.h.b16 %v3887
  %v3964 = vunpack.c.l.b16 %v3888
  %v3965 = vunpack.c.h.b16 %v3888
  %v3966 = vunpack.c.l.b16 %v3889
  %v3967 = vunpack.c.h.b16 %v3889
  %v3968 = vunpack.c.l.b16 %v3890
  %v3969 = vunpack.c.h.b16 %v3890
  %v3970 = vunpack.c.l.b16 %v3891
  %v3971 = vunpack.c.h.b16 %v3891
  %v3972 = vunpack.c.l.b16 %v3892
  %v3973 = vunpack.c.h.b16 %v3892
  %v3974 = vunpack.c.l.b16 %v3893
  %v3975 = vunpack.c.h.b16 %v3893
  %v3976 = vunpack.c.l.b16 %v3894
  %v3977 = vunpack.c.h.b16 %v3894
  %v3978 = vunpack.c.l.b16 %v3895
  %v3979 = vunpack.c.h.b16 %v3895
  %v3980 = vunpack.c.l.b16 %v3896
  %v3981 = vunpack.c.h.b16 %v3896
  %v3982 = vunpack.c.l.b16 %v3897
  %v3983 = vunpack.c.h.b16 %v3897
  %v3984 = vunpack.c.l.b16 %v3898
  %v3985 = vunpack.c.h.b16 %v3898
  %v3986 = vpack.c.b16 %v3932, %v3930
  %v3987 = vpack.c.b16 %v3933, %v3931
  %v3988 = vpack.c.b16 %v3936, %v3934
  %v3989 = vpack.c.b16 %v3937, %v3935
  %v3990 = vpack.c.b16 %v3940, %v3938
  %v3991 = vpack.c.b16 %v3941, %v3939
  %v3992 = vpack.c.b16 %v3944, %v3942
  %v3993 = vpack.c.b16 %v3945, %v3943
  %v3994 = vpack.c.b16 %v3948, %v3946
  %v3995 = vpack.c.b16 %v3949, %v3947
  %v3996 = vpack.c.b16 %v3952, %v3950
  %v3997 = vpack.c.b16 %v3953, %v3951
  %v3998 = vpack.c.b16 %v3956, %v3954
  %v3999 = vpack.c.b16 %v3957, %v3955
  %v4000 = vpack.c.b16 %v3960, %v3958
  %v4001 = vpack.c.b16 %v3961, %v3959
  %v4002 = vpack.c.b16 %v3964, %v3962
  %v4003 = vpack.c.b16 %v3965, %v3963
  %v4004 = vpack.c.b16 %v3968, %v3966
  %v4005 = vpack.c.b16 %v3969, %v3967
  %v4006 = vpack.c.b16 %v3972, %v3970
  %v4007 = vpack.c.b16 %v3973, %v3971
  %v4008 = vpack.c.b16 %v3976, %v3974
  %v4009 = vpack.c.b16 %v3977, %v3975
  %v4010 = vpack.c.b16 %v3980, %v3978
  %v4011 = vpack.c.b16 %v3981, %v3979
  %v4012 = vpack.c.b16 %v3984, %v3982
  %v4013 = vpack.c.b16 %v3985, %v3983
  %v4043 = vsel %vm3000, %v3900, 0
  %4045 = vmatprep.subr.bf16.mxu0 %v3987
  %4046 = vmatpush1.bf16.msra.mxu0 %v3986
  %4047 = vmatprep.subr.bf16.mxu0 %v3989
  %4048 = vmatpush1.bf16.msra.mxu0 %v3988
  %4049 = vmatprep.subr.bf16.mxu0 %v3991
  %4050 = vmatpush1.bf16.msra.mxu0 %v3990
  %4051 = vmatprep.subr.bf16.mxu0 %v3993
  %4052 = vmatpush1.bf16.msra.mxu0 %v3992
  %4053 = vmatprep.subr.bf16.mxu0 %v3995
  %4054 = vmatpush1.bf16.msra.mxu0 %v3994
  %4055 = vmatprep.subr.bf16.mxu0 %v3997
  %4056 = vmatpush1.bf16.msra.mxu0 %v3996
  %4057 = vmatprep.subr.bf16.mxu0 %v3999
  %4058 = vmatpush1.bf16.msra.mxu0 %v3998
  %4059 = vmatprep.subr.bf16.mxu0 %v4001
  %4060 = vmatpush1.bf16.msra.mxu0 %v4000
  %4061 = vmatprep.subr.bf16.mxu0 %v4003
  %4062 = vmatpush1.bf16.msra.mxu0 %v4002
  %4063 = vmatprep.subr.bf16.mxu0 %v4005
  %4064 = vmatpush1.bf16.msra.mxu0 %v4004
  %4065 = vmatprep.subr.bf16.mxu0 %v4007
  %4066 = vmatpush1.bf16.msra.mxu0 %v4006
  %4067 = vmatprep.subr.bf16.mxu0 %v4009
  %4068 = vmatpush1.bf16.msra.mxu0 %v4008
  %4069 = vmatprep.subr.bf16.mxu0 %v4011
  %4070 = vmatpush1.bf16.msra.mxu0 %v4010
  %4071 = vmatprep.subr.bf16.mxu0 %v4013
  %4072 = vmatpush1.bf16.msra.mxu0 %v4012
  %4073 = vmatprep.subr.bf16.mxu0 0
  %4074 = vmatpush1.bf16.msra.mxu0 0
  %4075 = vmatprep.subr.bf16.mxu0 0
  %4076 = vmatpush1.bf16.msra.mxu0 0
  %4077 = vmatprep.mubr.bf16.mxu0 %v4043
  %4078 = vmatmul.mubr.bf16.gmra.mrb[0].mxu0 %v3899
  %v4079 = vpop.f32.mrb[0].mxu0
  %v4080 = vadd.f32 0.0, %v4079
  %v4081 = vpop.f32.mrb[0].mxu0
  %v4082 = vadd.f32 0.0, %v4081
  %v4083 = vpop.f32.mrb[0].mxu0
  %v4084 = vpop.f32.mrb[0].mxu0
  %4085 = vdwg.mxu0
  %v4086 = vadd.f32 %v3869, %v4080
  %v4087 = vadd.f32 %v3870, %v4082
  %v4088 = vld [vmem:[%s3 + $0x460] sm:$0xff]
  %v4089 = vld [vmem:[%s3 + $0x468] sm:$0xff]
  %v4090 = vld [vmem:[%s3 + $0x470] sm:$0xff]
  %v4091 = vld [vmem:[%s3 + $0x478] sm:$0xff]
  %v4092 = vld [vmem:[%s3 + $0x480] sm:$0xff]
  %v4093 = vld [vmem:[%s3 + $0x488] sm:$0xff]
  %v4094 = vld [vmem:[%s3 + $0x490] sm:$0xff]
  %v4095 = vld [vmem:[%s3 + $0x498] sm:$0xff]
  %v4096 = vld [vmem:[%s3 + $0x4a0] sm:$0xff]
  %v4097 = vld [vmem:[%s3 + $0x4a8] sm:$0xff]
  %v4098 = vld [vmem:[%s3 + $0x4b0] sm:$0xff]
  %v4099 = vld [vmem:[%s3 + $0x4b8] sm:$0xff]
  %v4100 = vld [vmem:[%s3 + $0x4c0] sm:$0xff]
  %v4101 = vld [vmem:[%s3 + $0x4c8] sm:$0xff]
  %v4102 = vld [vmem:[%s3 + $0x4d0] sm:$0xff]
  %v4103 = vld [vmem:[%s3 + $0x4d8] sm:$0xff]
  %v4104 = vld [vmem:[%s3 + $0x4e0] sm:$0xff]
  %v4105 = vld [vmem:[%s3 + $0x4e8] sm:$0xff]
  %v4106 = vld [vmem:[%s3 + $0x4f0] sm:$0xff]
  %v4107 = vld [vmem:[%s3 + $0x4f8] sm:$0xff]
  %v4108 = vld [vmem:[%s3 + $0x500] sm:$0xff]
  %v4109 = vld [vmem:[%s3 + $0x508] sm:$0xff]
  %v4110 = vld [vmem:[%s3 + $0x510] sm:$0xff]
  %v4111 = vld [vmem:[%s3 + $0x518] sm:$0xff]
  %v4112 = vld [vmem:[%s3 + $0x520] sm:$0xff]
  %v4113 = vld [vmem:[%s3 + $0x528] sm:$0xff]
  %v4114 = vld [vmem:[%s3 + $0x530] sm:$0xff]
  %v4115 = vld [vmem:[%s3 + $0x538] sm:$0xff]
  %v4116 = vrot.slane %v3002, 5
  %v4117 = vrot.slane %v3008, 5
  %v4147 = vunpack.c.l.b16 %v4088
  %v4148 = vunpack.c.h.b16 %v4088
  %v4149 = vunpack.c.l.b16 %v4089
  %v4150 = vunpack.c.h.b16 %v4089
  %v4151 = vunpack.c.l.b16 %v4090
  %v4152 = vunpack.c.h.b16 %v4090
  %v4153 = vunpack.c.l.b16 %v4091
  %v4154 = vunpack.c.h.b16 %v4091
  %v4155 = vunpack.c.l.b16 %v4092
  %v4156 = vunpack.c.h.b16 %v4092
  %v4157 = vunpack.c.l.b16 %v4093
  %v4158 = vunpack.c.h.b16 %v4093
  %v4159 = vunpack.c.l.b16 %v4094
  %v4160 = vunpack.c.h.b16 %v4094
  %v4161 = vunpack.c.l.b16 %v4095
  %v4162 = vunpack.c.h.b16 %v4095
  %v4163 = vunpack.c.l.b16 %v4096
  %v4164 = vunpack.c.h.b16 %v4096
  %v4165 = vunpack.c.l.b16 %v4097
  %v4166 = vunpack.c.h.b16 %v4097
  %v4167 = vunpack.c.l.b16 %v4098
  %v4168 = vunpack.c.h.b16 %v4098
  %v4169 = vunpack.c.l.b16 %v4099
  %v4170 = vunpack.c.h.b16 %v4099
  %v4171 = vunpack.c.l.b16 %v4100
  %v4172 = vunpack.c.h.b16 %v4100
  %v4173 = vunpack.c.l.b16 %v4101
  %v4174 = vunpack.c.h.b16 %v4101
  %v4175 = vunpack.c.l.b16 %v4102
  %v4176 = vunpack.c.h.b16 %v4102
  %v4177 = vunpack.c.l.b16 %v4103
  %v4178 = vunpack.c.h.b16 %v4103
  %v4179 = vunpack.c.l.b16 %v4104
  %v4180 = vunpack.c.h.b16 %v4104
  %v4181 = vunpack.c.l.b16 %v4105
  %v4182 = vunpack.c.h.b16 %v4105
  %v4183 = vunpack.c.l.b16 %v4106
  %v4184 = vunpack.c.h.b16 %v4106
  %v4185 = vunpack.c.l.b16 %v4107
  %v4186 = vunpack.c.h.b16 %v4107
  %v4187 = vunpack.c.l.b16 %v4108
  %v4188 = vunpack.c.h.b16 %v4108
  %v4189 = vunpack.c.l.b16 %v4109
  %v4190 = vunpack.c.h.b16 %v4109
  %v4191 = vunpack.c.l.b16 %v4110
  %v4192 = vunpack.c.h.b16 %v4110
  %v4193 = vunpack.c.l.b16 %v4111
  %v4194 = vunpack.c.h.b16 %v4111
  %v4195 = vunpack.c.l.b16 %v4112
  %v4196 = vunpack.c.h.b16 %v4112
  %v4197 = vunpack.c.l.b16 %v4113
  %v4198 = vunpack.c.h.b16 %v4113
  %v4199 = vunpack.c.l.b16 %v4114
  %v4200 = vunpack.c.h.b16 %v4114
  %v4201 = vunpack.c.l.b16 %v4115
  %v4202 = vunpack.c.h.b16 %v4115
  %v4203 = vpack.c.b16 %v4149, %v4147
  %v4204 = vpack.c.b16 %v4150, %v4148
  %v4205 = vpack.c.b16 %v4153, %v4151
  %v4206 = vpack.c.b16 %v4154, %v4152
  %v4207 = vpack.c.b16 %v4157, %v4155
  %v4208 = vpack.c.b16 %v4158, %v4156
  %v4209 = vpack.c.b16 %v4161, %v4159
  %v4210 = vpack.c.b16 %v4162, %v4160
  %v4211 = vpack.c.b16 %v4165, %v4163
  %v4212 = vpack.c.b16 %v4166, %v4164
  %v4213 = vpack.c.b16 %v4169, %v4167
  %v4214 = vpack.c.b16 %v4170, %v4168
  %v4215 = vpack.c.b16 %v4173, %v4171
  %v4216 = vpack.c.b16 %v4174, %v4172
  %v4217 = vpack.c.b16 %v4177, %v4175
  %v4218 = vpack.c.b16 %v4178, %v4176
  %v4219 = vpack.c.b16 %v4181, %v4179
  %v4220 = vpack.c.b16 %v4182, %v4180
  %v4221 = vpack.c.b16 %v4185, %v4183
  %v4222 = vpack.c.b16 %v4186, %v4184
  %v4223 = vpack.c.b16 %v4189, %v4187
  %v4224 = vpack.c.b16 %v4190, %v4188
  %v4225 = vpack.c.b16 %v4193, %v4191
  %v4226 = vpack.c.b16 %v4194, %v4192
  %v4227 = vpack.c.b16 %v4197, %v4195
  %v4228 = vpack.c.b16 %v4198, %v4196
  %v4229 = vpack.c.b16 %v4201, %v4199
  %v4230 = vpack.c.b16 %v4202, %v4200
  %v4260 = vsel %vm3000, %v4117, 0
  %4262 = vmatprep.subr.bf16.mxu0 %v4204
  %4263 = vmatpush1.bf16.msra.mxu0 %v4203
  %4264 = vmatprep.subr.bf16.mxu0 %v4206
  %4265 = vmatpush1.bf16.msra.mxu0 %v4205
  %4266 = vmatprep.subr.bf16.mxu0 %v4208
  %4267 = vmatpush1.bf16.msra.mxu0 %v4207
  %4268 = vmatprep.subr.bf16.mxu0 %v4210
  %4269 = vmatpush1.bf16.msra.mxu0 %v4209
  %4270 = vmatprep.subr.bf16.mxu0 %v4212
  %4271 = vmatpush1.bf16.msra.mxu0 %v4211
  %4272 = vmatprep.subr.bf16.mxu0 %v4214
  %4273 = vmatpush1.bf16.msra.mxu0 %v4213
  %4274 = vmatprep.subr.bf16.mxu0 %v4216
  %4275 = vmatpush1.bf16.msra.mxu0 %v4215
  %4276 = vmatprep.subr.bf16.mxu0 %v4218
  %4277 = vmatpush1.bf16.msra.mxu0 %v4217
  %4278 = vmatprep.subr.bf16.mxu0 %v4220
  %4279 = vmatpush1.bf16.msra.mxu0 %v4219
  %4280 = vmatprep.subr.bf16.mxu0 %v4222
  %4281 = vmatpush1.bf16.msra.mxu0 %v4221
  %4282 = vmatprep.subr.bf16.mxu0 %v4224
  %4283 = vmatpush1.bf16.msra.mxu0 %v4223
  %4284 = vmatprep.subr.bf16.mxu0 %v4226
  %4285 = vmatpush1.bf16.msra.mxu0 %v4225
  %4286 = vmatprep.subr.bf16.mxu0 %v4228
  %4287 = vmatpush1.bf16.msra.mxu0 %v4227
  %4288 = vmatprep.subr.bf16.mxu0 %v4230
  %4289 = vmatpush1.bf16.msra.mxu0 %v4229
  %4290 = vmatprep.subr.bf16.mxu0 0
  %4291 = vmatpush1.bf16.msra.mxu0 0
  %4292 = vmatprep.subr.bf16.mxu0 0
  %4293 = vmatpush1.bf16.msra.mxu0 0
  %4294 = vmatprep.mubr.bf16.mxu0 %v4260
  %4295 = vmatmul.mubr.bf16.gmra.mrb[0].mxu0 %v4116
  %v4296 = vpop.f32.mrb[0].mxu0
  %v4297 = vadd.f32 0.0, %v4296
  %v4298 = vpop.f32.mrb[0].mxu0
  %v4299 = vadd.f32 0.0, %v4298
  %v4300 = vpop.f32.mrb[0].mxu0
  %v4301 = vpop.f32.mrb[0].mxu0
  %4302 = vdwg.mxu0
  %v4303 = vadd.f32 %v4086, %v4297
  %v4304 = vadd.f32 %v4087, %v4299
  %v4305 = vld [vmem:[%s3 + $0x540] sm:$0xff]
  %v4306 = vld [vmem:[%s3 + $0x548] sm:$0xff]
  %v4307 = vld [vmem:[%s3 + $0x550] sm:$0xff]
  %v4308 = vld [vmem:[%s3 + $0x558] sm:$0xff]
  %v4309 = vld [vmem:[%s3 + $0x560] sm:$0xff]
  %v4310 = vld [vmem:[%s3 + $0x568] sm:$0xff]
  %v4311 = vld [vmem:[%s3 + $0x570] sm:$0xff]
  %v4312 = vld [vmem:[%s3 + $0x578] sm:$0xff]
  %v4313 = vld [vmem:[%s3 + $0x580] sm:$0xff]
  %v4314 = vld [vmem:[%s3 + $0x588] sm:$0xff]
  %v4315 = vld [vmem:[%s3 + $0x590] sm:$0xff]
  %v4316 = vld [vmem:[%s3 + $0x598] sm:$0xff]
  %v4317 = vld [vmem:[%s3 + $0x5a0] sm:$0xff]
  %v4318 = vld [vmem:[%s3 + $0x5a8] sm:$0xff]
  %v4319 = vld [vmem:[%s3 + $0x5b0] sm:$0xff]
  %v4320 = vld [vmem:[%s3 + $0x5b8] sm:$0xff]
  %v4321 = vld [vmem:[%s3 + $0x5c0] sm:$0xff]
  %v4322 = vld [vmem:[%s3 + $0x5c8] sm:$0xff]
  %v4323 = vld [vmem:[%s3 + $0x5d0] sm:$0xff]
  %v4324 = vld [vmem:[%s3 + $0x5d8] sm:$0xff]
  %v4325 = vld [vmem:[%s3 + $0x5e0] sm:$0xff]
  %v4326 = vld [vmem:[%s3 + $0x5e8] sm:$0xff]
  %v4327 = vld [vmem:[%s3 + $0x5f0] sm:$0xff]
  %v4328 = vld [vmem:[%s3 + $0x5f8] sm:$0xff]
  %v4329 = vld [vmem:[%s3 + $0x600] sm:$0xff]
  %v4330 = vld [vmem:[%s3 + $0x608] sm:$0xff]
  %v4331 = vld [vmem:[%s3 + $0x610] sm:$0xff]
  %v4332 = vld [vmem:[%s3 + $0x618] sm:$0xff]
  %v4333 = vrot.slane %v3002, 6
  %v4334 = vrot.slane %v3008, 6
  %v4364 = vunpack.c.l.b16 %v4305
  %v4365 = vunpack.c.h.b16 %v4305
  %v4366 = vunpack.c.l.b16 %v4306
  %v4367 = vunpack.c.h.b16 %v4306
  %v4368 = vunpack.c.l.b16 %v4307
  %v4369 = vunpack.c.h.b16 %v4307
  %v4370 = vunpack.c.l.b16 %v4308
  %v4371 = vunpack.c.h.b16 %v4308
  %v4372 = vunpack.c.l.b16 %v4309
  %v4373 = vunpack.c.h.b16 %v4309
  %v4374 = vunpack.c.l.b16 %v4310
  %v4375 = vunpack.c.h.b16 %v4310
  %v4376 = vunpack.c.l.b16 %v4311
  %v4377 = vunpack.c.h.b16 %v4311
  %v4378 = vunpack.c.l.b16 %v4312
  %v4379 = vunpack.c.h.b16 %v4312
  %v4380 = vunpack.c.l.b16 %v4313
  %v4381 = vunpack.c.h.b16 %v4313
  %v4382 = vunpack.c.l.b16 %v4314
  %v4383 = vunpack.c.h.b16 %v4314
  %v4384 = vunpack.c.l.b16 %v4315
  %v4385 = vunpack.c.h.b16 %v4315
  %v4386 = vunpack.c.l.b16 %v4316
  %v4387 = vunpack.c.h.b16 %v4316
  %v4388 = vunpack.c.l.b16 %v4317
  %v4389 = vunpack.c.h.b16 %v4317
  %v4390 = vunpack.c.l.b16 %v4318
  %v4391 = vunpack.c.h.b16 %v4318
  %v4392 = vunpack.c.l.b16 %v4319
  %v4393 = vunpack.c.h.b16 %v4319
  %v4394 = vunpack.c.l.b16 %v4320
  %v4395 = vunpack.c.h.b16 %v4320
  %v4396 = vunpack.c.l.b16 %v4321
  %v4397 = vunpack.c.h.b16 %v4321
  %v4398 = vunpack.c.l.b16 %v4322
  %v4399 = vunpack.c.h.b16 %v4322
  %v4400 = vunpack.c.l.b16 %v4323
  %v4401 = vunpack.c.h.b16 %v4323
  %v4402 = vunpack.c.l.b16 %v4324
  %v4403 = vunpack.c.h.b16 %v4324
  %v4404 = vunpack.c.l.b16 %v4325
  %v4405 = vunpack.c.h.b16 %v4325
  %v4406 = vunpack.c.l.b16 %v4326
  %v4407 = vunpack.c.h.b16 %v4326
  %v4408 = vunpack.c.l.b16 %v4327
  %v4409 = vunpack.c.h.b16 %v4327
  %v4410 = vunpack.c.l.b16 %v4328
  %v4411 = vunpack.c.h.b16 %v4328
  %v4412 = vunpack.c.l.b16 %v4329
  %v4413 = vunpack.c.h.b16 %v4329
  %v4414 = vunpack.c.l.b16 %v4330
  %v4415 = vunpack.c.h.b16 %v4330
  %v4416 = vunpack.c.l.b16 %v4331
  %v4417 = vunpack.c.h.b16 %v4331
  %v4418 = vunpack.c.l.b16 %v4332
  %v4419 = vunpack.c.h.b16 %v4332
  %v4420 = vpack.c.b16 %v4366, %v4364
  %v4421 = vpack.c.b16 %v4367, %v4365
  %v4422 = vpack.c.b16 %v4370, %v4368
  %v4423 = vpack.c.b16 %v4371, %v4369
  %v4424 = vpack.c.b16 %v4374, %v4372
  %v4425 = vpack.c.b16 %v4375, %v4373
  %v4426 = vpack.c.b16 %v4378, %v4376
  %v4427 = vpack.c.b16 %v4379, %v4377
  %v4428 = vpack.c.b16 %v4382, %v4380
  %v4429 = vpack.c.b16 %v4383, %v4381
  %v4430 = vpack.c.b16 %v4386, %v4384
  %v4431 = vpack.c.b16 %v4387, %v4385
  %v4432 = vpack.c.b16 %v4390, %v4388
  %v4433 = vpack.c.b16 %v4391, %v4389
  %v4434 = vpack.c.b16 %v4394, %v4392
  %v4435 = vpack.c.b16 %v4395, %v4393
  %v4436 = vpack.c.b16 %v4398, %v4396
  %v4437 = vpack.c.b16 %v4399, %v4397
  %v4438 = vpack.c.b16 %v4402, %v4400
  %v4439 = vpack.c.b16 %v4403, %v4401
  %v4440 = vpack.c.b16 %v4406, %v4404
  %v4441 = vpack.c.b16 %v4407, %v4405
  %v4442 = vpack.c.b16 %v4410, %v4408
  %v4443 = vpack.c.b16 %v4411, %v4409
  %v4444 = vpack.c.b16 %v4414, %v4412
  %v4445 = vpack.c.b16 %v4415, %v4413
  %v4446 = vpack.c.b16 %v4418, %v4416
  %v4447 = vpack.c.b16 %v4419, %v4417
  %v4477 = vsel %vm3000, %v4334, 0
  %4479 = vmatprep.subr.bf16.mxu0 %v4421
  %4480 = vmatpush1.bf16.msra.mxu0 %v4420
  %4481 = vmatprep.subr.bf16.mxu0 %v4423
  %4482 = vmatpush1.bf16.msra.mxu0 %v4422
  %4483 = vmatprep.subr.bf16.mxu0 %v4425
  %4484 = vmatpush1.bf16.msra.mxu0 %v4424
  %4485 = vmatprep.subr.bf16.mxu0 %v4427
  %4486 = vmatpush1.bf16.msra.mxu0 %v4426
  %4487 = vmatprep.subr.bf16.mxu0 %v4429
  %4488 = vmatpush1.bf16.msra.mxu0 %v4428
  %4489 = vmatprep.subr.bf16.mxu0 %v4431
  %4490 = vmatpush1.bf16.msra.mxu0 %v4430
  %4491 = vmatprep.subr.bf16.mxu0 %v4433
  %4492 = vmatpush1.bf16.msra.mxu0 %v4432
  %4493 = vmatprep.subr.bf16.mxu0 %v4435
  %4494 = vmatpush1.bf16.msra.mxu0 %v4434
  %4495 = vmatprep.subr.bf16.mxu0 %v4437
  %4496 = vmatpush1.bf16.msra.mxu0 %v4436
  %4497 = vmatprep.subr.bf16.mxu0 %v4439
  %4498 = vmatpush1.bf16.msra.mxu0 %v4438
  %4499 = vmatprep.subr.bf16.mxu0 %v4441
  %4500 = vmatpush1.bf16.msra.mxu0 %v4440
  %4501 = vmatprep.subr.bf16.mxu0 %v4443
  %4502 = vmatpush1.bf16.msra.mxu0 %v4442
  %4503 = vmatprep.subr.bf16.mxu0 %v4445
  %4504 = vmatpush1.bf16.msra.mxu0 %v4444
  %4505 = vmatprep.subr.bf16.mxu0 %v4447
  %4506 = vmatpush1.bf16.msra.mxu0 %v4446
  %4507 = vmatprep.subr.bf16.mxu0 0
  %4508 = vmatpush1.bf16.msra.mxu0 0
  %4509 = vmatprep.subr.bf16.mxu0 0
  %4510 = vmatpush1.bf16.msra.mxu0 0
  %4511 = vmatprep.mubr.bf16.mxu0 %v4477
  %4512 = vmatmul.mubr.bf16.gmra.mrb[0].mxu0 %v4333
  %v4513 = vpop.f32.mrb[0].mxu0
  %v4514 = vadd.f32 0.0, %v4513
  %v4515 = vpop.f32.mrb[0].mxu0
  %v4516 = vadd.f32 0.0, %v4515
  %v4517 = vpop.f32.mrb[0].mxu0
  %v4518 = vpop.f32.mrb[0].mxu0
  %4519 = vdwg.mxu0
  %v4520 = vadd.f32 %v4303, %v4514
  %v4521 = vadd.f32 %v4304, %v4516
  %v4522 = vmax.f32 %v4520, 0.0
  %v4523 = vmax.f32 %v4521, 0.0
  %v4524 = vld [vmem:[%s4] sm:$0xff]
  %v4525 = vld [vmem:[%s4 + $0x8] sm:$0xff]
  %v4526 = vld [vmem:[%s4 + $0x10] sm:$0xff]
  %v4527 = vld [vmem:[%s4 + $0x18] sm:$0xff]
  %v4528 = vld [vmem:[%s4 + $0x20] sm:$0xff]
  %v4529 = vld [vmem:[%s4 + $0x28] sm:$0xff]
  %v4530 = vld [vmem:[%s4 + $0x30] sm:$0xff]
  %v4531 = vld [vmem:[%s4 + $0x38] sm:$0xff]
  %v4532 = vld [vmem:[%s4 + $0x40] sm:$0xff]
  %v4533 = vld [vmem:[%s4 + $0x48] sm:$0xff]
  %v4534 = vld [vmem:[%s4 + $0x50] sm:$0xff]
  %v4535 = vld [vmem:[%s4 + $0x58] sm:$0xff]
  %v4536 = vld [vmem:[%s4 + $0x60] sm:$0xff]
  %v4537 = vld [vmem:[%s4 + $0x68] sm:$0xff]
  %v4538 = vld [vmem:[%s4 + $0x70] sm:$0xff]
  %v4539 = vld [vmem:[%s4 + $0x78] sm:$0xff]
  %v4540 = vld [vmem:[%s4 + $0x80] sm:$0xff]
  %v4541 = vld [vmem:[%s4 + $0x88] sm:$0xff]
  %v4542 = vld [vmem:[%s4 + $0x90] sm:$0xff]
  %v4543 = vld [vmem:[%s4 + $0x98] sm:$0xff]
  %v4544 = vld [vmem:[%s4 + $0xa0] sm:$0xff]
  %v4545 = vld [vmem:[%s4 + $0xa8] sm:$0xff]
  %v4546 = vld [vmem:[%s4 + $0xb0] sm:$0xff]
  %v4547 = vld [vmem:[%s4 + $0xb8] sm:$0xff]
  %v4548 = vld [vmem:[%s4 + $0xc0] sm:$0xff]
  %v4549 = vld [vmem:[%s4 + $0xc8] sm:$0xff]
  %v4550 = vld [vmem:[%s4 + $0xd0] sm:$0xff]
  %v4551 = vld [vmem:[%s4 + $0xd8] sm:$0xff]
  %v4552 = vld [vmem:[%s4 + $0xe0] sm:$0xff]
  %v4553 = vld [vmem:[%s4 + $0xe8] sm:$0xff]
  %v4554 = vld [vmem:[%s4 + $0xf0] sm:$0xff]
  %v4555 = vld [vmem:[%s4 + $0xf8] sm:$0xff]
  %4556 = vmatprep.subr.mxu0 0.0
  %4557 = vmatpush1.msra.mxu0 %v4524
  %4558 = vmatprep.subr.mxu0 0.0
  %4559 = vmatpush1.msra.mxu0 %v4525
  %4560 = vmatprep.subr.mxu0 0.0
  %4561 = vmatpush1.msra.mxu0 %v4526
  %4562 = vmatprep.subr.mxu0 0.0
  %4563 = vmatpush1.msra.mxu0 %v4527
  %4564 = vmatprep.subr.mxu0 0.0
  %4565 = vmatpush1.msra.mxu0 %v4528
  %4566 = vmatprep.subr.mxu0 0.0
  %4567 = vmatpush1.msra.mxu0 %v4529
  %4568 = vmatprep.subr.mxu0 0.0
  %4569 = vmatpush1.msra.mxu0 %v4530
  %4570 = vmatprep.subr.mxu0 0.0
  %4571 = vmatpush1.msra.mxu0 %v4531
  %4572 = vmatprep.subr.mxu0 0.0
  %4573 = vmatpush1.msra.mxu0 %v4532
  %4574 = vmatprep.subr.mxu0 0.0
  %4575 = vmatpush1.msra.mxu0 %v4533
  %4576 = vmatprep.subr.mxu0 0.0
  %4577 = vmatpush1.msra.mxu0 %v4534
  %4578 = vmatprep.subr.mxu0 0.0
  %4579 = vmatpush1.msra.mxu0 %v4535
  %4580 = vmatprep.subr.mxu0 0.0
  %4581 = vmatpush1.msra.mxu0 %v4536
  %4582 = vmatprep.subr.mxu0 0.0
  %4583 = vmatpush1.msra.mxu0 %v4537
  %4584 = vmatprep.subr.mxu0 0.0
  %4585 = vmatpush1.msra.mxu0 %v4538
  %4586 = vmatprep.subr.mxu0 0.0
  %4587 = vmatpush1.msra.mxu0 %v4539
  %4588 = vmatprep.subr.mxu0 0.0
  %4589 = vmatpush1.msra.mxu0 %v4540
  %4590 = vmatprep.subr.mxu0 0.0
  %4591 = vmatpush1.msra.mxu0 %v4541
  %4592 = vmatprep.subr.mxu0 0.0
  %4593 = vmatpush1.msra.mxu0 %v4542
  %4594 = vmatprep.subr.mxu0 0.0
  %4595 = vmatpush1.msra.mxu0 %v4543
  %4596 = vmatprep.subr.mxu0 0.0
  %4597 = vmatpush1.msra.mxu0 %v4544
  %4598 = vmatprep.subr.mxu0 0.0
  %4599 = vmatpush1.msra.mxu0 %v4545
  %4600 = vmatprep.subr.mxu0 0.0
  %4601 = vmatpush1.msra.mxu0 %v4546
  %4602 = vmatprep.subr.mxu0 0.0
  %4603 = vmatpush1.msra.mxu0 %v4547
  %4604 = vmatprep.subr.mxu0 0.0
  %4605 = vmatpush1.msra.mxu0 %v4548
  %4606 = vmatprep.subr.mxu0 0.0
  %4607 = vmatpush1.msra.mxu0 %v4549
  %4608 = vmatprep.subr.mxu0 0.0
  %4609 = vmatpush1.msra.mxu0 %v4550
  %4610 = vmatprep.subr.mxu0 0.0
  %4611 = vmatpush1.msra.mxu0 %v4551
  %4612 = vmatprep.subr.mxu0 0.0
  %4613 = vmatpush1.msra.mxu0 %v4552
  %4614 = vmatprep.subr.mxu0 0.0
  %4615 = vmatpush1.msra.mxu0 %v4553
  %4616 = vmatprep.subr.mxu0 0.0
  %4617 = vmatpush1.msra.mxu0 %v4554
  %4618 = vmatprep.subr.mxu0 0.0
  %4619 = vmatpush1.msra.mxu0 %v4555
  %4620 = vmatprep.mubr.f32.mxu0 %v4523
  %4621 = vmatmul.mubr.f32.gmra.mrb[0].mxu0 %v4522
  %v4622 = vpop.f32.mrb[0].mxu0
  %v4623 = vadd.f32 0.0, %v4622
  %v4624 = vpop.f32.mrb[0].mxu0
  %4625 = vdwg.mxu0
  %v4626 = vlaneseq
  %v4627 = vand.u32 %v4626, 127
  %vm4628 = vcmp.ge.s32.totalorder %v4627, 50
  %vm4629 = vcmp.lt.s32.totalorder %v4627, 100
  %vm4630 = vmand %vm4628, %vm4629
  %vm4631 = vcmp.ge.s32.totalorder %v4627, 110
  %vm4632 = vcmp.lt.s32.totalorder %v4627, 120
  %vm4633 = vmand %vm4631, %vm4632
  %vm4634 = vmor %vm4630, %vm4633
  %v4635 = vsel %vm4634, 1, 0
  %vm4636 = vcmp.eq.s32.totalorder %v4635, 1
  %v4637 = vsel %vm4636, %v4623, 0.0
  %v4638 = vmul.f32 %v4637, 1.442695
  %v4639 = vpow.pop %v4638
  %v4640 = vadd.f32 %v4639, 1e-09
  %v4641 = vrsqrt.pop %v4640
  %v4642 = vmul.f32 %v4640, %v4641
  %vm4643 = vcmp.eq.f32.partialorder %v4640, inf
  %v4644 = vsel %vm4643, %v4640, %v4642
  %vm4645 = vcmp.eq.f32.partialorder %v4640, 0.0
  %v4646 = vand.u32 %v4640, 2147483648
  %v4647 = vsel %vm4645, %v4646, %v4644
  %v4648 = vsel %vm4636, %v4647, %v4623
  %4649 = vst [vmem:[%s5] sm:$0x3] %v4648
  // Predicated region
  $region22: #{encoder_b_forward.1} parent=0 // pred_check
    _
  $region23: #{encoder_b_forward.1} parent=0 // pred_check_branch
    %4651 = sbr.rel (0) target = $region25
  $region24: #{encoder_b_forward.1} parent=0 // pred_region
    _
  $region25: #{encoder_b_forward.1} parent=0 // pred_fallthru
    _
  // Predicated region
  $region26: #{encoder_b_forward.1} parent=0 // pred_check
    _
  $region27: #{encoder_b_forward.1} parent=0 // pred_check_branch
    %4653 = sbr.rel (0) target = $region29
  $region28: #{encoder_b_forward.1} parent=0 // pred_region
    _
  $region29: #{encoder_b_forward.1} parent=0 // pred_fallthru
    _

</llo_original>
